<compile_context>
chip_gen: v7x
topology: tpu7x:2x2x1
jax: 0.10.0
libtpu: 0.0.40
codegen_flags: <defaults>
</compile_context>

<pallas_src>
import functools

import jax
import jax.numpy as jnp
import numpy as np
from jax import lax
from jax.experimental import pallas as pl
from jax.experimental.pallas import tpu as pltpu


def disc_block1_kernel(xw_ref, wpk_ref, out_ref, *, B, H, W, Cin, Cout):
    # xw_ref : ((H+2)*B*W, 3*Cin+1)  w-im2col'd input + ones lane,
    #          rows ordered (h_padded, b, w), lanes (kw, ci) then the ones lane.
    # wpk_ref: (4*SEC + Cout, Cout)  packed weights:
    #          rows [kh*SEC : kh*SEC+K]  conv1 tap kh (b1 in row K-1 for kh==1)
    #          rows [3*SEC : 3*SEC+K]    shortcut 1x1: 0.25*ws (center-tap
    #                                    lanes) and 0.25*(b2+bs) in row K-1
    #          rows [4*SEC : 4*SEC+Cout] main 1x1: 0.25*w2
    # out_ref: ((H//2)*B*(W//2), Cout), rows ordered (i, b, j).
    K = 3 * Cin + 1
    SEC = ((K + 7) // 8) * 8
    BW = B * W              # row stride of one padded-h step (tile-aligned)
    N = B * H * W

    x = xw_ref[...]
    w = wpk_ref[...]

    # 3x3 conv (+ b1 via the ones lane) as three shifted, tile-aligned
    # row-window dots; no zero-init accumulator needed.
    xc = x[BW:BW + N, :]                           # kh=1 window == unpadded x
    acc = jnp.dot(x[0:N, :], w[0:K, :], preferred_element_type=jnp.float32)
    acc += jnp.dot(xc, w[SEC:SEC + K, :], preferred_element_type=jnp.float32)
    acc += jnp.dot(x[2 * BW:2 * BW + N, :], w[2 * SEC:2 * SEC + K, :],
                   preferred_element_type=jnp.float32)
    hact = jnp.maximum(acc, 0.0)                   # (N, Cout)

    # Pre-pool main 1x1 (0.25*w2) and shortcut 1x1 (0.25*ws + fused bias) as
    # two separate dots (no lane-concat).
    g = jnp.dot(hact, w[4 * SEC:4 * SEC + Cout, :],
                preferred_element_type=jnp.float32)
    g += jnp.dot(xc, w[3 * SEC:3 * SEC + K, :],
                 preferred_element_type=jnp.float32)        # (N, Cout)

    # 2x2 mean pool + valid-row selection; lanes stay = Cout throughout.
    # For output band i (pooled h index), output row r = b*(W//2)+j sums the
    # band-local rows {2r, 2r+1, 2r+BW, 2r+BW+1} of g[i*2*BW : (i+1)*2*BW].
    # A tiny 0/1 selection matrix on the (idle) MXU does this sum without any
    # lane/sublane shuffles; the 0.25 pool scale is pre-folded into w2/ws.
    nrow = B * (W // 2)
    r_idx = lax.broadcasted_iota(jnp.int32, (nrow, 2 * BW), 0)
    s_idx = lax.broadcasted_iota(jnp.int32, (nrow, 2 * BW), 1)
    d = s_idx - 2 * r_idx
    sel = ((d == 0) | (d == 1) | (d == BW) | (d == BW + 1)).astype(jnp.float32)
    for i in range(H // 2):
        band = g[i * 2 * BW:(i + 1) * 2 * BW, :]            # (2*BW, Cout)
        out_ref[i * nrow:(i + 1) * nrow, :] = jnp.dot(
            sel, band, preferred_element_type=jnp.float32)


@jax.jit
def disc_block1(x_nchw, w1, b1, w2, b2, ws, bs):
    """x_nchw: (B, 4, H, W) float32. Returns (B, Cout, H//2, W//2)."""
    B, Cin, H, W = x_nchw.shape
    Cout = w1.shape[-1]
    assert H % 2 == 0 and W % 2 == 0 and (B * W) % 8 == 0
    K = 3 * Cin + 1
    SEC = ((K + 7) // 8) * 8
    dt = x_nchw.dtype

    # Activation operand: w-direction im2col (3 taps) + ones lane, rows
    # ordered (h_padded, b, w).  One fused XLA producer, ~3x input bytes
    # (the old full 9x im2col is gone).
    xt = jnp.transpose(x_nchw, (2, 0, 3, 1))                # (H, B, W, Cin)
    xp = jnp.pad(xt, ((1, 1), (0, 0), (1, 1), (0, 0)))      # (H+2, B, W+2, Cin)
    taps = [xp[:, :, kw:kw + W, :] for kw in range(3)]
    ones = jnp.ones((H + 2, B, W, 1), dt)
    xw = jnp.concatenate(taps + [ones], axis=-1).reshape((H + 2) * B * W, K)

    # Packed weights + biases (one operand).  Rebuilt per call here; in a real
    # model this would be precomputed once outside the step.
    zrow = jnp.zeros((1, Cout), dt)
    w1f = w1.reshape(3, 3 * Cin, Cout)                      # (kh, kw*Cin+ci, co)
    secs = []
    for kh in range(3):
        brow = b1.reshape(1, Cout) if kh == 1 else zrow
        blk = jnp.concatenate([w1f[kh], brow], axis=0)      # (K, Cout)
        secs.append(jnp.pad(blk, ((0, SEC - K), (0, 0))))
    wsz = jnp.concatenate([jnp.zeros((Cin, Cout), dt), 0.25 * ws,
                           jnp.zeros((Cin, Cout), dt),
                           (0.25 * (b2 + bs)).reshape(1, Cout)], axis=0)
    secs.append(jnp.pad(wsz, ((0, SEC - K), (0, 0))))
    secs.append(0.25 * w2)
    wpk = jnp.concatenate(secs, axis=0)                     # (4*SEC+Cout, Cout)

    n_out = (H // 2) * B * (W // 2)
    out_flat = pl.pallas_call(
        functools.partial(disc_block1_kernel,
                          B=B, H=H, W=W, Cin=Cin, Cout=Cout),
        out_shape=jax.ShapeDtypeStruct((n_out, Cout), jnp.float32),
        in_specs=[pl.BlockSpec(memory_space=pltpu.MemorySpace.VMEM)] * 2,
        out_specs=pl.BlockSpec(memory_space=pltpu.MemorySpace.VMEM),
    )(xw, wpk)

    out = out_flat.reshape(H // 2, B, W // 2, Cout)         # (i, b, j, co)
    return jnp.transpose(out, (1, 3, 0, 2))                 # -> NCHW


def ref_disc_block1(x, w1, b1, w2, b2, ws, bs):
    """Pure-JAX NCHW reference (mirrors the PyTorch module)."""
    dn = ("NCHW", "OIHW", "NCHW")
    w1_oihw = jnp.transpose(w1, (3, 2, 0, 1))               # (Cout, Cin, 3, 3)
    w2_oihw = jnp.transpose(w2, (1, 0))[:, :, None, None]   # (Cout, Cout, 1, 1)
    ws_oihw = jnp.transpose(ws, (1, 0))[:, :, None, None]   # (Cout, Cin, 1, 1)

    h = lax.conv_general_dilated(x, w1_oihw, (1, 1), "SAME",
                                 dimension_numbers=dn) + b1[None, :, None, None]
    h = jnp.maximum(h, 0.0)
    h = lax.conv_general_dilated(h, w2_oihw, (1, 1), "SAME",
                                 dimension_numbers=dn) + b2[None, :, None, None]
    hp = (h[:, :, ::2, ::2] + h[:, :, 1::2, ::2]
          + h[:, :, ::2, 1::2] + h[:, :, 1::2, 1::2]) / 4.0

    xp = (x[:, :, ::2, ::2] + x[:, :, 1::2, ::2]
          + x[:, :, ::2, 1::2] + x[:, :, 1::2, 1::2]) / 4.0
    s = lax.conv_general_dilated(xp, ws_oihw, (1, 1), "SAME",
                                 dimension_numbers=dn) + bs[None, :, None, None]
    return s + hp


if __name__ == "__main__":
    B, Cin, H, W = 2, 4, 16, 16      # Conv2d(4, ...) fixes Cin = 4
    Cout = 8                          # n_output

    key = jax.random.PRNGKey(0)
    kx, k1, kb1, k2, kb2, ks, kbs = jax.random.split(key, 7)

    x = jax.random.normal(kx, (B, Cin, H, W), jnp.float32)
    # Deterministic synthetic parameters (shapes from the module __init__).
    w1 = jax.random.normal(k1, (3, 3, Cin, Cout), jnp.float32) * 0.1
    b1 = jax.random.normal(kb1, (Cout,), jnp.float32) * 0.1
    w2 = jax.random.normal(k2, (Cout, Cout), jnp.float32) * 0.1
    b2 = jax.random.normal(kb2, (Cout,), jnp.float32) * 0.1
    ws = jax.random.normal(ks, (Cin, Cout), jnp.float32) * 0.1
    bs = jax.random.normal(kbs, (Cout,), jnp.float32) * 0.1

    out = jax.block_until_ready(disc_block1(x, w1, b1, w2, b2, ws, bs))
    ref = jax.block_until_ready(ref_disc_block1(x, w1, b1, w2, b2, ws, bs))

    assert out.shape == (B, Cout, H // 2, W // 2), out.shape
    np.testing.assert_allclose(np.asarray(out), np.asarray(ref),
                               rtol=1e-4, atol=1e-4)
    print("KERNEL_OK")
</pallas_src>

<mosaic_0001>
module attributes {stable_mosaic.version = 11 : i64} {
  func.func @disc_block1_kernel(%arg0: memref<576x13xf32, #tpu.memory_space<vmem>>, %arg1: memref<72x8xf32, #tpu.memory_space<vmem>>, %arg2: memref<128x8xf32, #tpu.memory_space<vmem>>) attributes {dimension_semantics = [], scalar_prefetch = 0 : i64, scratch_operands = 0 : i64, tpu.core_type = #tpu.core_type<tc>} {
    %c0 = arith.constant 0 : index
    %c0_0 = arith.constant 0 : index
    %0 = vector.load %arg0[%c0, %c0_0] : memref<576x13xf32, #tpu.memory_space<vmem>>, vector<576x13xf32>
    %c0_1 = arith.constant 0 : index
    %c0_2 = arith.constant 0 : index
    %1 = vector.load %arg1[%c0_1, %c0_2] : memref<72x8xf32, #tpu.memory_space<vmem>>, vector<72x8xf32>
    %2 = vector.extract_strided_slice %0 {offsets = [32, 0], sizes = [512, 13], strides = [1, 1]} : vector<576x13xf32> to vector<512x13xf32>
    %3 = vector.extract_strided_slice %0 {offsets = [0, 0], sizes = [512, 13], strides = [1, 1]} : vector<576x13xf32> to vector<512x13xf32>
    %4 = vector.extract_strided_slice %1 {offsets = [0, 0], sizes = [13, 8], strides = [1, 1]} : vector<72x8xf32> to vector<13x8xf32>
    %cst = arith.constant dense<0.000000e+00> : vector<512x8xf32>
    %5 = tpu.matmul %3, %4, %cst {dimension_numbers = #tpu.dot_dimension_numbers<[1], [0], [0], [1], [0, 0, 1, 1], [], []>} : vector<512x13xf32>, vector<13x8xf32>, vector<512x8xf32> -> vector<512x8xf32>
    %6 = vector.extract_strided_slice %1 {offsets = [16, 0], sizes = [13, 8], strides = [1, 1]} : vector<72x8xf32> to vector<13x8xf32>
    %cst_3 = arith.constant dense<0.000000e+00> : vector<512x8xf32>
    %7 = tpu.matmul %2, %6, %cst_3 {dimension_numbers = #tpu.dot_dimension_numbers<[1], [0], [0], [1], [0, 0, 1, 1], [], []>} : vector<512x13xf32>, vector<13x8xf32>, vector<512x8xf32> -> vector<512x8xf32>
    %8 = arith.addf %5, %7 : vector<512x8xf32>
    %9 = vector.extract_strided_slice %0 {offsets = [64, 0], sizes = [512, 13], strides = [1, 1]} : vector<576x13xf32> to vector<512x13xf32>
    %10 = vector.extract_strided_slice %1 {offsets = [32, 0], sizes = [13, 8], strides = [1, 1]} : vector<72x8xf32> to vector<13x8xf32>
    %cst_4 = arith.constant dense<0.000000e+00> : vector<512x8xf32>
    %11 = tpu.matmul %9, %10, %cst_4 {dimension_numbers = #tpu.dot_dimension_numbers<[1], [0], [0], [1], [0, 0, 1, 1], [], []>} : vector<512x13xf32>, vector<13x8xf32>, vector<512x8xf32> -> vector<512x8xf32>
    %12 = arith.addf %8, %11 : vector<512x8xf32>
    %cst_5 = arith.constant 0.000000e+00 : f32
    %13 = vector.broadcast %cst_5 : f32 to vector<512x8xf32>
    %14 = arith.maximumf %12, %13 : vector<512x8xf32>
    %15 = vector.extract_strided_slice %1 {offsets = [64, 0], sizes = [8, 8], strides = [1, 1]} : vector<72x8xf32> to vector<8x8xf32>
    %cst_6 = arith.constant dense<0.000000e+00> : vector<512x8xf32>
    %16 = tpu.matmul %14, %15, %cst_6 {dimension_numbers = #tpu.dot_dimension_numbers<[1], [0], [0], [1], [0, 0, 1, 1], [], []>} : vector<512x8xf32>, vector<8x8xf32>, vector<512x8xf32> -> vector<512x8xf32>
    %17 = vector.extract_strided_slice %1 {offsets = [48, 0], sizes = [13, 8], strides = [1, 1]} : vector<72x8xf32> to vector<13x8xf32>
    %cst_7 = arith.constant dense<0.000000e+00> : vector<512x8xf32>
    %18 = tpu.matmul %2, %17, %cst_7 {dimension_numbers = #tpu.dot_dimension_numbers<[1], [0], [0], [1], [0, 0, 1, 1], [], []>} : vector<512x13xf32>, vector<13x8xf32>, vector<512x8xf32> -> vector<512x8xf32>
    %19 = arith.addf %16, %18 : vector<512x8xf32>
    %20 = tpu.iota {dimensions = array<i32: 0>} : vector<16x64xi32>
    %21 = tpu.iota {dimensions = array<i32: 1>} : vector<16x64xi32>
    %c2_i32 = arith.constant 2 : i32
    %22 = vector.broadcast %c2_i32 : i32 to vector<16x64xi32>
    %23 = arith.muli %22, %20 : vector<16x64xi32>
    %24 = arith.subi %21, %23 : vector<16x64xi32>
    %c0_i32 = arith.constant 0 : i32
    %25 = vector.broadcast %c0_i32 : i32 to vector<16x64xi32>
    %26 = arith.cmpi eq, %24, %25 : vector<16x64xi32>
    %c1_i32 = arith.constant 1 : i32
    %27 = vector.broadcast %c1_i32 : i32 to vector<16x64xi32>
    %28 = arith.cmpi eq, %24, %27 : vector<16x64xi32>
    %29 = arith.ori %26, %28 : vector<16x64xi1>
    %c32_i32 = arith.constant 32 : i32
    %30 = vector.broadcast %c32_i32 : i32 to vector<16x64xi32>
    %31 = arith.cmpi eq, %24, %30 : vector<16x64xi32>
    %32 = arith.ori %29, %31 : vector<16x64xi1>
    %c33_i32 = arith.constant 33 : i32
    %33 = vector.broadcast %c33_i32 : i32 to vector<16x64xi32>
    %34 = arith.cmpi eq, %24, %33 : vector<16x64xi32>
    %35 = arith.ori %32, %34 : vector<16x64xi1>
    %36 = arith.extui %35 : vector<16x64xi1> to vector<16x64xi32>
    %37 = arith.sitofp %36 : vector<16x64xi32> to vector<16x64xf32>
    %38 = vector.extract_strided_slice %19 {offsets = [0, 0], sizes = [64, 8], strides = [1, 1]} : vector<512x8xf32> to vector<64x8xf32>
    %cst_8 = arith.constant dense<0.000000e+00> : vector<16x8xf32>
    %39 = tpu.matmul %37, %38, %cst_8 {dimension_numbers = #tpu.dot_dimension_numbers<[1], [0], [0], [1], [0, 0, 1, 1], [], []>} : vector<16x64xf32>, vector<64x8xf32>, vector<16x8xf32> -> vector<16x8xf32>
    %c0_9 = arith.constant 0 : index
    %c0_10 = arith.constant 0 : index
    %40 = vector.load %arg2[%c0_9, %c0_10] : memref<128x8xf32, #tpu.memory_space<vmem>>, vector<16x8xf32>
    tpu.vector_store %arg2[%c0_9, %c0_10], %39 {strides = array<i32>} : memref<128x8xf32, #tpu.memory_space<vmem>>, vector<16x8xf32>,
    %41 = vector.extract_strided_slice %19 {offsets = [64, 0], sizes = [64, 8], strides = [1, 1]} : vector<512x8xf32> to vector<64x8xf32>
    %cst_11 = arith.constant dense<0.000000e+00> : vector<16x8xf32>
    %42 = tpu.matmul %37, %41, %cst_11 {dimension_numbers = #tpu.dot_dimension_numbers<[1], [0], [0], [1], [0, 0, 1, 1], [], []>} : vector<16x64xf32>, vector<64x8xf32>, vector<16x8xf32> -> vector<16x8xf32>
    %c16 = arith.constant 16 : index
    %c0_12 = arith.constant 0 : index
    %43 = vector.load %arg2[%c16, %c0_12] : memref<128x8xf32, #tpu.memory_space<vmem>>, vector<16x8xf32>
    tpu.vector_store %arg2[%c16, %c0_12], %42 {strides = array<i32>} : memref<128x8xf32, #tpu.memory_space<vmem>>, vector<16x8xf32>,
    %44 = vector.extract_strided_slice %19 {offsets = [128, 0], sizes = [64, 8], strides = [1, 1]} : vector<512x8xf32> to vector<64x8xf32>
    %cst_13 = arith.constant dense<0.000000e+00> : vector<16x8xf32>
    %45 = tpu.matmul %37, %44, %cst_13 {dimension_numbers = #tpu.dot_dimension_numbers<[1], [0], [0], [1], [0, 0, 1, 1], [], []>} : vector<16x64xf32>, vector<64x8xf32>, vector<16x8xf32> -> vector<16x8xf32>
    %c32 = arith.constant 32 : index
    %c0_14 = arith.constant 0 : index
    %46 = vector.load %arg2[%c32, %c0_14] : memref<128x8xf32, #tpu.memory_space<vmem>>, vector<16x8xf32>
    tpu.vector_store %arg2[%c32, %c0_14], %45 {strides = array<i32>} : memref<128x8xf32, #tpu.memory_space<vmem>>, vector<16x8xf32>,
    %47 = vector.extract_strided_slice %19 {offsets = [192, 0], sizes = [64, 8], strides = [1, 1]} : vector<512x8xf32> to vector<64x8xf32>
    %cst_15 = arith.constant dense<0.000000e+00> : vector<16x8xf32>
    %48 = tpu.matmul %37, %47, %cst_15 {dimension_numbers = #tpu.dot_dimension_numbers<[1], [0], [0], [1], [0, 0, 1, 1], [], []>} : vector<16x64xf32>, vector<64x8xf32>, vector<16x8xf32> -> vector<16x8xf32>
    %c48 = arith.constant 48 : index
    %c0_16 = arith.constant 0 : index
    %49 = vector.load %arg2[%c48, %c0_16] : memref<128x8xf32, #tpu.memory_space<vmem>>, vector<16x8xf32>
    tpu.vector_store %arg2[%c48, %c0_16], %48 {strides = array<i32>} : memref<128x8xf32, #tpu.memory_space<vmem>>, vector<16x8xf32>,
    %50 = vector.extract_strided_slice %19 {offsets = [256, 0], sizes = [64, 8], strides = [1, 1]} : vector<512x8xf32> to vector<64x8xf32>
    %cst_17 = arith.constant dense<0.000000e+00> : vector<16x8xf32>
    %51 = tpu.matmul %37, %50, %cst_17 {dimension_numbers = #tpu.dot_dimension_numbers<[1], [0], [0], [1], [0, 0, 1, 1], [], []>} : vector<16x64xf32>, vector<64x8xf32>, vector<16x8xf32> -> vector<16x8xf32>
    %c64 = arith.constant 64 : index
    %c0_18 = arith.constant 0 : index
    %52 = vector.load %arg2[%c64, %c0_18] : memref<128x8xf32, #tpu.memory_space<vmem>>, vector<16x8xf32>
    tpu.vector_store %arg2[%c64, %c0_18], %51 {strides = array<i32>} : memref<128x8xf32, #tpu.memory_space<vmem>>, vector<16x8xf32>,
    %53 = vector.extract_strided_slice %19 {offsets = [320, 0], sizes = [64, 8], strides = [1, 1]} : vector<512x8xf32> to vector<64x8xf32>
    %cst_19 = arith.constant dense<0.000000e+00> : vector<16x8xf32>
    %54 = tpu.matmul %37, %53, %cst_19 {dimension_numbers = #tpu.dot_dimension_numbers<[1], [0], [0], [1], [0, 0, 1, 1], [], []>} : vector<16x64xf32>, vector<64x8xf32>, vector<16x8xf32> -> vector<16x8xf32>
    %c80 = arith.constant 80 : index
    %c0_20 = arith.constant 0 : index
    %55 = vector.load %arg2[%c80, %c0_20] : memref<128x8xf32, #tpu.memory_space<vmem>>, vector<16x8xf32>
    tpu.vector_store %arg2[%c80, %c0_20], %54 {strides = array<i32>} : memref<128x8xf32, #tpu.memory_space<vmem>>, vector<16x8xf32>,
    %56 = vector.extract_strided_slice %19 {offsets = [384, 0], sizes = [64, 8], strides = [1, 1]} : vector<512x8xf32> to vector<64x8xf32>
    %cst_21 = arith.constant dense<0.000000e+00> : vector<16x8xf32>
    %57 = tpu.matmul %37, %56, %cst_21 {dimension_numbers = #tpu.dot_dimension_numbers<[1], [0], [0], [1], [0, 0, 1, 1], [], []>} : vector<16x64xf32>, vector<64x8xf32>, vector<16x8xf32> -> vector<16x8xf32>
    %c96 = arith.constant 96 : index
    %c0_22 = arith.constant 0 : index
    %58 = vector.load %arg2[%c96, %c0_22] : memref<128x8xf32, #tpu.memory_space<vmem>>, vector<16x8xf32>
    tpu.vector_store %arg2[%c96, %c0_22], %57 {strides = array<i32>} : memref<128x8xf32, #tpu.memory_space<vmem>>, vector<16x8xf32>,
    %59 = vector.extract_strided_slice %19 {offsets = [448, 0], sizes = [64, 8], strides = [1, 1]} : vector<512x8xf32> to vector<64x8xf32>
    %cst_23 = arith.constant dense<0.000000e+00> : vector<16x8xf32>
    %60 = tpu.matmul %37, %59, %cst_23 {dimension_numbers = #tpu.dot_dimension_numbers<[1], [0], [0], [1], [0, 0, 1, 1], [], []>} : vector<16x64xf32>, vector<64x8xf32>, vector<16x8xf32> -> vector<16x8xf32>
    %c112 = arith.constant 112 : index
    %c0_24 = arith.constant 0 : index
    %61 = vector.load %arg2[%c112, %c0_24] : memref<128x8xf32, #tpu.memory_space<vmem>>, vector<16x8xf32>
    tpu.vector_store %arg2[%c112, %c0_24], %60 {strides = array<i32>} : memref<128x8xf32, #tpu.memory_space<vmem>>, vector<16x8xf32>,
    return
  }
}

</mosaic_0001>

<llo_original>
// kernel: squeeze.3
$region0: #{squeeze.3}
  %s0 = inlined_call_operand.vmem [shape: f32[1,3,4,8], index: 0, kind: input, shape index: {}]
  %s1 = inlined_call_operand.vmem [shape: f32[12,8], index: 1, kind: output, shape index: {}]
  $region1: #{squeeze.3} parent=0
    #allocation0 [shape = 'u8[12288]{0}', space=vmem, size = 0x3000, scoped, tag = 'scoped mem for input reshape']
    %s3 = sshllo.u32 0, 4
    %s4 = smul.addr 4, 2
    %s5 = scalar_lea.vmem %s0, %s4
    %v6 = vld [vmem:[%s5] sm:%s3]
    %s7 = scalar_lea.vmem [#allocation0], 16
    %8 = vst [vmem:[%s7] sm:%s3] %v6
    %s9 = scalar_lea.vmem %s0, 4
    %v10 = vld [vmem:[%s9] sm:%s3]
    %s11 = scalar_lea.vmem [#allocation0], 8
    %12 = vst [vmem:[%s11] sm:%s3] %v10
    %v13 = vld [vmem:[%s0] sm:%s3]
    %14 = vst [vmem:[#allocation0] sm:%s3] %v13
    %v15 = vld [vmem:[#allocation0] sm:$0xf]
    %vm16 = vcmask 64512
    %17 = vst.msk [vmem:[%s1] sm:$0xf] %vm16, %v15
    %s18 = scalar_lea.vmem [#allocation0], 8
    %v19 = vld [vmem:[%s18] sm:$0xf]
    %vm20 = vcmask 64512
    %s21 = scalar_lea.vmem %s1, 4
    %22 = vst.msk [vmem:[%s21] sm:$0xf] %vm20, %v19
    %s23 = scalar_lea.vmem [#allocation0], 16
    %v24 = vld [vmem:[%s23] sm:$0xf]
    %vm25 = vcmask 64512
    %s26 = scalar_lea.vmem %s1, 8
    %27 = vst.msk [vmem:[%s26] sm:$0xf] %vm25, %v24

// kernel: disc_block1.1
$region0: #{disc_block1.1}
  #allocation0 [shape = 'u32[]', space=smem, size = 0x4, offset = 0x4, fixed_abs, tag = 'smem constant byte address 0x4 - core index']
  #allocation1 [shape = 'u32[144,128]{1,0:T(1,128)}', space=vmem, size = 0x12000, scoped, tag = 'internal scratch']
  %s0 = inlined_call_operand.vmem [shape: f32[576,13], index: 0, kind: input, shape index: {}]
  %s1 = inlined_call_operand.vmem [shape: f32[72,8], index: 1, kind: input, shape index: {}]
  %s2 = inlined_call_operand.vmem [shape: f32[128,8], index: 2, kind: output, shape index: {}]
  %s3 = sld [smem:[#allocation0]]
  $region18: #{disc_block1.1} parent=0
    _
  %s5 = ssub.s32 1, %s3
  %s6 = scalar_select 0, %s5, %s3
  // Predicated region
  $region2: #{disc_block1.1} parent=0 // pred_check
    _
  $region3: #{disc_block1.1} parent=0 // pred_check_branch
    %8 = sbr.rel (0) target = $region5
  $region4: #{disc_block1.1} parent=0 // pred_region
    _
  $region5: #{disc_block1.1} parent=0 // pred_fallthru
    _
  // Predicated region
  $region6: #{disc_block1.1} parent=0 // pred_check
    _
  $region7: #{disc_block1.1} parent=0 // pred_check_branch
    %10 = sbr.rel (0) target = $region9
  $region8: #{disc_block1.1} parent=0 // pred_region
    _
  $region9: #{disc_block1.1} parent=0 // pred_fallthru
    _
  %v11 = vld [vmem:[%s0] sm:$0xff]
  %v12 = vld [vmem:[%s0 + $0x8] sm:$0xff]
  %v13 = vld [vmem:[%s0 + $0x10] sm:$0xff]
  %v14 = vld [vmem:[%s0 + $0x18] sm:$0xff]
  %v15 = vld [vmem:[%s0 + $0x20] sm:$0xff]
  %v16 = vld [vmem:[%s0 + $0x28] sm:$0xff]
  %v17 = vld [vmem:[%s0 + $0x30] sm:$0xff]
  %v18 = vld [vmem:[%s0 + $0x38] sm:$0xff]
  %v19 = vld [vmem:[%s0 + $0x40] sm:$0xff]
  %v20 = vld [vmem:[%s0 + $0x48] sm:$0xff]
  %v21 = vld [vmem:[%s0 + $0x50] sm:$0xff]
  %v22 = vld [vmem:[%s0 + $0x58] sm:$0xff]
  %v23 = vld [vmem:[%s0 + $0x60] sm:$0xff]
  %v24 = vld [vmem:[%s0 + $0x68] sm:$0xff]
  %v25 = vld [vmem:[%s0 + $0x70] sm:$0xff]
  %v26 = vld [vmem:[%s0 + $0x78] sm:$0xff]
  %v27 = vld [vmem:[%s0 + $0x80] sm:$0xff]
  %v28 = vld [vmem:[%s0 + $0x88] sm:$0xff]
  %v29 = vld [vmem:[%s0 + $0x90] sm:$0xff]
  %v30 = vld [vmem:[%s0 + $0x98] sm:$0xff]
  %v31 = vld [vmem:[%s0 + $0xa0] sm:$0xff]
  %v32 = vld [vmem:[%s0 + $0xa8] sm:$0xff]
  %v33 = vld [vmem:[%s0 + $0xb0] sm:$0xff]
  %v34 = vld [vmem:[%s0 + $0xb8] sm:$0xff]
  %v35 = vld [vmem:[%s0 + $0xc0] sm:$0xff]
  %v36 = vld [vmem:[%s0 + $0xc8] sm:$0xff]
  %v37 = vld [vmem:[%s0 + $0xd0] sm:$0xff]
  %v38 = vld [vmem:[%s0 + $0xd8] sm:$0xff]
  %v39 = vld [vmem:[%s0 + $0xe0] sm:$0xff]
  %v40 = vld [vmem:[%s0 + $0xe8] sm:$0xff]
  %v41 = vld [vmem:[%s0 + $0xf0] sm:$0xff]
  %v42 = vld [vmem:[%s0 + $0xf8] sm:$0xff]
  %v43 = vld [vmem:[%s0 + $0x100] sm:$0xff]
  %v44 = vld [vmem:[%s0 + $0x108] sm:$0xff]
  %v45 = vld [vmem:[%s0 + $0x110] sm:$0xff]
  %v46 = vld [vmem:[%s0 + $0x118] sm:$0xff]
  %v47 = vld [vmem:[%s0 + $0x120] sm:$0xff]
  %v48 = vld [vmem:[%s0 + $0x128] sm:$0xff]
  %v49 = vld [vmem:[%s0 + $0x130] sm:$0xff]
  %v50 = vld [vmem:[%s0 + $0x138] sm:$0xff]
  %v51 = vld [vmem:[%s0 + $0x140] sm:$0xff]
  %v52 = vld [vmem:[%s0 + $0x148] sm:$0xff]
  %v53 = vld [vmem:[%s0 + $0x150] sm:$0xff]
  %v54 = vld [vmem:[%s0 + $0x158] sm:$0xff]
  %v55 = vld [vmem:[%s0 + $0x160] sm:$0xff]
  %v56 = vld [vmem:[%s0 + $0x168] sm:$0xff]
  %v57 = vld [vmem:[%s0 + $0x170] sm:$0xff]
  %v58 = vld [vmem:[%s0 + $0x178] sm:$0xff]
  %v59 = vld [vmem:[%s0 + $0x180] sm:$0xff]
  %v60 = vld [vmem:[%s0 + $0x188] sm:$0xff]
  %v61 = vld [vmem:[%s0 + $0x190] sm:$0xff]
  %v62 = vld [vmem:[%s0 + $0x198] sm:$0xff]
  %v63 = vld [vmem:[%s0 + $0x1a0] sm:$0xff]
  %v64 = vld [vmem:[%s0 + $0x1a8] sm:$0xff]
  %v65 = vld [vmem:[%s0 + $0x1b0] sm:$0xff]
  %v66 = vld [vmem:[%s0 + $0x1b8] sm:$0xff]
  %v67 = vld [vmem:[%s0 + $0x1c0] sm:$0xff]
  %v68 = vld [vmem:[%s0 + $0x1c8] sm:$0xff]
  %v69 = vld [vmem:[%s0 + $0x1d0] sm:$0xff]
  %v70 = vld [vmem:[%s0 + $0x1d8] sm:$0xff]
  %v71 = vld [vmem:[%s0 + $0x1e0] sm:$0xff]
  %v72 = vld [vmem:[%s0 + $0x1e8] sm:$0xff]
  %v73 = vld [vmem:[%s0 + $0x1f0] sm:$0xff]
  %v74 = vld [vmem:[%s0 + $0x1f8] sm:$0xff]
  %v75 = vld [vmem:[%s0 + $0x200] sm:$0xff]
  %v76 = vld [vmem:[%s0 + $0x208] sm:$0xff]
  %v77 = vld [vmem:[%s0 + $0x210] sm:$0xff]
  %v78 = vld [vmem:[%s0 + $0x218] sm:$0xff]
  %v79 = vld [vmem:[%s0 + $0x220] sm:$0xff]
  %v80 = vld [vmem:[%s0 + $0x228] sm:$0xff]
  %v81 = vld [vmem:[%s0 + $0x230] sm:$0xff]
  %v82 = vld [vmem:[%s0 + $0x238] sm:$0xff]
  %v83 = vld [vmem:[%s1] sm:$0xff]
  %v84 = vld [vmem:[%s1 + $0x8] sm:$0xff]
  %v85 = vld [vmem:[%s1 + $0x10] sm:$0xff]
  %v86 = vld [vmem:[%s1 + $0x18] sm:$0xff]
  %v87 = vld [vmem:[%s1 + $0x20] sm:$0xff]
  %v88 = vld [vmem:[%s1 + $0x28] sm:$0xff]
  %v89 = vld [vmem:[%s1 + $0x30] sm:$0xff]
  %v90 = vld [vmem:[%s1 + $0x38] sm:$0xff]
  %v91 = vld [vmem:[%s1 + $0x40] sm:$0xff]
  %vm92 = vcmask 105472
  %v94 = vsel %vm92, %v15, 0
  %v97 = vsel %vm92, %v16, 0
  %v100 = vsel %vm92, %v17, 0
  %v103 = vsel %vm92, %v18, 0
  %v106 = vsel %vm92, %v19, 0
  %v109 = vsel %vm92, %v20, 0
  %v112 = vsel %vm92, %v21, 0
  %v115 = vsel %vm92, %v22, 0
  %v118 = vsel %vm92, %v23, 0
  %v121 = vsel %vm92, %v24, 0
  %v124 = vsel %vm92, %v25, 0
  %v127 = vsel %vm92, %v26, 0
  %v130 = vsel %vm92, %v27, 0
  %v133 = vsel %vm92, %v28, 0
  %v136 = vsel %vm92, %v29, 0
  %v139 = vsel %vm92, %v30, 0
  %v142 = vsel %vm92, %v31, 0
  %v145 = vsel %vm92, %v32, 0
  %v148 = vsel %vm92, %v33, 0
  %v151 = vsel %vm92, %v34, 0
  %v154 = vsel %vm92, %v35, 0
  %v157 = vsel %vm92, %v36, 0
  %v160 = vsel %vm92, %v37, 0
  %v163 = vsel %vm92, %v38, 0
  %v166 = vsel %vm92, %v39, 0
  %v169 = vsel %vm92, %v40, 0
  %v172 = vsel %vm92, %v41, 0
  %v175 = vsel %vm92, %v42, 0
  %v178 = vsel %vm92, %v43, 0
  %v181 = vsel %vm92, %v44, 0
  %v184 = vsel %vm92, %v45, 0
  %v187 = vsel %vm92, %v46, 0
  %v190 = vsel %vm92, %v47, 0
  %v193 = vsel %vm92, %v48, 0
  %v196 = vsel %vm92, %v49, 0
  %v199 = vsel %vm92, %v50, 0
  %v202 = vsel %vm92, %v51, 0
  %v205 = vsel %vm92, %v52, 0
  %v208 = vsel %vm92, %v53, 0
  %v211 = vsel %vm92, %v54, 0
  %v214 = vsel %vm92, %v55, 0
  %v217 = vsel %vm92, %v56, 0
  %v220 = vsel %vm92, %v57, 0
  %v223 = vsel %vm92, %v58, 0
  %v226 = vsel %vm92, %v59, 0
  %v229 = vsel %vm92, %v60, 0
  %v232 = vsel %vm92, %v61, 0
  %v235 = vsel %vm92, %v62, 0
  %v238 = vsel %vm92, %v63, 0
  %v241 = vsel %vm92, %v64, 0
  %v244 = vsel %vm92, %v65, 0
  %v247 = vsel %vm92, %v66, 0
  %v250 = vsel %vm92, %v67, 0
  %v253 = vsel %vm92, %v68, 0
  %v256 = vsel %vm92, %v69, 0
  %v259 = vsel %vm92, %v70, 0
  %v262 = vsel %vm92, %v71, 0
  %v265 = vsel %vm92, %v72, 0
  %v268 = vsel %vm92, %v73, 0
  %v271 = vsel %vm92, %v74, 0
  %v274 = vsel %vm92, %v75, 0
  %v277 = vsel %vm92, %v76, 0
  %v280 = vsel %vm92, %v77, 0
  %v283 = vsel %vm92, %v78, 0
  %vm285 = vcmask 1044480
  %v287 = vsel %vm285, %v86, 0
  %289 = vmatprep.subr.mxu0 0.0
  %290 = vmatpush1.msra.mxu0 %v85
  %291 = vmatprep.subr.mxu0 0.0
  %292 = vmatpush1.msra.mxu0 %v287
  %293 = vmatprep.subr.mxu0 0.0
  %294 = vmatpush1.msra.mxu0 0.0
  %295 = vmatprep.subr.mxu0 0.0
  %296 = vmatpush1.msra.mxu0 0.0
  %297 = vmatprep.subr.mxu0 0.0
  %298 = vmatpush1.msra.mxu0 0.0
  %299 = vmatprep.subr.mxu0 0.0
  %300 = vmatpush1.msra.mxu0 0.0
  %301 = vmatprep.subr.mxu0 0.0
  %302 = vmatpush1.msra.mxu0 0.0
  %303 = vmatprep.subr.mxu0 0.0
  %304 = vmatpush1.msra.mxu0 0.0
  %305 = vmatprep.subr.mxu0 0.0
  %306 = vmatpush1.msra.mxu0 0.0
  %307 = vmatprep.subr.mxu0 0.0
  %308 = vmatpush1.msra.mxu0 0.0
  %309 = vmatprep.subr.mxu0 0.0
  %310 = vmatpush1.msra.mxu0 0.0
  %311 = vmatprep.subr.mxu0 0.0
  %312 = vmatpush1.msra.mxu0 0.0
  %313 = vmatprep.subr.mxu0 0.0
  %314 = vmatpush1.msra.mxu0 0.0
  %315 = vmatprep.subr.mxu0 0.0
  %316 = vmatpush1.msra.mxu0 0.0
  %317 = vmatprep.subr.mxu0 0.0
  %318 = vmatpush1.msra.mxu0 0.0
  %319 = vmatprep.subr.mxu0 0.0
  %320 = vmatpush1.msra.mxu0 0.0
  %321 = vmatprep.subr.mxu0 0.0
  %322 = vmatpush1.msra.mxu0 0.0
  %323 = vmatprep.subr.mxu0 0.0
  %324 = vmatpush1.msra.mxu0 0.0
  %325 = vmatprep.subr.mxu0 0.0
  %326 = vmatpush1.msra.mxu0 0.0
  %327 = vmatprep.subr.mxu0 0.0
  %328 = vmatpush1.msra.mxu0 0.0
  %329 = vmatprep.subr.mxu0 0.0
  %330 = vmatpush1.msra.mxu0 0.0
  %331 = vmatprep.subr.mxu0 0.0
  %332 = vmatpush1.msra.mxu0 0.0
  %333 = vmatprep.subr.mxu0 0.0
  %334 = vmatpush1.msra.mxu0 0.0
  %335 = vmatprep.subr.mxu0 0.0
  %336 = vmatpush1.msra.mxu0 0.0
  %337 = vmatprep.subr.mxu0 0.0
  %338 = vmatpush1.msra.mxu0 0.0
  %339 = vmatprep.subr.mxu0 0.0
  %340 = vmatpush1.msra.mxu0 0.0
  %341 = vmatprep.subr.mxu0 0.0
  %342 = vmatpush1.msra.mxu0 0.0
  %343 = vmatprep.subr.mxu0 0.0
  %344 = vmatpush1.msra.mxu0 0.0
  %345 = vmatprep.subr.mxu0 0.0
  %346 = vmatpush1.msra.mxu0 0.0
  %347 = vmatprep.subr.mxu0 0.0
  %348 = vmatpush1.msra.mxu0 0.0
  %349 = vmatprep.subr.mxu0 0.0
  %350 = vmatpush1.msra.mxu0 0.0
  %351 = vmatprep.subr.mxu0 0.0
  %352 = vmatpush1.msra.mxu0 0.0
  %353 = vmatprep.mubr.f32.mxu0 0.0
  %354 = vmatmul.mubr.f32.gmra.mrb[0].mxu0 %v94
  %v355 = vpop.f32.mrb[0].mxu0
  %v356 = vadd.f32 0.0, %v355
  %v357 = vpop.f32.mrb[0].mxu0
  %358 = vmatprep.mubr.f32.mxu0 0.0
  %359 = vmatmul.mubr.f32.gmra.mrb[0].mxu0 %v97
  %v360 = vpop.f32.mrb[0].mxu0
  %v361 = vadd.f32 0.0, %v360
  %v362 = vpop.f32.mrb[0].mxu0
  %363 = vmatprep.mubr.f32.mxu0 0.0
  %364 = vmatmul.mubr.f32.gmra.mrb[0].mxu0 %v100
  %v365 = vpop.f32.mrb[0].mxu0
  %v366 = vadd.f32 0.0, %v365
  %v367 = vpop.f32.mrb[0].mxu0
  %368 = vmatprep.mubr.f32.mxu0 0.0
  %369 = vmatmul.mubr.f32.gmra.mrb[0].mxu0 %v103
  %v370 = vpop.f32.mrb[0].mxu0
  %v371 = vadd.f32 0.0, %v370
  %v372 = vpop.f32.mrb[0].mxu0
  %373 = vmatprep.mubr.f32.mxu0 0.0
  %374 = vmatmul.mubr.f32.gmra.mrb[0].mxu0 %v106
  %v375 = vpop.f32.mrb[0].mxu0
  %v376 = vadd.f32 0.0, %v375
  %v377 = vpop.f32.mrb[0].mxu0
  %378 = vmatprep.mubr.f32.mxu0 0.0
  %379 = vmatmul.mubr.f32.gmra.mrb[0].mxu0 %v109
  %v380 = vpop.f32.mrb[0].mxu0
  %v381 = vadd.f32 0.0, %v380
  %v382 = vpop.f32.mrb[0].mxu0
  %383 = vmatprep.mubr.f32.mxu0 0.0
  %384 = vmatmul.mubr.f32.gmra.mrb[0].mxu0 %v112
  %v385 = vpop.f32.mrb[0].mxu0
  %v386 = vadd.f32 0.0, %v385
  %v387 = vpop.f32.mrb[0].mxu0
  %388 = vmatprep.mubr.f32.mxu0 0.0
  %389 = vmatmul.mubr.f32.gmra.mrb[0].mxu0 %v115
  %v390 = vpop.f32.mrb[0].mxu0
  %v391 = vadd.f32 0.0, %v390
  %v392 = vpop.f32.mrb[0].mxu0
  %393 = vmatprep.mubr.f32.mxu0 0.0
  %394 = vmatmul.mubr.f32.gmra.mrb[0].mxu0 %v118
  %v395 = vpop.f32.mrb[0].mxu0
  %v396 = vadd.f32 0.0, %v395
  %v397 = vpop.f32.mrb[0].mxu0
  %398 = vmatprep.mubr.f32.mxu0 0.0
  %399 = vmatmul.mubr.f32.gmra.mrb[0].mxu0 %v121
  %v400 = vpop.f32.mrb[0].mxu0
  %v401 = vadd.f32 0.0, %v400
  %v402 = vpop.f32.mrb[0].mxu0
  %403 = vmatprep.mubr.f32.mxu0 0.0
  %404 = vmatmul.mubr.f32.gmra.mrb[0].mxu0 %v124
  %v405 = vpop.f32.mrb[0].mxu0
  %v406 = vadd.f32 0.0, %v405
  %v407 = vpop.f32.mrb[0].mxu0
  %408 = vmatprep.mubr.f32.mxu0 0.0
  %409 = vmatmul.mubr.f32.gmra.mrb[0].mxu0 %v127
  %v410 = vpop.f32.mrb[0].mxu0
  %v411 = vadd.f32 0.0, %v410
  %v412 = vpop.f32.mrb[0].mxu0
  %413 = vmatprep.mubr.f32.mxu0 0.0
  %414 = vmatmul.mubr.f32.gmra.mrb[0].mxu0 %v130
  %v415 = vpop.f32.mrb[0].mxu0
  %v416 = vadd.f32 0.0, %v415
  %v417 = vpop.f32.mrb[0].mxu0
  %418 = vmatprep.mubr.f32.mxu0 0.0
  %419 = vmatmul.mubr.f32.gmra.mrb[0].mxu0 %v133
  %v420 = vpop.f32.mrb[0].mxu0
  %v421 = vadd.f32 0.0, %v420
  %v422 = vpop.f32.mrb[0].mxu0
  %423 = vmatprep.mubr.f32.mxu0 0.0
  %424 = vmatmul.mubr.f32.gmra.mrb[0].mxu0 %v136
  %v425 = vpop.f32.mrb[0].mxu0
  %v426 = vadd.f32 0.0, %v425
  %v427 = vpop.f32.mrb[0].mxu0
  %428 = vmatprep.mubr.f32.mxu0 0.0
  %429 = vmatmul.mubr.f32.gmra.mrb[0].mxu0 %v139
  %v430 = vpop.f32.mrb[0].mxu0
  %v431 = vadd.f32 0.0, %v430
  %v432 = vpop.f32.mrb[0].mxu0
  %433 = vmatprep.mubr.f32.mxu0 0.0
  %434 = vmatmul.mubr.f32.gmra.mrb[0].mxu0 %v142
  %v435 = vpop.f32.mrb[0].mxu0
  %v436 = vadd.f32 0.0, %v435
  %v437 = vpop.f32.mrb[0].mxu0
  %438 = vmatprep.mubr.f32.mxu0 0.0
  %439 = vmatmul.mubr.f32.gmra.mrb[0].mxu0 %v145
  %v440 = vpop.f32.mrb[0].mxu0
  %v441 = vadd.f32 0.0, %v440
  %v442 = vpop.f32.mrb[0].mxu0
  %443 = vmatprep.mubr.f32.mxu0 0.0
  %444 = vmatmul.mubr.f32.gmra.mrb[0].mxu0 %v148
  %v445 = vpop.f32.mrb[0].mxu0
  %v446 = vadd.f32 0.0, %v445
  %v447 = vpop.f32.mrb[0].mxu0
  %448 = vmatprep.mubr.f32.mxu0 0.0
  %449 = vmatmul.mubr.f32.gmra.mrb[0].mxu0 %v151
  %v450 = vpop.f32.mrb[0].mxu0
  %v451 = vadd.f32 0.0, %v450
  %v452 = vpop.f32.mrb[0].mxu0
  %453 = vmatprep.mubr.f32.mxu0 0.0
  %454 = vmatmul.mubr.f32.gmra.mrb[0].mxu0 %v154
  %v455 = vpop.f32.mrb[0].mxu0
  %v456 = vadd.f32 0.0, %v455
  %v457 = vpop.f32.mrb[0].mxu0
  %458 = vmatprep.mubr.f32.mxu0 0.0
  %459 = vmatmul.mubr.f32.gmra.mrb[0].mxu0 %v157
  %v460 = vpop.f32.mrb[0].mxu0
  %v461 = vadd.f32 0.0, %v460
  %v462 = vpop.f32.mrb[0].mxu0
  %463 = vmatprep.mubr.f32.mxu0 0.0
  %464 = vmatmul.mubr.f32.gmra.mrb[0].mxu0 %v160
  %v465 = vpop.f32.mrb[0].mxu0
  %v466 = vadd.f32 0.0, %v465
  %v467 = vpop.f32.mrb[0].mxu0
  %468 = vmatprep.mubr.f32.mxu0 0.0
  %469 = vmatmul.mubr.f32.gmra.mrb[0].mxu0 %v163
  %v470 = vpop.f32.mrb[0].mxu0
  %v471 = vadd.f32 0.0, %v470
  %v472 = vpop.f32.mrb[0].mxu0
  %473 = vmatprep.mubr.f32.mxu0 0.0
  %474 = vmatmul.mubr.f32.gmra.mrb[0].mxu0 %v166
  %v475 = vpop.f32.mrb[0].mxu0
  %v476 = vadd.f32 0.0, %v475
  %v477 = vpop.f32.mrb[0].mxu0
  %478 = vmatprep.mubr.f32.mxu0 0.0
  %479 = vmatmul.mubr.f32.gmra.mrb[0].mxu0 %v169
  %v480 = vpop.f32.mrb[0].mxu0
  %v481 = vadd.f32 0.0, %v480
  %v482 = vpop.f32.mrb[0].mxu0
  %483 = vmatprep.mubr.f32.mxu0 0.0
  %484 = vmatmul.mubr.f32.gmra.mrb[0].mxu0 %v172
  %v485 = vpop.f32.mrb[0].mxu0
  %v486 = vadd.f32 0.0, %v485
  %v487 = vpop.f32.mrb[0].mxu0
  %488 = vmatprep.mubr.f32.mxu0 0.0
  %489 = vmatmul.mubr.f32.gmra.mrb[0].mxu0 %v175
  %v490 = vpop.f32.mrb[0].mxu0
  %v491 = vadd.f32 0.0, %v490
  %v492 = vpop.f32.mrb[0].mxu0
  %493 = vmatprep.mubr.f32.mxu0 0.0
  %494 = vmatmul.mubr.f32.gmra.mrb[0].mxu0 %v178
  %v495 = vpop.f32.mrb[0].mxu0
  %v496 = vadd.f32 0.0, %v495
  %v497 = vpop.f32.mrb[0].mxu0
  %498 = vmatprep.mubr.f32.mxu0 0.0
  %499 = vmatmul.mubr.f32.gmra.mrb[0].mxu0 %v181
  %v500 = vpop.f32.mrb[0].mxu0
  %v501 = vadd.f32 0.0, %v500
  %v502 = vpop.f32.mrb[0].mxu0
  %503 = vmatprep.mubr.f32.mxu0 0.0
  %504 = vmatmul.mubr.f32.gmra.mrb[0].mxu0 %v184
  %v505 = vpop.f32.mrb[0].mxu0
  %v506 = vadd.f32 0.0, %v505
  %v507 = vpop.f32.mrb[0].mxu0
  %508 = vmatprep.mubr.f32.mxu0 0.0
  %509 = vmatmul.mubr.f32.gmra.mrb[0].mxu0 %v187
  %v510 = vpop.f32.mrb[0].mxu0
  %v511 = vadd.f32 0.0, %v510
  %v512 = vpop.f32.mrb[0].mxu0
  %513 = vmatprep.mubr.f32.mxu0 0.0
  %514 = vmatmul.mubr.f32.gmra.mrb[0].mxu0 %v190
  %v515 = vpop.f32.mrb[0].mxu0
  %v516 = vadd.f32 0.0, %v515
  %v517 = vpop.f32.mrb[0].mxu0
  %518 = vmatprep.mubr.f32.mxu0 0.0
  %519 = vmatmul.mubr.f32.gmra.mrb[0].mxu0 %v193
  %v520 = vpop.f32.mrb[0].mxu0
  %v521 = vadd.f32 0.0, %v520
  %v522 = vpop.f32.mrb[0].mxu0
  %523 = vmatprep.mubr.f32.mxu0 0.0
  %524 = vmatmul.mubr.f32.gmra.mrb[0].mxu0 %v196
  %v525 = vpop.f32.mrb[0].mxu0
  %v526 = vadd.f32 0.0, %v525
  %v527 = vpop.f32.mrb[0].mxu0
  %528 = vmatprep.mubr.f32.mxu0 0.0
  %529 = vmatmul.mubr.f32.gmra.mrb[0].mxu0 %v199
  %v530 = vpop.f32.mrb[0].mxu0
  %v531 = vadd.f32 0.0, %v530
  %v532 = vpop.f32.mrb[0].mxu0
  %533 = vmatprep.mubr.f32.mxu0 0.0
  %534 = vmatmul.mubr.f32.gmra.mrb[0].mxu0 %v202
  %v535 = vpop.f32.mrb[0].mxu0
  %v536 = vadd.f32 0.0, %v535
  %v537 = vpop.f32.mrb[0].mxu0
  %538 = vmatprep.mubr.f32.mxu0 0.0
  %539 = vmatmul.mubr.f32.gmra.mrb[0].mxu0 %v205
  %v540 = vpop.f32.mrb[0].mxu0
  %v541 = vadd.f32 0.0, %v540
  %v542 = vpop.f32.mrb[0].mxu0
  %543 = vmatprep.mubr.f32.mxu0 0.0
  %544 = vmatmul.mubr.f32.gmra.mrb[0].mxu0 %v208
  %v545 = vpop.f32.mrb[0].mxu0
  %v546 = vadd.f32 0.0, %v545
  %v547 = vpop.f32.mrb[0].mxu0
  %548 = vmatprep.mubr.f32.mxu0 0.0
  %549 = vmatmul.mubr.f32.gmra.mrb[0].mxu0 %v211
  %v550 = vpop.f32.mrb[0].mxu0
  %v551 = vadd.f32 0.0, %v550
  %v552 = vpop.f32.mrb[0].mxu0
  %553 = vmatprep.mubr.f32.mxu0 0.0
  %554 = vmatmul.mubr.f32.gmra.mrb[0].mxu0 %v214
  %v555 = vpop.f32.mrb[0].mxu0
  %v556 = vadd.f32 0.0, %v555
  %v557 = vpop.f32.mrb[0].mxu0
  %558 = vmatprep.mubr.f32.mxu0 0.0
  %559 = vmatmul.mubr.f32.gmra.mrb[0].mxu0 %v217
  %v560 = vpop.f32.mrb[0].mxu0
  %v561 = vadd.f32 0.0, %v560
  %v562 = vpop.f32.mrb[0].mxu0
  %563 = vmatprep.mubr.f32.mxu0 0.0
  %564 = vmatmul.mubr.f32.gmra.mrb[0].mxu0 %v220
  %v565 = vpop.f32.mrb[0].mxu0
  %v566 = vadd.f32 0.0, %v565
  %v567 = vpop.f32.mrb[0].mxu0
  %568 = vmatprep.mubr.f32.mxu0 0.0
  %569 = vmatmul.mubr.f32.gmra.mrb[0].mxu0 %v223
  %v570 = vpop.f32.mrb[0].mxu0
  %v571 = vadd.f32 0.0, %v570
  %v572 = vpop.f32.mrb[0].mxu0
  %573 = vmatprep.mubr.f32.mxu0 0.0
  %574 = vmatmul.mubr.f32.gmra.mrb[0].mxu0 %v226
  %v575 = vpop.f32.mrb[0].mxu0
  %v576 = vadd.f32 0.0, %v575
  %v577 = vpop.f32.mrb[0].mxu0
  %578 = vmatprep.mubr.f32.mxu0 0.0
  %579 = vmatmul.mubr.f32.gmra.mrb[0].mxu0 %v229
  %v580 = vpop.f32.mrb[0].mxu0
  %v581 = vadd.f32 0.0, %v580
  %v582 = vpop.f32.mrb[0].mxu0
  %583 = vmatprep.mubr.f32.mxu0 0.0
  %584 = vmatmul.mubr.f32.gmra.mrb[0].mxu0 %v232
  %v585 = vpop.f32.mrb[0].mxu0
  %v586 = vadd.f32 0.0, %v585
  %v587 = vpop.f32.mrb[0].mxu0
  %588 = vmatprep.mubr.f32.mxu0 0.0
  %589 = vmatmul.mubr.f32.gmra.mrb[0].mxu0 %v235
  %v590 = vpop.f32.mrb[0].mxu0
  %v591 = vadd.f32 0.0, %v590
  %v592 = vpop.f32.mrb[0].mxu0
  %593 = vmatprep.mubr.f32.mxu0 0.0
  %594 = vmatmul.mubr.f32.gmra.mrb[0].mxu0 %v238
  %v595 = vpop.f32.mrb[0].mxu0
  %v596 = vadd.f32 0.0, %v595
  %v597 = vpop.f32.mrb[0].mxu0
  %598 = vmatprep.mubr.f32.mxu0 0.0
  %599 = vmatmul.mubr.f32.gmra.mrb[0].mxu0 %v241
  %v600 = vpop.f32.mrb[0].mxu0
  %v601 = vadd.f32 0.0, %v600
  %v602 = vpop.f32.mrb[0].mxu0
  %603 = vmatprep.mubr.f32.mxu0 0.0
  %604 = vmatmul.mubr.f32.gmra.mrb[0].mxu0 %v244
  %v605 = vpop.f32.mrb[0].mxu0
  %v606 = vadd.f32 0.0, %v605
  %v607 = vpop.f32.mrb[0].mxu0
  %608 = vmatprep.mubr.f32.mxu0 0.0
  %609 = vmatmul.mubr.f32.gmra.mrb[0].mxu0 %v247
  %v610 = vpop.f32.mrb[0].mxu0
  %v611 = vadd.f32 0.0, %v610
  %v612 = vpop.f32.mrb[0].mxu0
  %613 = vmatprep.mubr.f32.mxu0 0.0
  %614 = vmatmul.mubr.f32.gmra.mrb[0].mxu0 %v250
  %v615 = vpop.f32.mrb[0].mxu0
  %v616 = vadd.f32 0.0, %v615
  %v617 = vpop.f32.mrb[0].mxu0
  %618 = vmatprep.mubr.f32.mxu0 0.0
  %619 = vmatmul.mubr.f32.gmra.mrb[0].mxu0 %v253
  %v620 = vpop.f32.mrb[0].mxu0
  %v621 = vadd.f32 0.0, %v620
  %v622 = vpop.f32.mrb[0].mxu0
  %623 = vmatprep.mubr.f32.mxu0 0.0
  %624 = vmatmul.mubr.f32.gmra.mrb[0].mxu0 %v256
  %v625 = vpop.f32.mrb[0].mxu0
  %v626 = vadd.f32 0.0, %v625
  %v627 = vpop.f32.mrb[0].mxu0
  %628 = vmatprep.mubr.f32.mxu0 0.0
  %629 = vmatmul.mubr.f32.gmra.mrb[0].mxu0 %v259
  %v630 = vpop.f32.mrb[0].mxu0
  %v631 = vadd.f32 0.0, %v630
  %v632 = vpop.f32.mrb[0].mxu0
  %633 = vmatprep.mubr.f32.mxu0 0.0
  %634 = vmatmul.mubr.f32.gmra.mrb[0].mxu0 %v262
  %v635 = vpop.f32.mrb[0].mxu0
  %v636 = vadd.f32 0.0, %v635
  %v637 = vpop.f32.mrb[0].mxu0
  %638 = vmatprep.mubr.f32.mxu0 0.0
  %639 = vmatmul.mubr.f32.gmra.mrb[0].mxu0 %v265
  %v640 = vpop.f32.mrb[0].mxu0
  %v641 = vadd.f32 0.0, %v640
  %v642 = vpop.f32.mrb[0].mxu0
  %643 = vmatprep.mubr.f32.mxu0 0.0
  %644 = vmatmul.mubr.f32.gmra.mrb[0].mxu0 %v268
  %v645 = vpop.f32.mrb[0].mxu0
  %v646 = vadd.f32 0.0, %v645
  %v647 = vpop.f32.mrb[0].mxu0
  %648 = vmatprep.mubr.f32.mxu0 0.0
  %649 = vmatmul.mubr.f32.gmra.mrb[0].mxu0 %v271
  %v650 = vpop.f32.mrb[0].mxu0
  %v651 = vadd.f32 0.0, %v650
  %v652 = vpop.f32.mrb[0].mxu0
  %653 = vmatprep.mubr.f32.mxu0 0.0
  %654 = vmatmul.mubr.f32.gmra.mrb[0].mxu0 %v274
  %v655 = vpop.f32.mrb[0].mxu0
  %v656 = vadd.f32 0.0, %v655
  %v657 = vpop.f32.mrb[0].mxu0
  %658 = vmatprep.mubr.f32.mxu0 0.0
  %659 = vmatmul.mubr.f32.gmra.mrb[0].mxu0 %v277
  %v660 = vpop.f32.mrb[0].mxu0
  %v661 = vadd.f32 0.0, %v660
  %v662 = vpop.f32.mrb[0].mxu0
  %663 = vmatprep.mubr.f32.mxu0 0.0
  %664 = vmatmul.mubr.f32.gmra.mrb[0].mxu0 %v280
  %v665 = vpop.f32.mrb[0].mxu0
  %v666 = vadd.f32 0.0, %v665
  %v667 = vpop.f32.mrb[0].mxu0
  %668 = vmatprep.mubr.f32.mxu0 0.0
  %669 = vmatmul.mubr.f32.gmra.mrb[0].mxu0 %v283
  %v670 = vpop.f32.mrb[0].mxu0
  %v671 = vadd.f32 0.0, %v670
  %v672 = vpop.f32.mrb[0].mxu0
  %673 = vdwg.mxu0
  %v675 = vsel %vm92, %v11, 0
  %v678 = vsel %vm92, %v12, 0
  %v681 = vsel %vm92, %v13, 0
  %v684 = vsel %vm92, %v14, 0
  %v687 = vsel %vm285, %v84, 0
  %689 = vmatprep.subr.mxu0 0.0
  %690 = vmatpush1.msra.mxu0 %v83
  %691 = vmatprep.subr.mxu0 0.0
  %692 = vmatpush1.msra.mxu0 %v687
  %693 = vmatprep.subr.mxu0 0.0
  %694 = vmatpush1.msra.mxu0 0.0
  %695 = vmatprep.subr.mxu0 0.0
  %696 = vmatpush1.msra.mxu0 0.0
  %697 = vmatprep.subr.mxu0 0.0
  %698 = vmatpush1.msra.mxu0 0.0
  %699 = vmatprep.subr.mxu0 0.0
  %700 = vmatpush1.msra.mxu0 0.0
  %701 = vmatprep.subr.mxu0 0.0
  %702 = vmatpush1.msra.mxu0 0.0
  %703 = vmatprep.subr.mxu0 0.0
  %704 = vmatpush1.msra.mxu0 0.0
  %705 = vmatprep.subr.mxu0 0.0
  %706 = vmatpush1.msra.mxu0 0.0
  %707 = vmatprep.subr.mxu0 0.0
  %708 = vmatpush1.msra.mxu0 0.0
  %709 = vmatprep.subr.mxu0 0.0
  %710 = vmatpush1.msra.mxu0 0.0
  %711 = vmatprep.subr.mxu0 0.0
  %712 = vmatpush1.msra.mxu0 0.0
  %713 = vmatprep.subr.mxu0 0.0
  %714 = vmatpush1.msra.mxu0 0.0
  %715 = vmatprep.subr.mxu0 0.0
  %716 = vmatpush1.msra.mxu0 0.0
  %717 = vmatprep.subr.mxu0 0.0
  %718 = vmatpush1.msra.mxu0 0.0
  %719 = vmatprep.subr.mxu0 0.0
  %720 = vmatpush1.msra.mxu0 0.0
  %721 = vmatprep.subr.mxu0 0.0
  %722 = vmatpush1.msra.mxu0 0.0
  %723 = vmatprep.subr.mxu0 0.0
  %724 = vmatpush1.msra.mxu0 0.0
  %725 = vmatprep.subr.mxu0 0.0
  %726 = vmatpush1.msra.mxu0 0.0
  %727 = vmatprep.subr.mxu0 0.0
  %728 = vmatpush1.msra.mxu0 0.0
  %729 = vmatprep.subr.mxu0 0.0
  %730 = vmatpush1.msra.mxu0 0.0
  %731 = vmatprep.subr.mxu0 0.0
  %732 = vmatpush1.msra.mxu0 0.0
  %733 = vmatprep.subr.mxu0 0.0
  %734 = vmatpush1.msra.mxu0 0.0
  %735 = vmatprep.subr.mxu0 0.0
  %736 = vmatpush1.msra.mxu0 0.0
  %737 = vmatprep.subr.mxu0 0.0
  %738 = vmatpush1.msra.mxu0 0.0
  %739 = vmatprep.subr.mxu0 0.0
  %740 = vmatpush1.msra.mxu0 0.0
  %741 = vmatprep.subr.mxu0 0.0
  %742 = vmatpush1.msra.mxu0 0.0
  %743 = vmatprep.subr.mxu0 0.0
  %744 = vmatpush1.msra.mxu0 0.0
  %745 = vmatprep.subr.mxu0 0.0
  %746 = vmatpush1.msra.mxu0 0.0
  %747 = vmatprep.subr.mxu0 0.0
  %748 = vmatpush1.msra.mxu0 0.0
  %749 = vmatprep.subr.mxu0 0.0
  %750 = vmatpush1.msra.mxu0 0.0
  %751 = vmatprep.subr.mxu0 0.0
  %752 = vmatpush1.msra.mxu0 0.0
  %753 = vmatprep.mubr.f32.mxu0 0.0
  %754 = vmatmul.mubr.f32.gmra.mrb[0].mxu0 %v675
  %v755 = vpop.f32.mrb[0].mxu0
  %v756 = vadd.f32 %v356, %v755
  %v757 = vpop.f32.mrb[0].mxu0
  %758 = vmatprep.mubr.f32.mxu0 0.0
  %759 = vmatmul.mubr.f32.gmra.mrb[0].mxu0 %v678
  %v760 = vpop.f32.mrb[0].mxu0
  %v761 = vadd.f32 %v361, %v760
  %v762 = vpop.f32.mrb[0].mxu0
  %763 = vmatprep.mubr.f32.mxu0 0.0
  %764 = vmatmul.mubr.f32.gmra.mrb[0].mxu0 %v681
  %v765 = vpop.f32.mrb[0].mxu0
  %v766 = vadd.f32 %v366, %v765
  %v767 = vpop.f32.mrb[0].mxu0
  %768 = vmatprep.mubr.f32.mxu0 0.0
  %769 = vmatmul.mubr.f32.gmra.mrb[0].mxu0 %v684
  %v770 = vpop.f32.mrb[0].mxu0
  %v771 = vadd.f32 %v371, %v770
  %v772 = vpop.f32.mrb[0].mxu0
  %773 = vmatprep.mubr.f32.mxu0 0.0
  %774 = vmatmul.mubr.f32.gmra.mrb[0].mxu0 %v94
  %v775 = vpop.f32.mrb[0].mxu0
  %v776 = vadd.f32 %v376, %v775
  %v777 = vpop.f32.mrb[0].mxu0
  %778 = vmatprep.mubr.f32.mxu0 0.0
  %779 = vmatmul.mubr.f32.gmra.mrb[0].mxu0 %v97
  %v780 = vpop.f32.mrb[0].mxu0
  %v781 = vadd.f32 %v381, %v780
  %v782 = vpop.f32.mrb[0].mxu0
  %783 = vmatprep.mubr.f32.mxu0 0.0
  %784 = vmatmul.mubr.f32.gmra.mrb[0].mxu0 %v100
  %v785 = vpop.f32.mrb[0].mxu0
  %v786 = vadd.f32 %v386, %v785
  %v787 = vpop.f32.mrb[0].mxu0
  %788 = vmatprep.mubr.f32.mxu0 0.0
  %789 = vmatmul.mubr.f32.gmra.mrb[0].mxu0 %v103
  %v790 = vpop.f32.mrb[0].mxu0
  %v791 = vadd.f32 %v391, %v790
  %v792 = vpop.f32.mrb[0].mxu0
  %793 = vmatprep.mubr.f32.mxu0 0.0
  %794 = vmatmul.mubr.f32.gmra.mrb[0].mxu0 %v106
  %v795 = vpop.f32.mrb[0].mxu0
  %v796 = vadd.f32 %v396, %v795
  %v797 = vpop.f32.mrb[0].mxu0
  %798 = vmatprep.mubr.f32.mxu0 0.0
  %799 = vmatmul.mubr.f32.gmra.mrb[0].mxu0 %v109
  %v800 = vpop.f32.mrb[0].mxu0
  %v801 = vadd.f32 %v401, %v800
  %v802 = vpop.f32.mrb[0].mxu0
  %803 = vmatprep.mubr.f32.mxu0 0.0
  %804 = vmatmul.mubr.f32.gmra.mrb[0].mxu0 %v112
  %v805 = vpop.f32.mrb[0].mxu0
  %v806 = vadd.f32 %v406, %v805
  %v807 = vpop.f32.mrb[0].mxu0
  %808 = vmatprep.mubr.f32.mxu0 0.0
  %809 = vmatmul.mubr.f32.gmra.mrb[0].mxu0 %v115
  %v810 = vpop.f32.mrb[0].mxu0
  %v811 = vadd.f32 %v411, %v810
  %v812 = vpop.f32.mrb[0].mxu0
  %813 = vmatprep.mubr.f32.mxu0 0.0
  %814 = vmatmul.mubr.f32.gmra.mrb[0].mxu0 %v118
  %v815 = vpop.f32.mrb[0].mxu0
  %v816 = vadd.f32 %v416, %v815
  %v817 = vpop.f32.mrb[0].mxu0
  %818 = vmatprep.mubr.f32.mxu0 0.0
  %819 = vmatmul.mubr.f32.gmra.mrb[0].mxu0 %v121
  %v820 = vpop.f32.mrb[0].mxu0
  %v821 = vadd.f32 %v421, %v820
  %v822 = vpop.f32.mrb[0].mxu0
  %823 = vmatprep.mubr.f32.mxu0 0.0
  %824 = vmatmul.mubr.f32.gmra.mrb[0].mxu0 %v124
  %v825 = vpop.f32.mrb[0].mxu0
  %v826 = vadd.f32 %v426, %v825
  %v827 = vpop.f32.mrb[0].mxu0
  %828 = vmatprep.mubr.f32.mxu0 0.0
  %829 = vmatmul.mubr.f32.gmra.mrb[0].mxu0 %v127
  %v830 = vpop.f32.mrb[0].mxu0
  %v831 = vadd.f32 %v431, %v830
  %v832 = vpop.f32.mrb[0].mxu0
  %833 = vmatprep.mubr.f32.mxu0 0.0
  %834 = vmatmul.mubr.f32.gmra.mrb[0].mxu0 %v130
  %v835 = vpop.f32.mrb[0].mxu0
  %v836 = vadd.f32 %v436, %v835
  %v837 = vpop.f32.mrb[0].mxu0
  %838 = vmatprep.mubr.f32.mxu0 0.0
  %839 = vmatmul.mubr.f32.gmra.mrb[0].mxu0 %v133
  %v840 = vpop.f32.mrb[0].mxu0
  %v841 = vadd.f32 %v441, %v840
  %v842 = vpop.f32.mrb[0].mxu0
  %843 = vmatprep.mubr.f32.mxu0 0.0
  %844 = vmatmul.mubr.f32.gmra.mrb[0].mxu0 %v136
  %v845 = vpop.f32.mrb[0].mxu0
  %v846 = vadd.f32 %v446, %v845
  %v847 = vpop.f32.mrb[0].mxu0
  %848 = vmatprep.mubr.f32.mxu0 0.0
  %849 = vmatmul.mubr.f32.gmra.mrb[0].mxu0 %v139
  %v850 = vpop.f32.mrb[0].mxu0
  %v851 = vadd.f32 %v451, %v850
  %v852 = vpop.f32.mrb[0].mxu0
  %853 = vmatprep.mubr.f32.mxu0 0.0
  %854 = vmatmul.mubr.f32.gmra.mrb[0].mxu0 %v142
  %v855 = vpop.f32.mrb[0].mxu0
  %v856 = vadd.f32 %v456, %v855
  %v857 = vpop.f32.mrb[0].mxu0
  %858 = vmatprep.mubr.f32.mxu0 0.0
  %859 = vmatmul.mubr.f32.gmra.mrb[0].mxu0 %v145
  %v860 = vpop.f32.mrb[0].mxu0
  %v861 = vadd.f32 %v461, %v860
  %v862 = vpop.f32.mrb[0].mxu0
  %863 = vmatprep.mubr.f32.mxu0 0.0
  %864 = vmatmul.mubr.f32.gmra.mrb[0].mxu0 %v148
  %v865 = vpop.f32.mrb[0].mxu0
  %v866 = vadd.f32 %v466, %v865
  %v867 = vpop.f32.mrb[0].mxu0
  %868 = vmatprep.mubr.f32.mxu0 0.0
  %869 = vmatmul.mubr.f32.gmra.mrb[0].mxu0 %v151
  %v870 = vpop.f32.mrb[0].mxu0
  %v871 = vadd.f32 %v471, %v870
  %v872 = vpop.f32.mrb[0].mxu0
  %873 = vmatprep.mubr.f32.mxu0 0.0
  %874 = vmatmul.mubr.f32.gmra.mrb[0].mxu0 %v154
  %v875 = vpop.f32.mrb[0].mxu0
  %v876 = vadd.f32 %v476, %v875
  %v877 = vpop.f32.mrb[0].mxu0
  %878 = vmatprep.mubr.f32.mxu0 0.0
  %879 = vmatmul.mubr.f32.gmra.mrb[0].mxu0 %v157
  %v880 = vpop.f32.mrb[0].mxu0
  %v881 = vadd.f32 %v481, %v880
  %v882 = vpop.f32.mrb[0].mxu0
  %883 = vmatprep.mubr.f32.mxu0 0.0
  %884 = vmatmul.mubr.f32.gmra.mrb[0].mxu0 %v160
  %v885 = vpop.f32.mrb[0].mxu0
  %v886 = vadd.f32 %v486, %v885
  %v887 = vpop.f32.mrb[0].mxu0
  %888 = vmatprep.mubr.f32.mxu0 0.0
  %889 = vmatmul.mubr.f32.gmra.mrb[0].mxu0 %v163
  %v890 = vpop.f32.mrb[0].mxu0
  %v891 = vadd.f32 %v491, %v890
  %v892 = vpop.f32.mrb[0].mxu0
  %893 = vmatprep.mubr.f32.mxu0 0.0
  %894 = vmatmul.mubr.f32.gmra.mrb[0].mxu0 %v166
  %v895 = vpop.f32.mrb[0].mxu0
  %v896 = vadd.f32 %v496, %v895
  %v897 = vpop.f32.mrb[0].mxu0
  %898 = vmatprep.mubr.f32.mxu0 0.0
  %899 = vmatmul.mubr.f32.gmra.mrb[0].mxu0 %v169
  %v900 = vpop.f32.mrb[0].mxu0
  %v901 = vadd.f32 %v501, %v900
  %v902 = vpop.f32.mrb[0].mxu0
  %903 = vmatprep.mubr.f32.mxu0 0.0
  %904 = vmatmul.mubr.f32.gmra.mrb[0].mxu0 %v172
  %v905 = vpop.f32.mrb[0].mxu0
  %v906 = vadd.f32 %v506, %v905
  %v907 = vpop.f32.mrb[0].mxu0
  %908 = vmatprep.mubr.f32.mxu0 0.0
  %909 = vmatmul.mubr.f32.gmra.mrb[0].mxu0 %v175
  %v910 = vpop.f32.mrb[0].mxu0
  %v911 = vadd.f32 %v511, %v910
  %v912 = vpop.f32.mrb[0].mxu0
  %913 = vmatprep.mubr.f32.mxu0 0.0
  %914 = vmatmul.mubr.f32.gmra.mrb[0].mxu0 %v178
  %v915 = vpop.f32.mrb[0].mxu0
  %v916 = vadd.f32 %v516, %v915
  %v917 = vpop.f32.mrb[0].mxu0
  %918 = vmatprep.mubr.f32.mxu0 0.0
  %919 = vmatmul.mubr.f32.gmra.mrb[0].mxu0 %v181
  %v920 = vpop.f32.mrb[0].mxu0
  %v921 = vadd.f32 %v521, %v920
  %v922 = vpop.f32.mrb[0].mxu0
  %923 = vmatprep.mubr.f32.mxu0 0.0
  %924 = vmatmul.mubr.f32.gmra.mrb[0].mxu0 %v184
  %v925 = vpop.f32.mrb[0].mxu0
  %v926 = vadd.f32 %v526, %v925
  %v927 = vpop.f32.mrb[0].mxu0
  %928 = vmatprep.mubr.f32.mxu0 0.0
  %929 = vmatmul.mubr.f32.gmra.mrb[0].mxu0 %v187
  %v930 = vpop.f32.mrb[0].mxu0
  %v931 = vadd.f32 %v531, %v930
  %v932 = vpop.f32.mrb[0].mxu0
  %933 = vmatprep.mubr.f32.mxu0 0.0
  %934 = vmatmul.mubr.f32.gmra.mrb[0].mxu0 %v190
  %v935 = vpop.f32.mrb[0].mxu0
  %v936 = vadd.f32 %v536, %v935
  %v937 = vpop.f32.mrb[0].mxu0
  %938 = vmatprep.mubr.f32.mxu0 0.0
  %939 = vmatmul.mubr.f32.gmra.mrb[0].mxu0 %v193
  %v940 = vpop.f32.mrb[0].mxu0
  %v941 = vadd.f32 %v541, %v940
  %v942 = vpop.f32.mrb[0].mxu0
  %943 = vmatprep.mubr.f32.mxu0 0.0
  %944 = vmatmul.mubr.f32.gmra.mrb[0].mxu0 %v196
  %v945 = vpop.f32.mrb[0].mxu0
  %v946 = vadd.f32 %v546, %v945
  %v947 = vpop.f32.mrb[0].mxu0
  %948 = vmatprep.mubr.f32.mxu0 0.0
  %949 = vmatmul.mubr.f32.gmra.mrb[0].mxu0 %v199
  %v950 = vpop.f32.mrb[0].mxu0
  %v951 = vadd.f32 %v551, %v950
  %v952 = vpop.f32.mrb[0].mxu0
  %953 = vmatprep.mubr.f32.mxu0 0.0
  %954 = vmatmul.mubr.f32.gmra.mrb[0].mxu0 %v202
  %v955 = vpop.f32.mrb[0].mxu0
  %v956 = vadd.f32 %v556, %v955
  %v957 = vpop.f32.mrb[0].mxu0
  %958 = vmatprep.mubr.f32.mxu0 0.0
  %959 = vmatmul.mubr.f32.gmra.mrb[0].mxu0 %v205
  %v960 = vpop.f32.mrb[0].mxu0
  %v961 = vadd.f32 %v561, %v960
  %v962 = vpop.f32.mrb[0].mxu0
  %963 = vmatprep.mubr.f32.mxu0 0.0
  %964 = vmatmul.mubr.f32.gmra.mrb[0].mxu0 %v208
  %v965 = vpop.f32.mrb[0].mxu0
  %v966 = vadd.f32 %v566, %v965
  %v967 = vpop.f32.mrb[0].mxu0
  %968 = vmatprep.mubr.f32.mxu0 0.0
  %969 = vmatmul.mubr.f32.gmra.mrb[0].mxu0 %v211
  %v970 = vpop.f32.mrb[0].mxu0
  %v971 = vadd.f32 %v571, %v970
  %v972 = vpop.f32.mrb[0].mxu0
  %973 = vmatprep.mubr.f32.mxu0 0.0
  %974 = vmatmul.mubr.f32.gmra.mrb[0].mxu0 %v214
  %v975 = vpop.f32.mrb[0].mxu0
  %v976 = vadd.f32 %v576, %v975
  %v977 = vpop.f32.mrb[0].mxu0
  %978 = vmatprep.mubr.f32.mxu0 0.0
  %979 = vmatmul.mubr.f32.gmra.mrb[0].mxu0 %v217
  %v980 = vpop.f32.mrb[0].mxu0
  %v981 = vadd.f32 %v581, %v980
  %v982 = vpop.f32.mrb[0].mxu0
  %983 = vmatprep.mubr.f32.mxu0 0.0
  %984 = vmatmul.mubr.f32.gmra.mrb[0].mxu0 %v220
  %v985 = vpop.f32.mrb[0].mxu0
  %v986 = vadd.f32 %v586, %v985
  %v987 = vpop.f32.mrb[0].mxu0
  %988 = vmatprep.mubr.f32.mxu0 0.0
  %989 = vmatmul.mubr.f32.gmra.mrb[0].mxu0 %v223
  %v990 = vpop.f32.mrb[0].mxu0
  %v991 = vadd.f32 %v591, %v990
  %v992 = vpop.f32.mrb[0].mxu0
  %993 = vmatprep.mubr.f32.mxu0 0.0
  %994 = vmatmul.mubr.f32.gmra.mrb[0].mxu0 %v226
  %v995 = vpop.f32.mrb[0].mxu0
  %v996 = vadd.f32 %v596, %v995
  %v997 = vpop.f32.mrb[0].mxu0
  %998 = vmatprep.mubr.f32.mxu0 0.0
  %999 = vmatmul.mubr.f32.gmra.mrb[0].mxu0 %v229
  %v1000 = vpop.f32.mrb[0].mxu0
  %v1001 = vadd.f32 %v601, %v1000
  %v1002 = vpop.f32.mrb[0].mxu0
  %1003 = vmatprep.mubr.f32.mxu0 0.0
  %1004 = vmatmul.mubr.f32.gmra.mrb[0].mxu0 %v232
  %v1005 = vpop.f32.mrb[0].mxu0
  %v1006 = vadd.f32 %v606, %v1005
  %v1007 = vpop.f32.mrb[0].mxu0
  %1008 = vmatprep.mubr.f32.mxu0 0.0
  %1009 = vmatmul.mubr.f32.gmra.mrb[0].mxu0 %v235
  %v1010 = vpop.f32.mrb[0].mxu0
  %v1011 = vadd.f32 %v611, %v1010
  %v1012 = vpop.f32.mrb[0].mxu0
  %1013 = vmatprep.mubr.f32.mxu0 0.0
  %1014 = vmatmul.mubr.f32.gmra.mrb[0].mxu0 %v238
  %v1015 = vpop.f32.mrb[0].mxu0
  %v1016 = vadd.f32 %v616, %v1015
  %v1017 = vpop.f32.mrb[0].mxu0
  %1018 = vmatprep.mubr.f32.mxu0 0.0
  %1019 = vmatmul.mubr.f32.gmra.mrb[0].mxu0 %v241
  %v1020 = vpop.f32.mrb[0].mxu0
  %v1021 = vadd.f32 %v621, %v1020
  %v1022 = vpop.f32.mrb[0].mxu0
  %1023 = vmatprep.mubr.f32.mxu0 0.0
  %1024 = vmatmul.mubr.f32.gmra.mrb[0].mxu0 %v244
  %v1025 = vpop.f32.mrb[0].mxu0
  %v1026 = vadd.f32 %v626, %v1025
  %v1027 = vpop.f32.mrb[0].mxu0
  %1028 = vmatprep.mubr.f32.mxu0 0.0
  %1029 = vmatmul.mubr.f32.gmra.mrb[0].mxu0 %v247
  %v1030 = vpop.f32.mrb[0].mxu0
  %v1031 = vadd.f32 %v631, %v1030
  %v1032 = vpop.f32.mrb[0].mxu0
  %1033 = vmatprep.mubr.f32.mxu0 0.0
  %1034 = vmatmul.mubr.f32.gmra.mrb[0].mxu0 %v250
  %v1035 = vpop.f32.mrb[0].mxu0
  %v1036 = vadd.f32 %v636, %v1035
  %v1037 = vpop.f32.mrb[0].mxu0
  %1038 = vmatprep.mubr.f32.mxu0 0.0
  %1039 = vmatmul.mubr.f32.gmra.mrb[0].mxu0 %v253
  %v1040 = vpop.f32.mrb[0].mxu0
  %v1041 = vadd.f32 %v641, %v1040
  %v1042 = vpop.f32.mrb[0].mxu0
  %1043 = vmatprep.mubr.f32.mxu0 0.0
  %1044 = vmatmul.mubr.f32.gmra.mrb[0].mxu0 %v256
  %v1045 = vpop.f32.mrb[0].mxu0
  %v1046 = vadd.f32 %v646, %v1045
  %v1047 = vpop.f32.mrb[0].mxu0
  %1048 = vmatprep.mubr.f32.mxu0 0.0
  %1049 = vmatmul.mubr.f32.gmra.mrb[0].mxu0 %v259
  %v1050 = vpop.f32.mrb[0].mxu0
  %v1051 = vadd.f32 %v651, %v1050
  %v1052 = vpop.f32.mrb[0].mxu0
  %1053 = vmatprep.mubr.f32.mxu0 0.0
  %1054 = vmatmul.mubr.f32.gmra.mrb[0].mxu0 %v262
  %v1055 = vpop.f32.mrb[0].mxu0
  %v1056 = vadd.f32 %v656, %v1055
  %v1057 = vpop.f32.mrb[0].mxu0
  %1058 = vmatprep.mubr.f32.mxu0 0.0
  %1059 = vmatmul.mubr.f32.gmra.mrb[0].mxu0 %v265
  %v1060 = vpop.f32.mrb[0].mxu0
  %v1061 = vadd.f32 %v661, %v1060
  %v1062 = vpop.f32.mrb[0].mxu0
  %1063 = vmatprep.mubr.f32.mxu0 0.0
  %1064 = vmatmul.mubr.f32.gmra.mrb[0].mxu0 %v268
  %v1065 = vpop.f32.mrb[0].mxu0
  %v1066 = vadd.f32 %v666, %v1065
  %v1067 = vpop.f32.mrb[0].mxu0
  %1068 = vmatprep.mubr.f32.mxu0 0.0
  %1069 = vmatmul.mubr.f32.gmra.mrb[0].mxu0 %v271
  %v1070 = vpop.f32.mrb[0].mxu0
  %v1071 = vadd.f32 %v671, %v1070
  %v1072 = vpop.f32.mrb[0].mxu0
  %1073 = vdwg.mxu0
  %v1075 = vsel %vm92, %v79, 0
  %v1078 = vsel %vm92, %v80, 0
  %v1081 = vsel %vm92, %v81, 0
  %v1084 = vsel %vm92, %v82, 0
  %v1087 = vsel %vm285, %v88, 0
  %1089 = vmatprep.subr.mxu0 0.0
  %1090 = vmatpush1.msra.mxu0 %v87
  %1091 = vmatprep.subr.mxu0 0.0
  %1092 = vmatpush1.msra.mxu0 %v1087
  %1093 = vmatprep.subr.mxu0 0.0
  %1094 = vmatpush1.msra.mxu0 0.0
  %1095 = vmatprep.subr.mxu0 0.0
  %1096 = vmatpush1.msra.mxu0 0.0
  %1097 = vmatprep.subr.mxu0 0.0
  %1098 = vmatpush1.msra.mxu0 0.0
  %1099 = vmatprep.subr.mxu0 0.0
  %1100 = vmatpush1.msra.mxu0 0.0
  %1101 = vmatprep.subr.mxu0 0.0
  %1102 = vmatpush1.msra.mxu0 0.0
  %1103 = vmatprep.subr.mxu0 0.0
  %1104 = vmatpush1.msra.mxu0 0.0
  %1105 = vmatprep.subr.mxu0 0.0
  %1106 = vmatpush1.msra.mxu0 0.0
  %1107 = vmatprep.subr.mxu0 0.0
  %1108 = vmatpush1.msra.mxu0 0.0
  %1109 = vmatprep.subr.mxu0 0.0
  %1110 = vmatpush1.msra.mxu0 0.0
  %1111 = vmatprep.subr.mxu0 0.0
  %1112 = vmatpush1.msra.mxu0 0.0
  %1113 = vmatprep.subr.mxu0 0.0
  %1114 = vmatpush1.msra.mxu0 0.0
  %1115 = vmatprep.subr.mxu0 0.0
  %1116 = vmatpush1.msra.mxu0 0.0
  %1117 = vmatprep.subr.mxu0 0.0
  %1118 = vmatpush1.msra.mxu0 0.0
  %1119 = vmatprep.subr.mxu0 0.0
  %1120 = vmatpush1.msra.mxu0 0.0
  %1121 = vmatprep.subr.mxu0 0.0
  %1122 = vmatpush1.msra.mxu0 0.0
  %1123 = vmatprep.subr.mxu0 0.0
  %1124 = vmatpush1.msra.mxu0 0.0
  %1125 = vmatprep.subr.mxu0 0.0
  %1126 = vmatpush1.msra.mxu0 0.0
  %1127 = vmatprep.subr.mxu0 0.0
  %1128 = vmatpush1.msra.mxu0 0.0
  %1129 = vmatprep.subr.mxu0 0.0
  %1130 = vmatpush1.msra.mxu0 0.0
  %1131 = vmatprep.subr.mxu0 0.0
  %1132 = vmatpush1.msra.mxu0 0.0
  %1133 = vmatprep.subr.mxu0 0.0
  %1134 = vmatpush1.msra.mxu0 0.0
  %1135 = vmatprep.subr.mxu0 0.0
  %1136 = vmatpush1.msra.mxu0 0.0
  %1137 = vmatprep.subr.mxu0 0.0
  %1138 = vmatpush1.msra.mxu0 0.0
  %1139 = vmatprep.subr.mxu0 0.0
  %1140 = vmatpush1.msra.mxu0 0.0
  %1141 = vmatprep.subr.mxu0 0.0
  %1142 = vmatpush1.msra.mxu0 0.0
  %1143 = vmatprep.subr.mxu0 0.0
  %1144 = vmatpush1.msra.mxu0 0.0
  %1145 = vmatprep.subr.mxu0 0.0
  %1146 = vmatpush1.msra.mxu0 0.0
  %1147 = vmatprep.subr.mxu0 0.0
  %1148 = vmatpush1.msra.mxu0 0.0
  %1149 = vmatprep.subr.mxu0 0.0
  %1150 = vmatpush1.msra.mxu0 0.0
  %1151 = vmatprep.subr.mxu0 0.0
  %1152 = vmatpush1.msra.mxu0 0.0
  %1153 = vmatprep.mubr.f32.mxu0 0.0
  %1154 = vmatmul.mubr.f32.gmra.mrb[0].mxu0 %v106
  %v1155 = vpop.f32.mrb[0].mxu0
  %v1156 = vadd.f32 0.0, %v1155
  %v1157 = vpop.f32.mrb[0].mxu0
  %1158 = vmatprep.mubr.f32.mxu0 0.0
  %1159 = vmatmul.mubr.f32.gmra.mrb[0].mxu0 %v109
  %v1160 = vpop.f32.mrb[0].mxu0
  %v1161 = vadd.f32 0.0, %v1160
  %v1162 = vpop.f32.mrb[0].mxu0
  %1163 = vmatprep.mubr.f32.mxu0 0.0
  %1164 = vmatmul.mubr.f32.gmra.mrb[0].mxu0 %v112
  %v1165 = vpop.f32.mrb[0].mxu0
  %v1166 = vadd.f32 0.0, %v1165
  %v1167 = vpop.f32.mrb[0].mxu0
  %1168 = vmatprep.mubr.f32.mxu0 0.0
  %1169 = vmatmul.mubr.f32.gmra.mrb[0].mxu0 %v115
  %v1170 = vpop.f32.mrb[0].mxu0
  %v1171 = vadd.f32 0.0, %v1170
  %v1172 = vpop.f32.mrb[0].mxu0
  %1173 = vmatprep.mubr.f32.mxu0 0.0
  %1174 = vmatmul.mubr.f32.gmra.mrb[0].mxu0 %v118
  %v1175 = vpop.f32.mrb[0].mxu0
  %v1176 = vadd.f32 0.0, %v1175
  %v1177 = vpop.f32.mrb[0].mxu0
  %1178 = vmatprep.mubr.f32.mxu0 0.0
  %1179 = vmatmul.mubr.f32.gmra.mrb[0].mxu0 %v121
  %v1180 = vpop.f32.mrb[0].mxu0
  %v1181 = vadd.f32 0.0, %v1180
  %v1182 = vpop.f32.mrb[0].mxu0
  %1183 = vmatprep.mubr.f32.mxu0 0.0
  %1184 = vmatmul.mubr.f32.gmra.mrb[0].mxu0 %v124
  %v1185 = vpop.f32.mrb[0].mxu0
  %v1186 = vadd.f32 0.0, %v1185
  %v1187 = vpop.f32.mrb[0].mxu0
  %1188 = vmatprep.mubr.f32.mxu0 0.0
  %1189 = vmatmul.mubr.f32.gmra.mrb[0].mxu0 %v127
  %v1190 = vpop.f32.mrb[0].mxu0
  %v1191 = vadd.f32 0.0, %v1190
  %v1192 = vpop.f32.mrb[0].mxu0
  %1193 = vmatprep.mubr.f32.mxu0 0.0
  %1194 = vmatmul.mubr.f32.gmra.mrb[0].mxu0 %v130
  %v1195 = vpop.f32.mrb[0].mxu0
  %v1196 = vadd.f32 0.0, %v1195
  %v1197 = vpop.f32.mrb[0].mxu0
  %1198 = vmatprep.mubr.f32.mxu0 0.0
  %1199 = vmatmul.mubr.f32.gmra.mrb[0].mxu0 %v133
  %v1200 = vpop.f32.mrb[0].mxu0
  %v1201 = vadd.f32 0.0, %v1200
  %v1202 = vpop.f32.mrb[0].mxu0
  %1203 = vmatprep.mubr.f32.mxu0 0.0
  %1204 = vmatmul.mubr.f32.gmra.mrb[0].mxu0 %v136
  %v1205 = vpop.f32.mrb[0].mxu0
  %v1206 = vadd.f32 0.0, %v1205
  %v1207 = vpop.f32.mrb[0].mxu0
  %1208 = vmatprep.mubr.f32.mxu0 0.0
  %1209 = vmatmul.mubr.f32.gmra.mrb[0].mxu0 %v139
  %v1210 = vpop.f32.mrb[0].mxu0
  %v1211 = vadd.f32 0.0, %v1210
  %v1212 = vpop.f32.mrb[0].mxu0
  %1213 = vmatprep.mubr.f32.mxu0 0.0
  %1214 = vmatmul.mubr.f32.gmra.mrb[0].mxu0 %v142
  %v1215 = vpop.f32.mrb[0].mxu0
  %v1216 = vadd.f32 0.0, %v1215
  %v1217 = vpop.f32.mrb[0].mxu0
  %1218 = vmatprep.mubr.f32.mxu0 0.0
  %1219 = vmatmul.mubr.f32.gmra.mrb[0].mxu0 %v145
  %v1220 = vpop.f32.mrb[0].mxu0
  %v1221 = vadd.f32 0.0, %v1220
  %v1222 = vpop.f32.mrb[0].mxu0
  %1223 = vmatprep.mubr.f32.mxu0 0.0
  %1224 = vmatmul.mubr.f32.gmra.mrb[0].mxu0 %v148
  %v1225 = vpop.f32.mrb[0].mxu0
  %v1226 = vadd.f32 0.0, %v1225
  %v1227 = vpop.f32.mrb[0].mxu0
  %1228 = vmatprep.mubr.f32.mxu0 0.0
  %1229 = vmatmul.mubr.f32.gmra.mrb[0].mxu0 %v151
  %v1230 = vpop.f32.mrb[0].mxu0
  %v1231 = vadd.f32 0.0, %v1230
  %v1232 = vpop.f32.mrb[0].mxu0
  %1233 = vmatprep.mubr.f32.mxu0 0.0
  %1234 = vmatmul.mubr.f32.gmra.mrb[0].mxu0 %v154
  %v1235 = vpop.f32.mrb[0].mxu0
  %v1236 = vadd.f32 0.0, %v1235
  %v1237 = vpop.f32.mrb[0].mxu0
  %1238 = vmatprep.mubr.f32.mxu0 0.0
  %1239 = vmatmul.mubr.f32.gmra.mrb[0].mxu0 %v157
  %v1240 = vpop.f32.mrb[0].mxu0
  %v1241 = vadd.f32 0.0, %v1240
  %v1242 = vpop.f32.mrb[0].mxu0
  %1243 = vmatprep.mubr.f32.mxu0 0.0
  %1244 = vmatmul.mubr.f32.gmra.mrb[0].mxu0 %v160
  %v1245 = vpop.f32.mrb[0].mxu0
  %v1246 = vadd.f32 0.0, %v1245
  %v1247 = vpop.f32.mrb[0].mxu0
  %1248 = vmatprep.mubr.f32.mxu0 0.0
  %1249 = vmatmul.mubr.f32.gmra.mrb[0].mxu0 %v163
  %v1250 = vpop.f32.mrb[0].mxu0
  %v1251 = vadd.f32 0.0, %v1250
  %v1252 = vpop.f32.mrb[0].mxu0
  %1253 = vmatprep.mubr.f32.mxu0 0.0
  %1254 = vmatmul.mubr.f32.gmra.mrb[0].mxu0 %v166
  %v1255 = vpop.f32.mrb[0].mxu0
  %v1256 = vadd.f32 0.0, %v1255
  %v1257 = vpop.f32.mrb[0].mxu0
  %1258 = vmatprep.mubr.f32.mxu0 0.0
  %1259 = vmatmul.mubr.f32.gmra.mrb[0].mxu0 %v169
  %v1260 = vpop.f32.mrb[0].mxu0
  %v1261 = vadd.f32 0.0, %v1260
  %v1262 = vpop.f32.mrb[0].mxu0
  %1263 = vmatprep.mubr.f32.mxu0 0.0
  %1264 = vmatmul.mubr.f32.gmra.mrb[0].mxu0 %v172
  %v1265 = vpop.f32.mrb[0].mxu0
  %v1266 = vadd.f32 0.0, %v1265
  %v1267 = vpop.f32.mrb[0].mxu0
  %1268 = vmatprep.mubr.f32.mxu0 0.0
  %1269 = vmatmul.mubr.f32.gmra.mrb[0].mxu0 %v175
  %v1270 = vpop.f32.mrb[0].mxu0
  %v1271 = vadd.f32 0.0, %v1270
  %v1272 = vpop.f32.mrb[0].mxu0
  %1273 = vmatprep.mubr.f32.mxu0 0.0
  %1274 = vmatmul.mubr.f32.gmra.mrb[0].mxu0 %v178
  %v1275 = vpop.f32.mrb[0].mxu0
  %v1276 = vadd.f32 0.0, %v1275
  %v1277 = vpop.f32.mrb[0].mxu0
  %1278 = vmatprep.mubr.f32.mxu0 0.0
  %1279 = vmatmul.mubr.f32.gmra.mrb[0].mxu0 %v181
  %v1280 = vpop.f32.mrb[0].mxu0
  %v1281 = vadd.f32 0.0, %v1280
  %v1282 = vpop.f32.mrb[0].mxu0
  %1283 = vmatprep.mubr.f32.mxu0 0.0
  %1284 = vmatmul.mubr.f32.gmra.mrb[0].mxu0 %v184
  %v1285 = vpop.f32.mrb[0].mxu0
  %v1286 = vadd.f32 0.0, %v1285
  %v1287 = vpop.f32.mrb[0].mxu0
  %1288 = vmatprep.mubr.f32.mxu0 0.0
  %1289 = vmatmul.mubr.f32.gmra.mrb[0].mxu0 %v187
  %v1290 = vpop.f32.mrb[0].mxu0
  %v1291 = vadd.f32 0.0, %v1290
  %v1292 = vpop.f32.mrb[0].mxu0
  %1293 = vmatprep.mubr.f32.mxu0 0.0
  %1294 = vmatmul.mubr.f32.gmra.mrb[0].mxu0 %v190
  %v1295 = vpop.f32.mrb[0].mxu0
  %v1296 = vadd.f32 0.0, %v1295
  %v1297 = vpop.f32.mrb[0].mxu0
  %1298 = vmatprep.mubr.f32.mxu0 0.0
  %1299 = vmatmul.mubr.f32.gmra.mrb[0].mxu0 %v193
  %v1300 = vpop.f32.mrb[0].mxu0
  %v1301 = vadd.f32 0.0, %v1300
  %v1302 = vpop.f32.mrb[0].mxu0
  %1303 = vmatprep.mubr.f32.mxu0 0.0
  %1304 = vmatmul.mubr.f32.gmra.mrb[0].mxu0 %v196
  %v1305 = vpop.f32.mrb[0].mxu0
  %v1306 = vadd.f32 0.0, %v1305
  %v1307 = vpop.f32.mrb[0].mxu0
  %1308 = vmatprep.mubr.f32.mxu0 0.0
  %1309 = vmatmul.mubr.f32.gmra.mrb[0].mxu0 %v199
  %v1310 = vpop.f32.mrb[0].mxu0
  %v1311 = vadd.f32 0.0, %v1310
  %v1312 = vpop.f32.mrb[0].mxu0
  %1313 = vmatprep.mubr.f32.mxu0 0.0
  %1314 = vmatmul.mubr.f32.gmra.mrb[0].mxu0 %v202
  %v1315 = vpop.f32.mrb[0].mxu0
  %v1316 = vadd.f32 0.0, %v1315
  %v1317 = vpop.f32.mrb[0].mxu0
  %1318 = vmatprep.mubr.f32.mxu0 0.0
  %1319 = vmatmul.mubr.f32.gmra.mrb[0].mxu0 %v205
  %v1320 = vpop.f32.mrb[0].mxu0
  %v1321 = vadd.f32 0.0, %v1320
  %v1322 = vpop.f32.mrb[0].mxu0
  %1323 = vmatprep.mubr.f32.mxu0 0.0
  %1324 = vmatmul.mubr.f32.gmra.mrb[0].mxu0 %v208
  %v1325 = vpop.f32.mrb[0].mxu0
  %v1326 = vadd.f32 0.0, %v1325
  %v1327 = vpop.f32.mrb[0].mxu0
  %1328 = vmatprep.mubr.f32.mxu0 0.0
  %1329 = vmatmul.mubr.f32.gmra.mrb[0].mxu0 %v211
  %v1330 = vpop.f32.mrb[0].mxu0
  %v1331 = vadd.f32 0.0, %v1330
  %v1332 = vpop.f32.mrb[0].mxu0
  %1333 = vmatprep.mubr.f32.mxu0 0.0
  %1334 = vmatmul.mubr.f32.gmra.mrb[0].mxu0 %v214
  %v1335 = vpop.f32.mrb[0].mxu0
  %v1336 = vadd.f32 0.0, %v1335
  %v1337 = vpop.f32.mrb[0].mxu0
  %1338 = vmatprep.mubr.f32.mxu0 0.0
  %1339 = vmatmul.mubr.f32.gmra.mrb[0].mxu0 %v217
  %v1340 = vpop.f32.mrb[0].mxu0
  %v1341 = vadd.f32 0.0, %v1340
  %v1342 = vpop.f32.mrb[0].mxu0
  %1343 = vmatprep.mubr.f32.mxu0 0.0
  %1344 = vmatmul.mubr.f32.gmra.mrb[0].mxu0 %v220
  %v1345 = vpop.f32.mrb[0].mxu0
  %v1346 = vadd.f32 0.0, %v1345
  %v1347 = vpop.f32.mrb[0].mxu0
  %1348 = vmatprep.mubr.f32.mxu0 0.0
  %1349 = vmatmul.mubr.f32.gmra.mrb[0].mxu0 %v223
  %v1350 = vpop.f32.mrb[0].mxu0
  %v1351 = vadd.f32 0.0, %v1350
  %v1352 = vpop.f32.mrb[0].mxu0
  %1353 = vmatprep.mubr.f32.mxu0 0.0
  %1354 = vmatmul.mubr.f32.gmra.mrb[0].mxu0 %v226
  %v1355 = vpop.f32.mrb[0].mxu0
  %v1356 = vadd.f32 0.0, %v1355
  %v1357 = vpop.f32.mrb[0].mxu0
  %1358 = vmatprep.mubr.f32.mxu0 0.0
  %1359 = vmatmul.mubr.f32.gmra.mrb[0].mxu0 %v229
  %v1360 = vpop.f32.mrb[0].mxu0
  %v1361 = vadd.f32 0.0, %v1360
  %v1362 = vpop.f32.mrb[0].mxu0
  %1363 = vmatprep.mubr.f32.mxu0 0.0
  %1364 = vmatmul.mubr.f32.gmra.mrb[0].mxu0 %v232
  %v1365 = vpop.f32.mrb[0].mxu0
  %v1366 = vadd.f32 0.0, %v1365
  %v1367 = vpop.f32.mrb[0].mxu0
  %1368 = vmatprep.mubr.f32.mxu0 0.0
  %1369 = vmatmul.mubr.f32.gmra.mrb[0].mxu0 %v235
  %v1370 = vpop.f32.mrb[0].mxu0
  %v1371 = vadd.f32 0.0, %v1370
  %v1372 = vpop.f32.mrb[0].mxu0
  %1373 = vmatprep.mubr.f32.mxu0 0.0
  %1374 = vmatmul.mubr.f32.gmra.mrb[0].mxu0 %v238
  %v1375 = vpop.f32.mrb[0].mxu0
  %v1376 = vadd.f32 0.0, %v1375
  %v1377 = vpop.f32.mrb[0].mxu0
  %1378 = vmatprep.mubr.f32.mxu0 0.0
  %1379 = vmatmul.mubr.f32.gmra.mrb[0].mxu0 %v241
  %v1380 = vpop.f32.mrb[0].mxu0
  %v1381 = vadd.f32 0.0, %v1380
  %v1382 = vpop.f32.mrb[0].mxu0
  %1383 = vmatprep.mubr.f32.mxu0 0.0
  %1384 = vmatmul.mubr.f32.gmra.mrb[0].mxu0 %v244
  %v1385 = vpop.f32.mrb[0].mxu0
  %v1386 = vadd.f32 0.0, %v1385
  %v1387 = vpop.f32.mrb[0].mxu0
  %1388 = vmatprep.mubr.f32.mxu0 0.0
  %1389 = vmatmul.mubr.f32.gmra.mrb[0].mxu0 %v247
  %v1390 = vpop.f32.mrb[0].mxu0
  %v1391 = vadd.f32 0.0, %v1390
  %v1392 = vpop.f32.mrb[0].mxu0
  %1393 = vmatprep.mubr.f32.mxu0 0.0
  %1394 = vmatmul.mubr.f32.gmra.mrb[0].mxu0 %v250
  %v1395 = vpop.f32.mrb[0].mxu0
  %v1396 = vadd.f32 0.0, %v1395
  %v1397 = vpop.f32.mrb[0].mxu0
  %1398 = vmatprep.mubr.f32.mxu0 0.0
  %1399 = vmatmul.mubr.f32.gmra.mrb[0].mxu0 %v253
  %v1400 = vpop.f32.mrb[0].mxu0
  %v1401 = vadd.f32 0.0, %v1400
  %v1402 = vpop.f32.mrb[0].mxu0
  %1403 = vmatprep.mubr.f32.mxu0 0.0
  %1404 = vmatmul.mubr.f32.gmra.mrb[0].mxu0 %v256
  %v1405 = vpop.f32.mrb[0].mxu0
  %v1406 = vadd.f32 0.0, %v1405
  %v1407 = vpop.f32.mrb[0].mxu0
  %1408 = vmatprep.mubr.f32.mxu0 0.0
  %1409 = vmatmul.mubr.f32.gmra.mrb[0].mxu0 %v259
  %v1410 = vpop.f32.mrb[0].mxu0
  %v1411 = vadd.f32 0.0, %v1410
  %v1412 = vpop.f32.mrb[0].mxu0
  %1413 = vmatprep.mubr.f32.mxu0 0.0
  %1414 = vmatmul.mubr.f32.gmra.mrb[0].mxu0 %v262
  %v1415 = vpop.f32.mrb[0].mxu0
  %v1416 = vadd.f32 0.0, %v1415
  %v1417 = vpop.f32.mrb[0].mxu0
  %1418 = vmatprep.mubr.f32.mxu0 0.0
  %1419 = vmatmul.mubr.f32.gmra.mrb[0].mxu0 %v265
  %v1420 = vpop.f32.mrb[0].mxu0
  %v1421 = vadd.f32 0.0, %v1420
  %v1422 = vpop.f32.mrb[0].mxu0
  %1423 = vmatprep.mubr.f32.mxu0 0.0
  %1424 = vmatmul.mubr.f32.gmra.mrb[0].mxu0 %v268
  %v1425 = vpop.f32.mrb[0].mxu0
  %v1426 = vadd.f32 0.0, %v1425
  %v1427 = vpop.f32.mrb[0].mxu0
  %1428 = vmatprep.mubr.f32.mxu0 0.0
  %1429 = vmatmul.mubr.f32.gmra.mrb[0].mxu0 %v271
  %v1430 = vpop.f32.mrb[0].mxu0
  %v1431 = vadd.f32 0.0, %v1430
  %v1432 = vpop.f32.mrb[0].mxu0
  %1433 = vmatprep.mubr.f32.mxu0 0.0
  %1434 = vmatmul.mubr.f32.gmra.mrb[0].mxu0 %v274
  %v1435 = vpop.f32.mrb[0].mxu0
  %v1436 = vadd.f32 0.0, %v1435
  %v1437 = vpop.f32.mrb[0].mxu0
  %1438 = vmatprep.mubr.f32.mxu0 0.0
  %1439 = vmatmul.mubr.f32.gmra.mrb[0].mxu0 %v277
  %v1440 = vpop.f32.mrb[0].mxu0
  %v1441 = vadd.f32 0.0, %v1440
  %v1442 = vpop.f32.mrb[0].mxu0
  %1443 = vmatprep.mubr.f32.mxu0 0.0
  %1444 = vmatmul.mubr.f32.gmra.mrb[0].mxu0 %v280
  %v1445 = vpop.f32.mrb[0].mxu0
  %v1446 = vadd.f32 0.0, %v1445
  %v1447 = vpop.f32.mrb[0].mxu0
  %1448 = vmatprep.mubr.f32.mxu0 0.0
  %1449 = vmatmul.mubr.f32.gmra.mrb[0].mxu0 %v283
  %v1450 = vpop.f32.mrb[0].mxu0
  %v1451 = vadd.f32 0.0, %v1450
  %v1452 = vpop.f32.mrb[0].mxu0
  %1453 = vmatprep.mubr.f32.mxu0 0.0
  %1454 = vmatmul.mubr.f32.gmra.mrb[0].mxu0 %v1075
  %v1455 = vpop.f32.mrb[0].mxu0
  %v1456 = vadd.f32 0.0, %v1455
  %v1457 = vpop.f32.mrb[0].mxu0
  %1458 = vmatprep.mubr.f32.mxu0 0.0
  %1459 = vmatmul.mubr.f32.gmra.mrb[0].mxu0 %v1078
  %v1460 = vpop.f32.mrb[0].mxu0
  %v1461 = vadd.f32 0.0, %v1460
  %v1462 = vpop.f32.mrb[0].mxu0
  %1463 = vmatprep.mubr.f32.mxu0 0.0
  %1464 = vmatmul.mubr.f32.gmra.mrb[0].mxu0 %v1081
  %v1465 = vpop.f32.mrb[0].mxu0
  %v1466 = vadd.f32 0.0, %v1465
  %v1467 = vpop.f32.mrb[0].mxu0
  %1468 = vmatprep.mubr.f32.mxu0 0.0
  %1469 = vmatmul.mubr.f32.gmra.mrb[0].mxu0 %v1084
  %v1470 = vpop.f32.mrb[0].mxu0
  %v1471 = vadd.f32 0.0, %v1470
  %v1472 = vpop.f32.mrb[0].mxu0
  %1473 = vdwg.mxu0
  %v1474 = vadd.f32 %v756, %v1156
  %v1475 = vadd.f32 %v761, %v1161
  %v1476 = vadd.f32 %v766, %v1166
  %v1477 = vadd.f32 %v771, %v1171
  %v1478 = vadd.f32 %v776, %v1176
  %v1479 = vadd.f32 %v781, %v1181
  %v1480 = vadd.f32 %v786, %v1186
  %v1481 = vadd.f32 %v791, %v1191
  %v1482 = vadd.f32 %v796, %v1196
  %v1483 = vadd.f32 %v801, %v1201
  %v1484 = vadd.f32 %v806, %v1206
  %v1485 = vadd.f32 %v811, %v1211
  %v1486 = vadd.f32 %v816, %v1216
  %v1487 = vadd.f32 %v821, %v1221
  %v1488 = vadd.f32 %v826, %v1226
  %v1489 = vadd.f32 %v831, %v1231
  %v1490 = vadd.f32 %v836, %v1236
  %v1491 = vadd.f32 %v841, %v1241
  %v1492 = vadd.f32 %v846, %v1246
  %v1493 = vadd.f32 %v851, %v1251
  %v1494 = vadd.f32 %v856, %v1256
  %v1495 = vadd.f32 %v861, %v1261
  %v1496 = vadd.f32 %v866, %v1266
  %v1497 = vadd.f32 %v871, %v1271
  %v1498 = vadd.f32 %v876, %v1276
  %v1499 = vadd.f32 %v881, %v1281
  %v1500 = vadd.f32 %v886, %v1286
  %v1501 = vadd.f32 %v891, %v1291
  %v1502 = vadd.f32 %v896, %v1296
  %v1503 = vadd.f32 %v901, %v1301
  %v1504 = vadd.f32 %v906, %v1306
  %v1505 = vadd.f32 %v911, %v1311
  %v1506 = vadd.f32 %v916, %v1316
  %v1507 = vadd.f32 %v921, %v1321
  %v1508 = vadd.f32 %v926, %v1326
  %v1509 = vadd.f32 %v931, %v1331
  %v1510 = vadd.f32 %v936, %v1336
  %v1511 = vadd.f32 %v941, %v1341
  %v1512 = vadd.f32 %v946, %v1346
  %v1513 = vadd.f32 %v951, %v1351
  %v1514 = vadd.f32 %v956, %v1356
  %v1515 = vadd.f32 %v961, %v1361
  %v1516 = vadd.f32 %v966, %v1366
  %v1517 = vadd.f32 %v971, %v1371
  %v1518 = vadd.f32 %v976, %v1376
  %v1519 = vadd.f32 %v981, %v1381
  %v1520 = vadd.f32 %v986, %v1386
  %v1521 = vadd.f32 %v991, %v1391
  %v1522 = vadd.f32 %v996, %v1396
  %v1523 = vadd.f32 %v1001, %v1401
  %v1524 = vadd.f32 %v1006, %v1406
  %v1525 = vadd.f32 %v1011, %v1411
  %v1526 = vadd.f32 %v1016, %v1416
  %v1527 = vadd.f32 %v1021, %v1421
  %v1528 = vadd.f32 %v1026, %v1426
  %v1529 = vadd.f32 %v1031, %v1431
  %v1530 = vadd.f32 %v1036, %v1436
  %v1531 = vadd.f32 %v1041, %v1441
  %v1532 = vadd.f32 %v1046, %v1446
  %v1533 = vadd.f32 %v1051, %v1451
  %v1534 = vadd.f32 %v1056, %v1456
  %v1535 = vadd.f32 %v1061, %v1461
  %v1536 = vadd.f32 %v1066, %v1466
  %v1537 = vadd.f32 %v1071, %v1471
  %v1538 = vmax.f32 %v1474, 0.0
  %v1539 = vmax.f32 %v1475, 0.0
  %v1540 = vmax.f32 %v1476, 0.0
  %v1541 = vmax.f32 %v1477, 0.0
  %v1542 = vmax.f32 %v1478, 0.0
  %v1543 = vmax.f32 %v1479, 0.0
  %v1544 = vmax.f32 %v1480, 0.0
  %v1545 = vmax.f32 %v1481, 0.0
  %v1546 = vmax.f32 %v1482, 0.0
  %v1547 = vmax.f32 %v1483, 0.0
  %v1548 = vmax.f32 %v1484, 0.0
  %v1549 = vmax.f32 %v1485, 0.0
  %v1550 = vmax.f32 %v1486, 0.0
  %v1551 = vmax.f32 %v1487, 0.0
  %v1552 = vmax.f32 %v1488, 0.0
  %v1553 = vmax.f32 %v1489, 0.0
  %v1554 = vmax.f32 %v1490, 0.0
  %v1555 = vmax.f32 %v1491, 0.0
  %v1556 = vmax.f32 %v1492, 0.0
  %v1557 = vmax.f32 %v1493, 0.0
  %v1558 = vmax.f32 %v1494, 0.0
  %v1559 = vmax.f32 %v1495, 0.0
  %v1560 = vmax.f32 %v1496, 0.0
  %v1561 = vmax.f32 %v1497, 0.0
  %v1562 = vmax.f32 %v1498, 0.0
  %v1563 = vmax.f32 %v1499, 0.0
  %v1564 = vmax.f32 %v1500, 0.0
  %v1565 = vmax.f32 %v1501, 0.0
  %v1566 = vmax.f32 %v1502, 0.0
  %v1567 = vmax.f32 %v1503, 0.0
  %v1568 = vmax.f32 %v1504, 0.0
  %v1569 = vmax.f32 %v1505, 0.0
  %v1570 = vmax.f32 %v1506, 0.0
  %v1571 = vmax.f32 %v1507, 0.0
  %v1572 = vmax.f32 %v1508, 0.0
  %v1573 = vmax.f32 %v1509, 0.0
  %v1574 = vmax.f32 %v1510, 0.0
  %v1575 = vmax.f32 %v1511, 0.0
  %v1576 = vmax.f32 %v1512, 0.0
  %v1577 = vmax.f32 %v1513, 0.0
  %v1578 = vmax.f32 %v1514, 0.0
  %v1579 = vmax.f32 %v1515, 0.0
  %v1580 = vmax.f32 %v1516, 0.0
  %v1581 = vmax.f32 %v1517, 0.0
  %v1582 = vmax.f32 %v1518, 0.0
  %v1583 = vmax.f32 %v1519, 0.0
  %v1584 = vmax.f32 %v1520, 0.0
  %v1585 = vmax.f32 %v1521, 0.0
  %v1586 = vmax.f32 %v1522, 0.0
  %v1587 = vmax.f32 %v1523, 0.0
  %v1588 = vmax.f32 %v1524, 0.0
  %v1589 = vmax.f32 %v1525, 0.0
  %v1590 = vmax.f32 %v1526, 0.0
  %v1591 = vmax.f32 %v1527, 0.0
  %v1592 = vmax.f32 %v1528, 0.0
  %v1593 = vmax.f32 %v1529, 0.0
  %v1594 = vmax.f32 %v1530, 0.0
  %v1595 = vmax.f32 %v1531, 0.0
  %v1596 = vmax.f32 %v1532, 0.0
  %v1597 = vmax.f32 %v1533, 0.0
  %v1598 = vmax.f32 %v1534, 0.0
  %v1599 = vmax.f32 %v1535, 0.0
  %v1600 = vmax.f32 %v1536, 0.0
  %v1601 = vmax.f32 %v1537, 0.0
  %v1603 = vsel %vm285, %v90, 0
  %1605 = vmatprep.subr.mxu0 0.0
  %1606 = vmatpush1.msra.mxu0 %v89
  %1607 = vmatprep.subr.mxu0 0.0
  %1608 = vmatpush1.msra.mxu0 %v1603
  %1609 = vmatprep.subr.mxu0 0.0
  %1610 = vmatpush1.msra.mxu0 0.0
  %1611 = vmatprep.subr.mxu0 0.0
  %1612 = vmatpush1.msra.mxu0 0.0
  %1613 = vmatprep.subr.mxu0 0.0
  %1614 = vmatpush1.msra.mxu0 0.0
  %1615 = vmatprep.subr.mxu0 0.0
  %1616 = vmatpush1.msra.mxu0 0.0
  %1617 = vmatprep.subr.mxu0 0.0
  %1618 = vmatpush1.msra.mxu0 0.0
  %1619 = vmatprep.subr.mxu0 0.0
  %1620 = vmatpush1.msra.mxu0 0.0
  %1621 = vmatprep.subr.mxu0 0.0
  %1622 = vmatpush1.msra.mxu0 0.0
  %1623 = vmatprep.subr.mxu0 0.0
  %1624 = vmatpush1.msra.mxu0 0.0
  %1625 = vmatprep.subr.mxu0 0.0
  %1626 = vmatpush1.msra.mxu0 0.0
  %1627 = vmatprep.subr.mxu0 0.0
  %1628 = vmatpush1.msra.mxu0 0.0
  %1629 = vmatprep.subr.mxu0 0.0
  %1630 = vmatpush1.msra.mxu0 0.0
  %1631 = vmatprep.subr.mxu0 0.0
  %1632 = vmatpush1.msra.mxu0 0.0
  %1633 = vmatprep.subr.mxu0 0.0
  %1634 = vmatpush1.msra.mxu0 0.0
  %1635 = vmatprep.subr.mxu0 0.0
  %1636 = vmatpush1.msra.mxu0 0.0
  %1637 = vmatprep.subr.mxu0 0.0
  %1638 = vmatpush1.msra.mxu0 0.0
  %1639 = vmatprep.subr.mxu0 0.0
  %1640 = vmatpush1.msra.mxu0 0.0
  %1641 = vmatprep.subr.mxu0 0.0
  %1642 = vmatpush1.msra.mxu0 0.0
  %1643 = vmatprep.subr.mxu0 0.0
  %1644 = vmatpush1.msra.mxu0 0.0
  %1645 = vmatprep.subr.mxu0 0.0
  %1646 = vmatpush1.msra.mxu0 0.0
  %1647 = vmatprep.subr.mxu0 0.0
  %1648 = vmatpush1.msra.mxu0 0.0
  %1649 = vmatprep.subr.mxu0 0.0
  %1650 = vmatpush1.msra.mxu0 0.0
  %1651 = vmatprep.subr.mxu0 0.0
  %1652 = vmatpush1.msra.mxu0 0.0
  %1653 = vmatprep.subr.mxu0 0.0
  %1654 = vmatpush1.msra.mxu0 0.0
  %1655 = vmatprep.subr.mxu0 0.0
  %1656 = vmatpush1.msra.mxu0 0.0
  %1657 = vmatprep.subr.mxu0 0.0
  %1658 = vmatpush1.msra.mxu0 0.0
  %1659 = vmatprep.subr.mxu0 0.0
  %1660 = vmatpush1.msra.mxu0 0.0
  %1661 = vmatprep.subr.mxu0 0.0
  %1662 = vmatpush1.msra.mxu0 0.0
  %1663 = vmatprep.subr.mxu0 0.0
  %1664 = vmatpush1.msra.mxu0 0.0
  %1665 = vmatprep.subr.mxu0 0.0
  %1666 = vmatpush1.msra.mxu0 0.0
  %1667 = vmatprep.subr.mxu0 0.0
  %1668 = vmatpush1.msra.mxu0 0.0
  %1669 = vmatprep.mubr.f32.mxu0 0.0
  %1670 = vmatmul.mubr.f32.gmra.mrb[0].mxu0 %v94
  %v1671 = vpop.f32.mrb[0].mxu0
  %v1672 = vadd.f32 0.0, %v1671
  %v1673 = vpop.f32.mrb[0].mxu0
  %1674 = vmatprep.mubr.f32.mxu0 0.0
  %1675 = vmatmul.mubr.f32.gmra.mrb[0].mxu0 %v97
  %v1676 = vpop.f32.mrb[0].mxu0
  %v1677 = vadd.f32 0.0, %v1676
  %v1678 = vpop.f32.mrb[0].mxu0
  %1679 = vmatprep.mubr.f32.mxu0 0.0
  %1680 = vmatmul.mubr.f32.gmra.mrb[0].mxu0 %v100
  %v1681 = vpop.f32.mrb[0].mxu0
  %v1682 = vadd.f32 0.0, %v1681
  %v1683 = vpop.f32.mrb[0].mxu0
  %1684 = vmatprep.mubr.f32.mxu0 0.0
  %1685 = vmatmul.mubr.f32.gmra.mrb[0].mxu0 %v103
  %v1686 = vpop.f32.mrb[0].mxu0
  %v1687 = vadd.f32 0.0, %v1686
  %v1688 = vpop.f32.mrb[0].mxu0
  %1689 = vmatprep.mubr.f32.mxu0 0.0
  %1690 = vmatmul.mubr.f32.gmra.mrb[0].mxu0 %v106
  %v1691 = vpop.f32.mrb[0].mxu0
  %v1692 = vadd.f32 0.0, %v1691
  %v1693 = vpop.f32.mrb[0].mxu0
  %1694 = vmatprep.mubr.f32.mxu0 0.0
  %1695 = vmatmul.mubr.f32.gmra.mrb[0].mxu0 %v109
  %v1696 = vpop.f32.mrb[0].mxu0
  %v1697 = vadd.f32 0.0, %v1696
  %v1698 = vpop.f32.mrb[0].mxu0
  %1699 = vmatprep.mubr.f32.mxu0 0.0
  %1700 = vmatmul.mubr.f32.gmra.mrb[0].mxu0 %v112
  %v1701 = vpop.f32.mrb[0].mxu0
  %v1702 = vadd.f32 0.0, %v1701
  %v1703 = vpop.f32.mrb[0].mxu0
  %1704 = vmatprep.mubr.f32.mxu0 0.0
  %1705 = vmatmul.mubr.f32.gmra.mrb[0].mxu0 %v115
  %v1706 = vpop.f32.mrb[0].mxu0
  %v1707 = vadd.f32 0.0, %v1706
  %v1708 = vpop.f32.mrb[0].mxu0
  %1709 = vmatprep.mubr.f32.mxu0 0.0
  %1710 = vmatmul.mubr.f32.gmra.mrb[0].mxu0 %v118
  %v1711 = vpop.f32.mrb[0].mxu0
  %v1712 = vadd.f32 0.0, %v1711
  %v1713 = vpop.f32.mrb[0].mxu0
  %1714 = vmatprep.mubr.f32.mxu0 0.0
  %1715 = vmatmul.mubr.f32.gmra.mrb[0].mxu0 %v121
  %v1716 = vpop.f32.mrb[0].mxu0
  %v1717 = vadd.f32 0.0, %v1716
  %v1718 = vpop.f32.mrb[0].mxu0
  %1719 = vmatprep.mubr.f32.mxu0 0.0
  %1720 = vmatmul.mubr.f32.gmra.mrb[0].mxu0 %v124
  %v1721 = vpop.f32.mrb[0].mxu0
  %v1722 = vadd.f32 0.0, %v1721
  %v1723 = vpop.f32.mrb[0].mxu0
  %1724 = vmatprep.mubr.f32.mxu0 0.0
  %1725 = vmatmul.mubr.f32.gmra.mrb[0].mxu0 %v127
  %v1726 = vpop.f32.mrb[0].mxu0
  %v1727 = vadd.f32 0.0, %v1726
  %v1728 = vpop.f32.mrb[0].mxu0
  %1729 = vmatprep.mubr.f32.mxu0 0.0
  %1730 = vmatmul.mubr.f32.gmra.mrb[0].mxu0 %v130
  %v1731 = vpop.f32.mrb[0].mxu0
  %v1732 = vadd.f32 0.0, %v1731
  %v1733 = vpop.f32.mrb[0].mxu0
  %1734 = vmatprep.mubr.f32.mxu0 0.0
  %1735 = vmatmul.mubr.f32.gmra.mrb[0].mxu0 %v133
  %v1736 = vpop.f32.mrb[0].mxu0
  %v1737 = vadd.f32 0.0, %v1736
  %v1738 = vpop.f32.mrb[0].mxu0
  %1739 = vmatprep.mubr.f32.mxu0 0.0
  %1740 = vmatmul.mubr.f32.gmra.mrb[0].mxu0 %v136
  %v1741 = vpop.f32.mrb[0].mxu0
  %v1742 = vadd.f32 0.0, %v1741
  %v1743 = vpop.f32.mrb[0].mxu0
  %1744 = vmatprep.mubr.f32.mxu0 0.0
  %1745 = vmatmul.mubr.f32.gmra.mrb[0].mxu0 %v139
  %v1746 = vpop.f32.mrb[0].mxu0
  %v1747 = vadd.f32 0.0, %v1746
  %v1748 = vpop.f32.mrb[0].mxu0
  %1749 = vmatprep.mubr.f32.mxu0 0.0
  %1750 = vmatmul.mubr.f32.gmra.mrb[0].mxu0 %v142
  %v1751 = vpop.f32.mrb[0].mxu0
  %v1752 = vadd.f32 0.0, %v1751
  %v1753 = vpop.f32.mrb[0].mxu0
  %1754 = vmatprep.mubr.f32.mxu0 0.0
  %1755 = vmatmul.mubr.f32.gmra.mrb[0].mxu0 %v145
  %v1756 = vpop.f32.mrb[0].mxu0
  %v1757 = vadd.f32 0.0, %v1756
  %v1758 = vpop.f32.mrb[0].mxu0
  %1759 = vmatprep.mubr.f32.mxu0 0.0
  %1760 = vmatmul.mubr.f32.gmra.mrb[0].mxu0 %v148
  %v1761 = vpop.f32.mrb[0].mxu0
  %v1762 = vadd.f32 0.0, %v1761
  %v1763 = vpop.f32.mrb[0].mxu0
  %1764 = vmatprep.mubr.f32.mxu0 0.0
  %1765 = vmatmul.mubr.f32.gmra.mrb[0].mxu0 %v151
  %v1766 = vpop.f32.mrb[0].mxu0
  %v1767 = vadd.f32 0.0, %v1766
  %v1768 = vpop.f32.mrb[0].mxu0
  %1769 = vmatprep.mubr.f32.mxu0 0.0
  %1770 = vmatmul.mubr.f32.gmra.mrb[0].mxu0 %v154
  %v1771 = vpop.f32.mrb[0].mxu0
  %v1772 = vadd.f32 0.0, %v1771
  %v1773 = vpop.f32.mrb[0].mxu0
  %1774 = vmatprep.mubr.f32.mxu0 0.0
  %1775 = vmatmul.mubr.f32.gmra.mrb[0].mxu0 %v157
  %v1776 = vpop.f32.mrb[0].mxu0
  %v1777 = vadd.f32 0.0, %v1776
  %v1778 = vpop.f32.mrb[0].mxu0
  %1779 = vmatprep.mubr.f32.mxu0 0.0
  %1780 = vmatmul.mubr.f32.gmra.mrb[0].mxu0 %v160
  %v1781 = vpop.f32.mrb[0].mxu0
  %v1782 = vadd.f32 0.0, %v1781
  %v1783 = vpop.f32.mrb[0].mxu0
  %1784 = vmatprep.mubr.f32.mxu0 0.0
  %1785 = vmatmul.mubr.f32.gmra.mrb[0].mxu0 %v163
  %v1786 = vpop.f32.mrb[0].mxu0
  %v1787 = vadd.f32 0.0, %v1786
  %v1788 = vpop.f32.mrb[0].mxu0
  %1789 = vmatprep.mubr.f32.mxu0 0.0
  %1790 = vmatmul.mubr.f32.gmra.mrb[0].mxu0 %v166
  %v1791 = vpop.f32.mrb[0].mxu0
  %v1792 = vadd.f32 0.0, %v1791
  %v1793 = vpop.f32.mrb[0].mxu0
  %1794 = vmatprep.mubr.f32.mxu0 0.0
  %1795 = vmatmul.mubr.f32.gmra.mrb[0].mxu0 %v169
  %v1796 = vpop.f32.mrb[0].mxu0
  %v1797 = vadd.f32 0.0, %v1796
  %v1798 = vpop.f32.mrb[0].mxu0
  %1799 = vmatprep.mubr.f32.mxu0 0.0
  %1800 = vmatmul.mubr.f32.gmra.mrb[0].mxu0 %v172
  %v1801 = vpop.f32.mrb[0].mxu0
  %v1802 = vadd.f32 0.0, %v1801
  %v1803 = vpop.f32.mrb[0].mxu0
  %1804 = vmatprep.mubr.f32.mxu0 0.0
  %1805 = vmatmul.mubr.f32.gmra.mrb[0].mxu0 %v175
  %v1806 = vpop.f32.mrb[0].mxu0
  %v1807 = vadd.f32 0.0, %v1806
  %v1808 = vpop.f32.mrb[0].mxu0
  %1809 = vmatprep.mubr.f32.mxu0 0.0
  %1810 = vmatmul.mubr.f32.gmra.mrb[0].mxu0 %v178
  %v1811 = vpop.f32.mrb[0].mxu0
  %v1812 = vadd.f32 0.0, %v1811
  %v1813 = vpop.f32.mrb[0].mxu0
  %1814 = vmatprep.mubr.f32.mxu0 0.0
  %1815 = vmatmul.mubr.f32.gmra.mrb[0].mxu0 %v181
  %v1816 = vpop.f32.mrb[0].mxu0
  %v1817 = vadd.f32 0.0, %v1816
  %v1818 = vpop.f32.mrb[0].mxu0
  %1819 = vmatprep.mubr.f32.mxu0 0.0
  %1820 = vmatmul.mubr.f32.gmra.mrb[0].mxu0 %v184
  %v1821 = vpop.f32.mrb[0].mxu0
  %v1822 = vadd.f32 0.0, %v1821
  %v1823 = vpop.f32.mrb[0].mxu0
  %1824 = vmatprep.mubr.f32.mxu0 0.0
  %1825 = vmatmul.mubr.f32.gmra.mrb[0].mxu0 %v187
  %v1826 = vpop.f32.mrb[0].mxu0
  %v1827 = vadd.f32 0.0, %v1826
  %v1828 = vpop.f32.mrb[0].mxu0
  %1829 = vmatprep.mubr.f32.mxu0 0.0
  %1830 = vmatmul.mubr.f32.gmra.mrb[0].mxu0 %v190
  %v1831 = vpop.f32.mrb[0].mxu0
  %v1832 = vadd.f32 0.0, %v1831
  %v1833 = vpop.f32.mrb[0].mxu0
  %1834 = vmatprep.mubr.f32.mxu0 0.0
  %1835 = vmatmul.mubr.f32.gmra.mrb[0].mxu0 %v193
  %v1836 = vpop.f32.mrb[0].mxu0
  %v1837 = vadd.f32 0.0, %v1836
  %v1838 = vpop.f32.mrb[0].mxu0
  %1839 = vmatprep.mubr.f32.mxu0 0.0
  %1840 = vmatmul.mubr.f32.gmra.mrb[0].mxu0 %v196
  %v1841 = vpop.f32.mrb[0].mxu0
  %v1842 = vadd.f32 0.0, %v1841
  %v1843 = vpop.f32.mrb[0].mxu0
  %1844 = vmatprep.mubr.f32.mxu0 0.0
  %1845 = vmatmul.mubr.f32.gmra.mrb[0].mxu0 %v199
  %v1846 = vpop.f32.mrb[0].mxu0
  %v1847 = vadd.f32 0.0, %v1846
  %v1848 = vpop.f32.mrb[0].mxu0
  %1849 = vmatprep.mubr.f32.mxu0 0.0
  %1850 = vmatmul.mubr.f32.gmra.mrb[0].mxu0 %v202
  %v1851 = vpop.f32.mrb[0].mxu0
  %v1852 = vadd.f32 0.0, %v1851
  %v1853 = vpop.f32.mrb[0].mxu0
  %1854 = vmatprep.mubr.f32.mxu0 0.0
  %1855 = vmatmul.mubr.f32.gmra.mrb[0].mxu0 %v205
  %v1856 = vpop.f32.mrb[0].mxu0
  %v1857 = vadd.f32 0.0, %v1856
  %v1858 = vpop.f32.mrb[0].mxu0
  %1859 = vmatprep.mubr.f32.mxu0 0.0
  %1860 = vmatmul.mubr.f32.gmra.mrb[0].mxu0 %v208
  %v1861 = vpop.f32.mrb[0].mxu0
  %v1862 = vadd.f32 0.0, %v1861
  %v1863 = vpop.f32.mrb[0].mxu0
  %1864 = vmatprep.mubr.f32.mxu0 0.0
  %1865 = vmatmul.mubr.f32.gmra.mrb[0].mxu0 %v211
  %v1866 = vpop.f32.mrb[0].mxu0
  %v1867 = vadd.f32 0.0, %v1866
  %v1868 = vpop.f32.mrb[0].mxu0
  %1869 = vmatprep.mubr.f32.mxu0 0.0
  %1870 = vmatmul.mubr.f32.gmra.mrb[0].mxu0 %v214
  %v1871 = vpop.f32.mrb[0].mxu0
  %v1872 = vadd.f32 0.0, %v1871
  %v1873 = vpop.f32.mrb[0].mxu0
  %1874 = vmatprep.mubr.f32.mxu0 0.0
  %1875 = vmatmul.mubr.f32.gmra.mrb[0].mxu0 %v217
  %v1876 = vpop.f32.mrb[0].mxu0
  %v1877 = vadd.f32 0.0, %v1876
  %v1878 = vpop.f32.mrb[0].mxu0
  %1879 = vmatprep.mubr.f32.mxu0 0.0
  %1880 = vmatmul.mubr.f32.gmra.mrb[0].mxu0 %v220
  %v1881 = vpop.f32.mrb[0].mxu0
  %v1882 = vadd.f32 0.0, %v1881
  %v1883 = vpop.f32.mrb[0].mxu0
  %1884 = vmatprep.mubr.f32.mxu0 0.0
  %1885 = vmatmul.mubr.f32.gmra.mrb[0].mxu0 %v223
  %v1886 = vpop.f32.mrb[0].mxu0
  %v1887 = vadd.f32 0.0, %v1886
  %v1888 = vpop.f32.mrb[0].mxu0
  %1889 = vmatprep.mubr.f32.mxu0 0.0
  %1890 = vmatmul.mubr.f32.gmra.mrb[0].mxu0 %v226
  %v1891 = vpop.f32.mrb[0].mxu0
  %v1892 = vadd.f32 0.0, %v1891
  %v1893 = vpop.f32.mrb[0].mxu0
  %1894 = vmatprep.mubr.f32.mxu0 0.0
  %1895 = vmatmul.mubr.f32.gmra.mrb[0].mxu0 %v229
  %v1896 = vpop.f32.mrb[0].mxu0
  %v1897 = vadd.f32 0.0, %v1896
  %v1898 = vpop.f32.mrb[0].mxu0
  %1899 = vmatprep.mubr.f32.mxu0 0.0
  %1900 = vmatmul.mubr.f32.gmra.mrb[0].mxu0 %v232
  %v1901 = vpop.f32.mrb[0].mxu0
  %v1902 = vadd.f32 0.0, %v1901
  %v1903 = vpop.f32.mrb[0].mxu0
  %1904 = vmatprep.mubr.f32.mxu0 0.0
  %1905 = vmatmul.mubr.f32.gmra.mrb[0].mxu0 %v235
  %v1906 = vpop.f32.mrb[0].mxu0
  %v1907 = vadd.f32 0.0, %v1906
  %v1908 = vpop.f32.mrb[0].mxu0
  %1909 = vmatprep.mubr.f32.mxu0 0.0
  %1910 = vmatmul.mubr.f32.gmra.mrb[0].mxu0 %v238
  %v1911 = vpop.f32.mrb[0].mxu0
  %v1912 = vadd.f32 0.0, %v1911
  %v1913 = vpop.f32.mrb[0].mxu0
  %1914 = vmatprep.mubr.f32.mxu0 0.0
  %1915 = vmatmul.mubr.f32.gmra.mrb[0].mxu0 %v241
  %v1916 = vpop.f32.mrb[0].mxu0
  %v1917 = vadd.f32 0.0, %v1916
  %v1918 = vpop.f32.mrb[0].mxu0
  %1919 = vmatprep.mubr.f32.mxu0 0.0
  %1920 = vmatmul.mubr.f32.gmra.mrb[0].mxu0 %v244
  %v1921 = vpop.f32.mrb[0].mxu0
  %v1922 = vadd.f32 0.0, %v1921
  %v1923 = vpop.f32.mrb[0].mxu0
  %1924 = vmatprep.mubr.f32.mxu0 0.0
  %1925 = vmatmul.mubr.f32.gmra.mrb[0].mxu0 %v247
  %v1926 = vpop.f32.mrb[0].mxu0
  %v1927 = vadd.f32 0.0, %v1926
  %v1928 = vpop.f32.mrb[0].mxu0
  %1929 = vmatprep.mubr.f32.mxu0 0.0
  %1930 = vmatmul.mubr.f32.gmra.mrb[0].mxu0 %v250
  %v1931 = vpop.f32.mrb[0].mxu0
  %v1932 = vadd.f32 0.0, %v1931
  %v1933 = vpop.f32.mrb[0].mxu0
  %1934 = vmatprep.mubr.f32.mxu0 0.0
  %1935 = vmatmul.mubr.f32.gmra.mrb[0].mxu0 %v253
  %v1936 = vpop.f32.mrb[0].mxu0
  %v1937 = vadd.f32 0.0, %v1936
  %v1938 = vpop.f32.mrb[0].mxu0
  %1939 = vmatprep.mubr.f32.mxu0 0.0
  %1940 = vmatmul.mubr.f32.gmra.mrb[0].mxu0 %v256
  %v1941 = vpop.f32.mrb[0].mxu0
  %v1942 = vadd.f32 0.0, %v1941
  %v1943 = vpop.f32.mrb[0].mxu0
  %1944 = vmatprep.mubr.f32.mxu0 0.0
  %1945 = vmatmul.mubr.f32.gmra.mrb[0].mxu0 %v259
  %v1946 = vpop.f32.mrb[0].mxu0
  %v1947 = vadd.f32 0.0, %v1946
  %v1948 = vpop.f32.mrb[0].mxu0
  %1949 = vmatprep.mubr.f32.mxu0 0.0
  %1950 = vmatmul.mubr.f32.gmra.mrb[0].mxu0 %v262
  %v1951 = vpop.f32.mrb[0].mxu0
  %v1952 = vadd.f32 0.0, %v1951
  %v1953 = vpop.f32.mrb[0].mxu0
  %1954 = vmatprep.mubr.f32.mxu0 0.0
  %1955 = vmatmul.mubr.f32.gmra.mrb[0].mxu0 %v265
  %v1956 = vpop.f32.mrb[0].mxu0
  %v1957 = vadd.f32 0.0, %v1956
  %v1958 = vpop.f32.mrb[0].mxu0
  %1959 = vmatprep.mubr.f32.mxu0 0.0
  %1960 = vmatmul.mubr.f32.gmra.mrb[0].mxu0 %v268
  %v1961 = vpop.f32.mrb[0].mxu0
  %v1962 = vadd.f32 0.0, %v1961
  %v1963 = vpop.f32.mrb[0].mxu0
  %1964 = vmatprep.mubr.f32.mxu0 0.0
  %1965 = vmatmul.mubr.f32.gmra.mrb[0].mxu0 %v271
  %v1966 = vpop.f32.mrb[0].mxu0
  %v1967 = vadd.f32 0.0, %v1966
  %v1968 = vpop.f32.mrb[0].mxu0
  %1969 = vmatprep.mubr.f32.mxu0 0.0
  %1970 = vmatmul.mubr.f32.gmra.mrb[0].mxu0 %v274
  %v1971 = vpop.f32.mrb[0].mxu0
  %v1972 = vadd.f32 0.0, %v1971
  %v1973 = vpop.f32.mrb[0].mxu0
  %1974 = vmatprep.mubr.f32.mxu0 0.0
  %1975 = vmatmul.mubr.f32.gmra.mrb[0].mxu0 %v277
  %v1976 = vpop.f32.mrb[0].mxu0
  %v1977 = vadd.f32 0.0, %v1976
  %v1978 = vpop.f32.mrb[0].mxu0
  %1979 = vmatprep.mubr.f32.mxu0 0.0
  %1980 = vmatmul.mubr.f32.gmra.mrb[0].mxu0 %v280
  %v1981 = vpop.f32.mrb[0].mxu0
  %v1982 = vadd.f32 0.0, %v1981
  %v1983 = vpop.f32.mrb[0].mxu0
  %1984 = vmatprep.mubr.f32.mxu0 0.0
  %1985 = vmatmul.mubr.f32.gmra.mrb[0].mxu0 %v283
  %v1986 = vpop.f32.mrb[0].mxu0
  %v1987 = vadd.f32 0.0, %v1986
  %v1988 = vpop.f32.mrb[0].mxu0
  %1989 = vdwg.mxu0
  %vm1990 = vcmask 64512
  %v1992 = vsel %vm1990, %v1538, 0
  %v1995 = vsel %vm1990, %v1539, 0
  %v1998 = vsel %vm1990, %v1540, 0
  %v2001 = vsel %vm1990, %v1541, 0
  %v2004 = vsel %vm1990, %v1542, 0
  %v2007 = vsel %vm1990, %v1543, 0
  %v2010 = vsel %vm1990, %v1544, 0
  %v2013 = vsel %vm1990, %v1545, 0
  %v2016 = vsel %vm1990, %v1546, 0
  %v2019 = vsel %vm1990, %v1547, 0
  %v2022 = vsel %vm1990, %v1548, 0
  %v2025 = vsel %vm1990, %v1549, 0
  %v2028 = vsel %vm1990, %v1550, 0
  %v2031 = vsel %vm1990, %v1551, 0
  %v2034 = vsel %vm1990, %v1552, 0
  %v2037 = vsel %vm1990, %v1553, 0
  %v2040 = vsel %vm1990, %v1554, 0
  %v2043 = vsel %vm1990, %v1555, 0
  %v2046 = vsel %vm1990, %v1556, 0
  %v2049 = vsel %vm1990, %v1557, 0
  %v2052 = vsel %vm1990, %v1558, 0
  %v2055 = vsel %vm1990, %v1559, 0
  %v2058 = vsel %vm1990, %v1560, 0
  %v2061 = vsel %vm1990, %v1561, 0
  %v2064 = vsel %vm1990, %v1562, 0
  %v2067 = vsel %vm1990, %v1563, 0
  %v2070 = vsel %vm1990, %v1564, 0
  %v2073 = vsel %vm1990, %v1565, 0
  %v2076 = vsel %vm1990, %v1566, 0
  %v2079 = vsel %vm1990, %v1567, 0
  %v2082 = vsel %vm1990, %v1568, 0
  %v2085 = vsel %vm1990, %v1569, 0
  %v2088 = vsel %vm1990, %v1570, 0
  %v2091 = vsel %vm1990, %v1571, 0
  %v2094 = vsel %vm1990, %v1572, 0
  %v2097 = vsel %vm1990, %v1573, 0
  %v2100 = vsel %vm1990, %v1574, 0
  %v2103 = vsel %vm1990, %v1575, 0
  %v2106 = vsel %vm1990, %v1576, 0
  %v2109 = vsel %vm1990, %v1577, 0
  %v2112 = vsel %vm1990, %v1578, 0
  %v2115 = vsel %vm1990, %v1579, 0
  %v2118 = vsel %vm1990, %v1580, 0
  %v2121 = vsel %vm1990, %v1581, 0
  %v2124 = vsel %vm1990, %v1582, 0
  %v2127 = vsel %vm1990, %v1583, 0
  %v2130 = vsel %vm1990, %v1584, 0
  %v2133 = vsel %vm1990, %v1585, 0
  %v2136 = vsel %vm1990, %v1586, 0
  %v2139 = vsel %vm1990, %v1587, 0
  %v2142 = vsel %vm1990, %v1588, 0
  %v2145 = vsel %vm1990, %v1589, 0
  %v2148 = vsel %vm1990, %v1590, 0
  %v2151 = vsel %vm1990, %v1591, 0
  %v2154 = vsel %vm1990, %v1592, 0
  %v2157 = vsel %vm1990, %v1593, 0
  %v2160 = vsel %vm1990, %v1594, 0
  %v2163 = vsel %vm1990, %v1595, 0
  %v2166 = vsel %vm1990, %v1596, 0
  %v2169 = vsel %vm1990, %v1597, 0
  %v2172 = vsel %vm1990, %v1598, 0
  %v2175 = vsel %vm1990, %v1599, 0
  %v2178 = vsel %vm1990, %v1600, 0
  %v2181 = vsel %vm1990, %v1601, 0
  %2183 = vmatprep.subr.mxu0 0.0
  %2184 = vmatpush1.msra.mxu0 %v91
  %2185 = vmatprep.subr.mxu0 0.0
  %2186 = vmatpush1.msra.mxu0 0.0
  %2187 = vmatprep.subr.mxu0 0.0
  %2188 = vmatpush1.msra.mxu0 0.0
  %2189 = vmatprep.subr.mxu0 0.0
  %2190 = vmatpush1.msra.mxu0 0.0
  %2191 = vmatprep.subr.mxu0 0.0
  %2192 = vmatpush1.msra.mxu0 0.0
  %2193 = vmatprep.subr.mxu0 0.0
  %2194 = vmatpush1.msra.mxu0 0.0
  %2195 = vmatprep.subr.mxu0 0.0
  %2196 = vmatpush1.msra.mxu0 0.0
  %2197 = vmatprep.subr.mxu0 0.0
  %2198 = vmatpush1.msra.mxu0 0.0
  %2199 = vmatprep.subr.mxu0 0.0
  %2200 = vmatpush1.msra.mxu0 0.0
  %2201 = vmatprep.subr.mxu0 0.0
  %2202 = vmatpush1.msra.mxu0 0.0
  %2203 = vmatprep.subr.mxu0 0.0
  %2204 = vmatpush1.msra.mxu0 0.0
  %2205 = vmatprep.subr.mxu0 0.0
  %2206 = vmatpush1.msra.mxu0 0.0
  %2207 = vmatprep.subr.mxu0 0.0
  %2208 = vmatpush1.msra.mxu0 0.0
  %2209 = vmatprep.subr.mxu0 0.0
  %2210 = vmatpush1.msra.mxu0 0.0
  %2211 = vmatprep.subr.mxu0 0.0
  %2212 = vmatpush1.msra.mxu0 0.0
  %2213 = vmatprep.subr.mxu0 0.0
  %2214 = vmatpush1.msra.mxu0 0.0
  %2215 = vmatprep.subr.mxu0 0.0
  %2216 = vmatpush1.msra.mxu0 0.0
  %2217 = vmatprep.subr.mxu0 0.0
  %2218 = vmatpush1.msra.mxu0 0.0
  %2219 = vmatprep.subr.mxu0 0.0
  %2220 = vmatpush1.msra.mxu0 0.0
  %2221 = vmatprep.subr.mxu0 0.0
  %2222 = vmatpush1.msra.mxu0 0.0
  %2223 = vmatprep.subr.mxu0 0.0
  %2224 = vmatpush1.msra.mxu0 0.0
  %2225 = vmatprep.subr.mxu0 0.0
  %2226 = vmatpush1.msra.mxu0 0.0
  %2227 = vmatprep.subr.mxu0 0.0
  %2228 = vmatpush1.msra.mxu0 0.0
  %2229 = vmatprep.subr.mxu0 0.0
  %2230 = vmatpush1.msra.mxu0 0.0
  %2231 = vmatprep.subr.mxu0 0.0
  %2232 = vmatpush1.msra.mxu0 0.0
  %2233 = vmatprep.subr.mxu0 0.0
  %2234 = vmatpush1.msra.mxu0 0.0
  %2235 = vmatprep.subr.mxu0 0.0
  %2236 = vmatpush1.msra.mxu0 0.0
  %2237 = vmatprep.subr.mxu0 0.0
  %2238 = vmatpush1.msra.mxu0 0.0
  %2239 = vmatprep.subr.mxu0 0.0
  %2240 = vmatpush1.msra.mxu0 0.0
  %2241 = vmatprep.subr.mxu0 0.0
  %2242 = vmatpush1.msra.mxu0 0.0
  %2243 = vmatprep.subr.mxu0 0.0
  %2244 = vmatpush1.msra.mxu0 0.0
  %2245 = vmatprep.subr.mxu0 0.0
  %2246 = vmatpush1.msra.mxu0 0.0
  %2247 = vmatprep.mubr.f32.mxu0 0.0
  %2248 = vmatmul.mubr.f32.gmra.mrb[0].mxu0 %v1992
  %v2249 = vpop.f32.mrb[0].mxu0
  %v2250 = vadd.f32 %v1672, %v2249
  %v2251 = vpop.f32.mrb[0].mxu0
  %2252 = vmatprep.mubr.f32.mxu0 0.0
  %2253 = vmatmul.mubr.f32.gmra.mrb[0].mxu0 %v1995
  %v2254 = vpop.f32.mrb[0].mxu0
  %v2255 = vadd.f32 %v1677, %v2254
  %v2256 = vpop.f32.mrb[0].mxu0
  %2257 = vmatprep.mubr.f32.mxu0 0.0
  %2258 = vmatmul.mubr.f32.gmra.mrb[0].mxu0 %v1998
  %v2259 = vpop.f32.mrb[0].mxu0
  %v2260 = vadd.f32 %v1682, %v2259
  %v2261 = vpop.f32.mrb[0].mxu0
  %2262 = vmatprep.mubr.f32.mxu0 0.0
  %2263 = vmatmul.mubr.f32.gmra.mrb[0].mxu0 %v2001
  %v2264 = vpop.f32.mrb[0].mxu0
  %v2265 = vadd.f32 %v1687, %v2264
  %v2266 = vpop.f32.mrb[0].mxu0
  %2267 = vmatprep.mubr.f32.mxu0 0.0
  %2268 = vmatmul.mubr.f32.gmra.mrb[0].mxu0 %v2004
  %v2269 = vpop.f32.mrb[0].mxu0
  %v2270 = vadd.f32 %v1692, %v2269
  %v2271 = vpop.f32.mrb[0].mxu0
  %2272 = vmatprep.mubr.f32.mxu0 0.0
  %2273 = vmatmul.mubr.f32.gmra.mrb[0].mxu0 %v2007
  %v2274 = vpop.f32.mrb[0].mxu0
  %v2275 = vadd.f32 %v1697, %v2274
  %v2276 = vpop.f32.mrb[0].mxu0
  %2277 = vmatprep.mubr.f32.mxu0 0.0
  %2278 = vmatmul.mubr.f32.gmra.mrb[0].mxu0 %v2010
  %v2279 = vpop.f32.mrb[0].mxu0
  %v2280 = vadd.f32 %v1702, %v2279
  %v2281 = vpop.f32.mrb[0].mxu0
  %2282 = vmatprep.mubr.f32.mxu0 0.0
  %2283 = vmatmul.mubr.f32.gmra.mrb[0].mxu0 %v2013
  %v2284 = vpop.f32.mrb[0].mxu0
  %v2285 = vadd.f32 %v1707, %v2284
  %v2286 = vpop.f32.mrb[0].mxu0
  %2287 = vmatprep.mubr.f32.mxu0 0.0
  %2288 = vmatmul.mubr.f32.gmra.mrb[0].mxu0 %v2016
  %v2289 = vpop.f32.mrb[0].mxu0
  %v2290 = vadd.f32 %v1712, %v2289
  %v2291 = vpop.f32.mrb[0].mxu0
  %2292 = vmatprep.mubr.f32.mxu0 0.0
  %2293 = vmatmul.mubr.f32.gmra.mrb[0].mxu0 %v2019
  %v2294 = vpop.f32.mrb[0].mxu0
  %v2295 = vadd.f32 %v1717, %v2294
  %v2296 = vpop.f32.mrb[0].mxu0
  %2297 = vmatprep.mubr.f32.mxu0 0.0
  %2298 = vmatmul.mubr.f32.gmra.mrb[0].mxu0 %v2022
  %v2299 = vpop.f32.mrb[0].mxu0
  %v2300 = vadd.f32 %v1722, %v2299
  %v2301 = vpop.f32.mrb[0].mxu0
  %2302 = vmatprep.mubr.f32.mxu0 0.0
  %2303 = vmatmul.mubr.f32.gmra.mrb[0].mxu0 %v2025
  %v2304 = vpop.f32.mrb[0].mxu0
  %v2305 = vadd.f32 %v1727, %v2304
  %v2306 = vpop.f32.mrb[0].mxu0
  %2307 = vmatprep.mubr.f32.mxu0 0.0
  %2308 = vmatmul.mubr.f32.gmra.mrb[0].mxu0 %v2028
  %v2309 = vpop.f32.mrb[0].mxu0
  %v2310 = vadd.f32 %v1732, %v2309
  %v2311 = vpop.f32.mrb[0].mxu0
  %2312 = vmatprep.mubr.f32.mxu0 0.0
  %2313 = vmatmul.mubr.f32.gmra.mrb[0].mxu0 %v2031
  %v2314 = vpop.f32.mrb[0].mxu0
  %v2315 = vadd.f32 %v1737, %v2314
  %v2316 = vpop.f32.mrb[0].mxu0
  %2317 = vmatprep.mubr.f32.mxu0 0.0
  %2318 = vmatmul.mubr.f32.gmra.mrb[0].mxu0 %v2034
  %v2319 = vpop.f32.mrb[0].mxu0
  %v2320 = vadd.f32 %v1742, %v2319
  %v2321 = vpop.f32.mrb[0].mxu0
  %2322 = vmatprep.mubr.f32.mxu0 0.0
  %2323 = vmatmul.mubr.f32.gmra.mrb[0].mxu0 %v2037
  %v2324 = vpop.f32.mrb[0].mxu0
  %v2325 = vadd.f32 %v1747, %v2324
  %v2326 = vpop.f32.mrb[0].mxu0
  %2327 = vmatprep.mubr.f32.mxu0 0.0
  %2328 = vmatmul.mubr.f32.gmra.mrb[0].mxu0 %v2040
  %v2329 = vpop.f32.mrb[0].mxu0
  %v2330 = vadd.f32 %v1752, %v2329
  %v2331 = vpop.f32.mrb[0].mxu0
  %2332 = vmatprep.mubr.f32.mxu0 0.0
  %2333 = vmatmul.mubr.f32.gmra.mrb[0].mxu0 %v2043
  %v2334 = vpop.f32.mrb[0].mxu0
  %v2335 = vadd.f32 %v1757, %v2334
  %v2336 = vpop.f32.mrb[0].mxu0
  %2337 = vmatprep.mubr.f32.mxu0 0.0
  %2338 = vmatmul.mubr.f32.gmra.mrb[0].mxu0 %v2046
  %v2339 = vpop.f32.mrb[0].mxu0
  %v2340 = vadd.f32 %v1762, %v2339
  %v2341 = vpop.f32.mrb[0].mxu0
  %2342 = vmatprep.mubr.f32.mxu0 0.0
  %2343 = vmatmul.mubr.f32.gmra.mrb[0].mxu0 %v2049
  %v2344 = vpop.f32.mrb[0].mxu0
  %v2345 = vadd.f32 %v1767, %v2344
  %v2346 = vpop.f32.mrb[0].mxu0
  %2347 = vmatprep.mubr.f32.mxu0 0.0
  %2348 = vmatmul.mubr.f32.gmra.mrb[0].mxu0 %v2052
  %v2349 = vpop.f32.mrb[0].mxu0
  %v2350 = vadd.f32 %v1772, %v2349
  %v2351 = vpop.f32.mrb[0].mxu0
  %2352 = vmatprep.mubr.f32.mxu0 0.0
  %2353 = vmatmul.mubr.f32.gmra.mrb[0].mxu0 %v2055
  %v2354 = vpop.f32.mrb[0].mxu0
  %v2355 = vadd.f32 %v1777, %v2354
  %v2356 = vpop.f32.mrb[0].mxu0
  %2357 = vmatprep.mubr.f32.mxu0 0.0
  %2358 = vmatmul.mubr.f32.gmra.mrb[0].mxu0 %v2058
  %v2359 = vpop.f32.mrb[0].mxu0
  %v2360 = vadd.f32 %v1782, %v2359
  %v2361 = vpop.f32.mrb[0].mxu0
  %2362 = vmatprep.mubr.f32.mxu0 0.0
  %2363 = vmatmul.mubr.f32.gmra.mrb[0].mxu0 %v2061
  %v2364 = vpop.f32.mrb[0].mxu0
  %v2365 = vadd.f32 %v1787, %v2364
  %v2366 = vpop.f32.mrb[0].mxu0
  %2367 = vmatprep.mubr.f32.mxu0 0.0
  %2368 = vmatmul.mubr.f32.gmra.mrb[0].mxu0 %v2064
  %v2369 = vpop.f32.mrb[0].mxu0
  %v2370 = vadd.f32 %v1792, %v2369
  %v2371 = vpop.f32.mrb[0].mxu0
  %2372 = vmatprep.mubr.f32.mxu0 0.0
  %2373 = vmatmul.mubr.f32.gmra.mrb[0].mxu0 %v2067
  %v2374 = vpop.f32.mrb[0].mxu0
  %v2375 = vadd.f32 %v1797, %v2374
  %v2376 = vpop.f32.mrb[0].mxu0
  %2377 = vmatprep.mubr.f32.mxu0 0.0
  %2378 = vmatmul.mubr.f32.gmra.mrb[0].mxu0 %v2070
  %v2379 = vpop.f32.mrb[0].mxu0
  %v2380 = vadd.f32 %v1802, %v2379
  %v2381 = vpop.f32.mrb[0].mxu0
  %2382 = vmatprep.mubr.f32.mxu0 0.0
  %2383 = vmatmul.mubr.f32.gmra.mrb[0].mxu0 %v2073
  %v2384 = vpop.f32.mrb[0].mxu0
  %v2385 = vadd.f32 %v1807, %v2384
  %v2386 = vpop.f32.mrb[0].mxu0
  %2387 = vmatprep.mubr.f32.mxu0 0.0
  %2388 = vmatmul.mubr.f32.gmra.mrb[0].mxu0 %v2076
  %v2389 = vpop.f32.mrb[0].mxu0
  %v2390 = vadd.f32 %v1812, %v2389
  %v2391 = vpop.f32.mrb[0].mxu0
  %2392 = vmatprep.mubr.f32.mxu0 0.0
  %2393 = vmatmul.mubr.f32.gmra.mrb[0].mxu0 %v2079
  %v2394 = vpop.f32.mrb[0].mxu0
  %v2395 = vadd.f32 %v1817, %v2394
  %v2396 = vpop.f32.mrb[0].mxu0
  %2397 = vmatprep.mubr.f32.mxu0 0.0
  %2398 = vmatmul.mubr.f32.gmra.mrb[0].mxu0 %v2082
  %v2399 = vpop.f32.mrb[0].mxu0
  %v2400 = vadd.f32 %v1822, %v2399
  %v2401 = vpop.f32.mrb[0].mxu0
  %2402 = vmatprep.mubr.f32.mxu0 0.0
  %2403 = vmatmul.mubr.f32.gmra.mrb[0].mxu0 %v2085
  %v2404 = vpop.f32.mrb[0].mxu0
  %v2405 = vadd.f32 %v1827, %v2404
  %v2406 = vpop.f32.mrb[0].mxu0
  %2407 = vmatprep.mubr.f32.mxu0 0.0
  %2408 = vmatmul.mubr.f32.gmra.mrb[0].mxu0 %v2088
  %v2409 = vpop.f32.mrb[0].mxu0
  %v2410 = vadd.f32 %v1832, %v2409
  %v2411 = vpop.f32.mrb[0].mxu0
  %2412 = vmatprep.mubr.f32.mxu0 0.0
  %2413 = vmatmul.mubr.f32.gmra.mrb[0].mxu0 %v2091
  %v2414 = vpop.f32.mrb[0].mxu0
  %v2415 = vadd.f32 %v1837, %v2414
  %v2416 = vpop.f32.mrb[0].mxu0
  %2417 = vmatprep.mubr.f32.mxu0 0.0
  %2418 = vmatmul.mubr.f32.gmra.mrb[0].mxu0 %v2094
  %v2419 = vpop.f32.mrb[0].mxu0
  %v2420 = vadd.f32 %v1842, %v2419
  %v2421 = vpop.f32.mrb[0].mxu0
  %2422 = vmatprep.mubr.f32.mxu0 0.0
  %2423 = vmatmul.mubr.f32.gmra.mrb[0].mxu0 %v2097
  %v2424 = vpop.f32.mrb[0].mxu0
  %v2425 = vadd.f32 %v1847, %v2424
  %v2426 = vpop.f32.mrb[0].mxu0
  %2427 = vmatprep.mubr.f32.mxu0 0.0
  %2428 = vmatmul.mubr.f32.gmra.mrb[0].mxu0 %v2100
  %v2429 = vpop.f32.mrb[0].mxu0
  %v2430 = vadd.f32 %v1852, %v2429
  %v2431 = vpop.f32.mrb[0].mxu0
  %2432 = vmatprep.mubr.f32.mxu0 0.0
  %2433 = vmatmul.mubr.f32.gmra.mrb[0].mxu0 %v2103
  %v2434 = vpop.f32.mrb[0].mxu0
  %v2435 = vadd.f32 %v1857, %v2434
  %v2436 = vpop.f32.mrb[0].mxu0
  %2437 = vmatprep.mubr.f32.mxu0 0.0
  %2438 = vmatmul.mubr.f32.gmra.mrb[0].mxu0 %v2106
  %v2439 = vpop.f32.mrb[0].mxu0
  %v2440 = vadd.f32 %v1862, %v2439
  %v2441 = vpop.f32.mrb[0].mxu0
  %2442 = vmatprep.mubr.f32.mxu0 0.0
  %2443 = vmatmul.mubr.f32.gmra.mrb[0].mxu0 %v2109
  %v2444 = vpop.f32.mrb[0].mxu0
  %v2445 = vadd.f32 %v1867, %v2444
  %v2446 = vpop.f32.mrb[0].mxu0
  %2447 = vmatprep.mubr.f32.mxu0 0.0
  %2448 = vmatmul.mubr.f32.gmra.mrb[0].mxu0 %v2112
  %v2449 = vpop.f32.mrb[0].mxu0
  %v2450 = vadd.f32 %v1872, %v2449
  %v2451 = vpop.f32.mrb[0].mxu0
  %2452 = vmatprep.mubr.f32.mxu0 0.0
  %2453 = vmatmul.mubr.f32.gmra.mrb[0].mxu0 %v2115
  %v2454 = vpop.f32.mrb[0].mxu0
  %v2455 = vadd.f32 %v1877, %v2454
  %v2456 = vpop.f32.mrb[0].mxu0
  %2457 = vmatprep.mubr.f32.mxu0 0.0
  %2458 = vmatmul.mubr.f32.gmra.mrb[0].mxu0 %v2118
  %v2459 = vpop.f32.mrb[0].mxu0
  %v2460 = vadd.f32 %v1882, %v2459
  %v2461 = vpop.f32.mrb[0].mxu0
  %2462 = vmatprep.mubr.f32.mxu0 0.0
  %2463 = vmatmul.mubr.f32.gmra.mrb[0].mxu0 %v2121
  %v2464 = vpop.f32.mrb[0].mxu0
  %v2465 = vadd.f32 %v1887, %v2464
  %v2466 = vpop.f32.mrb[0].mxu0
  %2467 = vmatprep.mubr.f32.mxu0 0.0
  %2468 = vmatmul.mubr.f32.gmra.mrb[0].mxu0 %v2124
  %v2469 = vpop.f32.mrb[0].mxu0
  %v2470 = vadd.f32 %v1892, %v2469
  %v2471 = vpop.f32.mrb[0].mxu0
  %2472 = vmatprep.mubr.f32.mxu0 0.0
  %2473 = vmatmul.mubr.f32.gmra.mrb[0].mxu0 %v2127
  %v2474 = vpop.f32.mrb[0].mxu0
  %v2475 = vadd.f32 %v1897, %v2474
  %v2476 = vpop.f32.mrb[0].mxu0
  %2477 = vmatprep.mubr.f32.mxu0 0.0
  %2478 = vmatmul.mubr.f32.gmra.mrb[0].mxu0 %v2130
  %v2479 = vpop.f32.mrb[0].mxu0
  %v2480 = vadd.f32 %v1902, %v2479
  %v2481 = vpop.f32.mrb[0].mxu0
  %2482 = vmatprep.mubr.f32.mxu0 0.0
  %2483 = vmatmul.mubr.f32.gmra.mrb[0].mxu0 %v2133
  %v2484 = vpop.f32.mrb[0].mxu0
  %v2485 = vadd.f32 %v1907, %v2484
  %v2486 = vpop.f32.mrb[0].mxu0
  %2487 = vmatprep.mubr.f32.mxu0 0.0
  %2488 = vmatmul.mubr.f32.gmra.mrb[0].mxu0 %v2136
  %v2489 = vpop.f32.mrb[0].mxu0
  %v2490 = vadd.f32 %v1912, %v2489
  %v2491 = vpop.f32.mrb[0].mxu0
  %2492 = vmatprep.mubr.f32.mxu0 0.0
  %2493 = vmatmul.mubr.f32.gmra.mrb[0].mxu0 %v2139
  %v2494 = vpop.f32.mrb[0].mxu0
  %v2495 = vadd.f32 %v1917, %v2494
  %v2496 = vpop.f32.mrb[0].mxu0
  %2497 = vmatprep.mubr.f32.mxu0 0.0
  %2498 = vmatmul.mubr.f32.gmra.mrb[0].mxu0 %v2142
  %v2499 = vpop.f32.mrb[0].mxu0
  %v2500 = vadd.f32 %v1922, %v2499
  %v2501 = vpop.f32.mrb[0].mxu0
  %2502 = vmatprep.mubr.f32.mxu0 0.0
  %2503 = vmatmul.mubr.f32.gmra.mrb[0].mxu0 %v2145
  %v2504 = vpop.f32.mrb[0].mxu0
  %v2505 = vadd.f32 %v1927, %v2504
  %v2506 = vpop.f32.mrb[0].mxu0
  %2507 = vmatprep.mubr.f32.mxu0 0.0
  %2508 = vmatmul.mubr.f32.gmra.mrb[0].mxu0 %v2148
  %v2509 = vpop.f32.mrb[0].mxu0
  %v2510 = vadd.f32 %v1932, %v2509
  %v2511 = vpop.f32.mrb[0].mxu0
  %2512 = vmatprep.mubr.f32.mxu0 0.0
  %2513 = vmatmul.mubr.f32.gmra.mrb[0].mxu0 %v2151
  %v2514 = vpop.f32.mrb[0].mxu0
  %v2515 = vadd.f32 %v1937, %v2514
  %v2516 = vpop.f32.mrb[0].mxu0
  %2517 = vmatprep.mubr.f32.mxu0 0.0
  %2518 = vmatmul.mubr.f32.gmra.mrb[0].mxu0 %v2154
  %v2519 = vpop.f32.mrb[0].mxu0
  %v2520 = vadd.f32 %v1942, %v2519
  %v2521 = vpop.f32.mrb[0].mxu0
  %2522 = vmatprep.mubr.f32.mxu0 0.0
  %2523 = vmatmul.mubr.f32.gmra.mrb[0].mxu0 %v2157
  %v2524 = vpop.f32.mrb[0].mxu0
  %v2525 = vadd.f32 %v1947, %v2524
  %v2526 = vpop.f32.mrb[0].mxu0
  %2527 = vmatprep.mubr.f32.mxu0 0.0
  %2528 = vmatmul.mubr.f32.gmra.mrb[0].mxu0 %v2160
  %v2529 = vpop.f32.mrb[0].mxu0
  %v2530 = vadd.f32 %v1952, %v2529
  %v2531 = vpop.f32.mrb[0].mxu0
  %2532 = vmatprep.mubr.f32.mxu0 0.0
  %2533 = vmatmul.mubr.f32.gmra.mrb[0].mxu0 %v2163
  %v2534 = vpop.f32.mrb[0].mxu0
  %v2535 = vadd.f32 %v1957, %v2534
  %v2536 = vpop.f32.mrb[0].mxu0
  %2537 = vmatprep.mubr.f32.mxu0 0.0
  %2538 = vmatmul.mubr.f32.gmra.mrb[0].mxu0 %v2166
  %v2539 = vpop.f32.mrb[0].mxu0
  %v2540 = vadd.f32 %v1962, %v2539
  %v2541 = vpop.f32.mrb[0].mxu0
  %2542 = vmatprep.mubr.f32.mxu0 0.0
  %2543 = vmatmul.mubr.f32.gmra.mrb[0].mxu0 %v2169
  %v2544 = vpop.f32.mrb[0].mxu0
  %v2545 = vadd.f32 %v1967, %v2544
  %v2546 = vpop.f32.mrb[0].mxu0
  %2547 = vmatprep.mubr.f32.mxu0 0.0
  %2548 = vmatmul.mubr.f32.gmra.mrb[0].mxu0 %v2172
  %v2549 = vpop.f32.mrb[0].mxu0
  %v2550 = vadd.f32 %v1972, %v2549
  %v2551 = vpop.f32.mrb[0].mxu0
  %2552 = vmatprep.mubr.f32.mxu0 0.0
  %2553 = vmatmul.mubr.f32.gmra.mrb[0].mxu0 %v2175
  %v2554 = vpop.f32.mrb[0].mxu0
  %v2555 = vadd.f32 %v1977, %v2554
  %v2556 = vpop.f32.mrb[0].mxu0
  %2557 = vmatprep.mubr.f32.mxu0 0.0
  %2558 = vmatmul.mubr.f32.gmra.mrb[0].mxu0 %v2178
  %v2559 = vpop.f32.mrb[0].mxu0
  %v2560 = vadd.f32 %v1982, %v2559
  %v2561 = vpop.f32.mrb[0].mxu0
  %2562 = vmatprep.mubr.f32.mxu0 0.0
  %2563 = vmatmul.mubr.f32.gmra.mrb[0].mxu0 %v2181
  %v2564 = vpop.f32.mrb[0].mxu0
  %v2565 = vadd.f32 %v1987, %v2564
  %v2566 = vpop.f32.mrb[0].mxu0
  %2567 = vdwg.mxu0
  %v2568 = vlaneseq
  %v2569 = vshrl.u32 %v2568, 7
  %v2570 = vadd.s32 %v2569, 8
  %v2571 = vlaneseq
  %v2572 = vand.u32 %v2571, 127
  %v2573 = vmul.u32 %v2569, 2
  %v2574 = vmul.u32 %v2570, 2
  %v2575 = vsub.s32 %v2572, %v2573
  %v2576 = vsub.s32 %v2572, %v2574
  %vm2577 = vcmp.eq.s32.totalorder %v2575, 0
  %vm2578 = vcmp.eq.s32.totalorder %v2576, 0
  %vm2579 = vcmp.eq.s32.totalorder %v2575, 1
  %vm2580 = vcmp.eq.s32.totalorder %v2576, 1
  %vm2581 = vmor %vm2577, %vm2579
  %vm2582 = vmor %vm2578, %vm2580
  %vm2583 = vcmp.eq.s32.totalorder %v2575, 32
  %vm2584 = vcmp.eq.s32.totalorder %v2576, 32
  %vm2585 = vmor %vm2581, %vm2583
  %vm2586 = vmor %vm2582, %vm2584
  %vm2587 = vcmp.eq.s32.totalorder %v2575, 33
  %vm2588 = vcmp.eq.s32.totalorder %v2576, 33
  %vm2589 = vmor %vm2585, %vm2587
  %vm2590 = vmor %vm2586, %vm2588
  %v2591 = vsel %vm2589, 1, 0
  %v2592 = vsel %vm2590, 1, 0
  %v2593 = vcvt.s32.f32 %v2591
  %v2594 = vcvt.s32.f32 %v2592
  %vm2595 = vcmask 523264
  %v2597 = vsel %vm2595, %v2593, 0
  %v2600 = vsel %vm2595, %v2594, 0
  %2602 = vmatprep.subr.mxu0 0.0
  %2603 = vmatpush1.msra.mxu0 %v2250
  %2604 = vmatprep.subr.mxu0 0.0
  %2605 = vmatpush1.msra.mxu0 %v2255
  %2606 = vmatprep.subr.mxu0 0.0
  %2607 = vmatpush1.msra.mxu0 %v2260
  %2608 = vmatprep.subr.mxu0 0.0
  %2609 = vmatpush1.msra.mxu0 %v2265
  %2610 = vmatprep.subr.mxu0 0.0
  %2611 = vmatpush1.msra.mxu0 %v2270
  %2612 = vmatprep.subr.mxu0 0.0
  %2613 = vmatpush1.msra.mxu0 %v2275
  %2614 = vmatprep.subr.mxu0 0.0
  %2615 = vmatpush1.msra.mxu0 %v2280
  %2616 = vmatprep.subr.mxu0 0.0
  %2617 = vmatpush1.msra.mxu0 %v2285
  %2618 = vmatprep.subr.mxu0 0.0
  %2619 = vmatpush1.msra.mxu0 0.0
  %2620 = vmatprep.subr.mxu0 0.0
  %2621 = vmatpush1.msra.mxu0 0.0
  %2622 = vmatprep.subr.mxu0 0.0
  %2623 = vmatpush1.msra.mxu0 0.0
  %2624 = vmatprep.subr.mxu0 0.0
  %2625 = vmatpush1.msra.mxu0 0.0
  %2626 = vmatprep.subr.mxu0 0.0
  %2627 = vmatpush1.msra.mxu0 0.0
  %2628 = vmatprep.subr.mxu0 0.0
  %2629 = vmatpush1.msra.mxu0 0.0
  %2630 = vmatprep.subr.mxu0 0.0
  %2631 = vmatpush1.msra.mxu0 0.0
  %2632 = vmatprep.subr.mxu0 0.0
  %2633 = vmatpush1.msra.mxu0 0.0
  %2634 = vmatprep.subr.mxu0 0.0
  %2635 = vmatpush1.msra.mxu0 0.0
  %2636 = vmatprep.subr.mxu0 0.0
  %2637 = vmatpush1.msra.mxu0 0.0
  %2638 = vmatprep.subr.mxu0 0.0
  %2639 = vmatpush1.msra.mxu0 0.0
  %2640 = vmatprep.subr.mxu0 0.0
  %2641 = vmatpush1.msra.mxu0 0.0
  %2642 = vmatprep.subr.mxu0 0.0
  %2643 = vmatpush1.msra.mxu0 0.0
  %2644 = vmatprep.subr.mxu0 0.0
  %2645 = vmatpush1.msra.mxu0 0.0
  %2646 = vmatprep.subr.mxu0 0.0
  %2647 = vmatpush1.msra.mxu0 0.0
  %2648 = vmatprep.subr.mxu0 0.0
  %2649 = vmatpush1.msra.mxu0 0.0
  %2650 = vmatprep.subr.mxu0 0.0
  %2651 = vmatpush1.msra.mxu0 0.0
  %2652 = vmatprep.subr.mxu0 0.0
  %2653 = vmatpush1.msra.mxu0 0.0
  %2654 = vmatprep.subr.mxu0 0.0
  %2655 = vmatpush1.msra.mxu0 0.0
  %2656 = vmatprep.subr.mxu0 0.0
  %2657 = vmatpush1.msra.mxu0 0.0
  %2658 = vmatprep.subr.mxu0 0.0
  %2659 = vmatpush1.msra.mxu0 0.0
  %2660 = vmatprep.subr.mxu0 0.0
  %2661 = vmatpush1.msra.mxu0 0.0
  %2662 = vmatprep.subr.mxu0 0.0
  %2663 = vmatpush1.msra.mxu0 0.0
  %2664 = vmatprep.subr.mxu0 0.0
  %2665 = vmatpush1.msra.mxu0 0.0
  %2666 = vmatprep.mubr.f32.mxu0 0.0
  %2667 = vmatmul.mubr.f32.gmra.mrb[0].mxu0 %v2597
  %v2668 = vpop.f32.mrb[0].mxu0
  %v2669 = vadd.f32 0.0, %v2668
  %v2670 = vpop.f32.mrb[0].mxu0
  %2671 = vmatprep.mubr.f32.mxu0 0.0
  %2672 = vmatmul.mubr.f32.gmra.mrb[0].mxu0 %v2600
  %v2673 = vpop.f32.mrb[0].mxu0
  %v2674 = vadd.f32 0.0, %v2673
  %v2675 = vpop.f32.mrb[0].mxu0
  %2676 = vdwg.mxu0
  %2677 = vst.msk [vmem:[%s2] sm:$0xff] %vm1990, %v2669
  %2678 = vst.msk [vmem:[%s2 + $0x8] sm:$0xff] %vm1990, %v2674
  %2679 = vmatprep.subr.mxu0 0.0
  %2680 = vmatpush1.msra.mxu0 %v2290
  %2681 = vmatprep.subr.mxu0 0.0
  %2682 = vmatpush1.msra.mxu0 %v2295
  %2683 = vmatprep.subr.mxu0 0.0
  %2684 = vmatpush1.msra.mxu0 %v2300
  %2685 = vmatprep.subr.mxu0 0.0
  %2686 = vmatpush1.msra.mxu0 %v2305
  %2687 = vmatprep.subr.mxu0 0.0
  %2688 = vmatpush1.msra.mxu0 %v2310
  %2689 = vmatprep.subr.mxu0 0.0
  %2690 = vmatpush1.msra.mxu0 %v2315
  %2691 = vmatprep.subr.mxu0 0.0
  %2692 = vmatpush1.msra.mxu0 %v2320
  %2693 = vmatprep.subr.mxu0 0.0
  %2694 = vmatpush1.msra.mxu0 %v2325
  %2695 = vmatprep.subr.mxu0 0.0
  %2696 = vmatpush1.msra.mxu0 0.0
  %2697 = vmatprep.subr.mxu0 0.0
  %2698 = vmatpush1.msra.mxu0 0.0
  %2699 = vmatprep.subr.mxu0 0.0
  %2700 = vmatpush1.msra.mxu0 0.0
  %2701 = vmatprep.subr.mxu0 0.0
  %2702 = vmatpush1.msra.mxu0 0.0
  %2703 = vmatprep.subr.mxu0 0.0
  %2704 = vmatpush1.msra.mxu0 0.0
  %2705 = vmatprep.subr.mxu0 0.0
  %2706 = vmatpush1.msra.mxu0 0.0
  %2707 = vmatprep.subr.mxu0 0.0
  %2708 = vmatpush1.msra.mxu0 0.0
  %2709 = vmatprep.subr.mxu0 0.0
  %2710 = vmatpush1.msra.mxu0 0.0
  %2711 = vmatprep.subr.mxu0 0.0
  %2712 = vmatpush1.msra.mxu0 0.0
  %2713 = vmatprep.subr.mxu0 0.0
  %2714 = vmatpush1.msra.mxu0 0.0
  %2715 = vmatprep.subr.mxu0 0.0
  %2716 = vmatpush1.msra.mxu0 0.0
  %2717 = vmatprep.subr.mxu0 0.0
  %2718 = vmatpush1.msra.mxu0 0.0
  %2719 = vmatprep.subr.mxu0 0.0
  %2720 = vmatpush1.msra.mxu0 0.0
  %2721 = vmatprep.subr.mxu0 0.0
  %2722 = vmatpush1.msra.mxu0 0.0
  %2723 = vmatprep.subr.mxu0 0.0
  %2724 = vmatpush1.msra.mxu0 0.0
  %2725 = vmatprep.subr.mxu0 0.0
  %2726 = vmatpush1.msra.mxu0 0.0
  %2727 = vmatprep.subr.mxu0 0.0
  %2728 = vmatpush1.msra.mxu0 0.0
  %2729 = vmatprep.subr.mxu0 0.0
  %2730 = vmatpush1.msra.mxu0 0.0
  %2731 = vmatprep.subr.mxu0 0.0
  %2732 = vmatpush1.msra.mxu0 0.0
  %2733 = vmatprep.subr.mxu0 0.0
  %2734 = vmatpush1.msra.mxu0 0.0
  %2735 = vmatprep.subr.mxu0 0.0
  %2736 = vmatpush1.msra.mxu0 0.0
  %2737 = vmatprep.subr.mxu0 0.0
  %2738 = vmatpush1.msra.mxu0 0.0
  %2739 = vmatprep.subr.mxu0 0.0
  %2740 = vmatpush1.msra.mxu0 0.0
  %2741 = vmatprep.subr.mxu0 0.0
  %2742 = vmatpush1.msra.mxu0 0.0
  %2743 = vmatprep.mubr.f32.mxu0 0.0
  %2744 = vmatmul.mubr.f32.gmra.mrb[0].mxu0 %v2597
  %v2745 = vpop.f32.mrb[0].mxu0
  %v2746 = vadd.f32 0.0, %v2745
  %v2747 = vpop.f32.mrb[0].mxu0
  %2748 = vmatprep.mubr.f32.mxu0 0.0
  %2749 = vmatmul.mubr.f32.gmra.mrb[0].mxu0 %v2600
  %v2750 = vpop.f32.mrb[0].mxu0
  %v2751 = vadd.f32 0.0, %v2750
  %v2752 = vpop.f32.mrb[0].mxu0
  %2753 = vdwg.mxu0
  %2754 = vst.msk [vmem:[%s2 + $0x10] sm:$0xff] %vm1990, %v2746
  %2755 = vst.msk [vmem:[%s2 + $0x18] sm:$0xff] %vm1990, %v2751
  %2756 = vmatprep.subr.mxu0 0.0
  %2757 = vmatpush1.msra.mxu0 %v2330
  %2758 = vmatprep.subr.mxu0 0.0
  %2759 = vmatpush1.msra.mxu0 %v2335
  %2760 = vmatprep.subr.mxu0 0.0
  %2761 = vmatpush1.msra.mxu0 %v2340
  %2762 = vmatprep.subr.mxu0 0.0
  %2763 = vmatpush1.msra.mxu0 %v2345
  %2764 = vmatprep.subr.mxu0 0.0
  %2765 = vmatpush1.msra.mxu0 %v2350
  %2766 = vmatprep.subr.mxu0 0.0
  %2767 = vmatpush1.msra.mxu0 %v2355
  %2768 = vmatprep.subr.mxu0 0.0
  %2769 = vmatpush1.msra.mxu0 %v2360
  %2770 = vmatprep.subr.mxu0 0.0
  %2771 = vmatpush1.msra.mxu0 %v2365
  %2772 = vmatprep.subr.mxu0 0.0
  %2773 = vmatpush1.msra.mxu0 0.0
  %2774 = vmatprep.subr.mxu0 0.0
  %2775 = vmatpush1.msra.mxu0 0.0
  %2776 = vmatprep.subr.mxu0 0.0
  %2777 = vmatpush1.msra.mxu0 0.0
  %2778 = vmatprep.subr.mxu0 0.0
  %2779 = vmatpush1.msra.mxu0 0.0
  %2780 = vmatprep.subr.mxu0 0.0
  %2781 = vmatpush1.msra.mxu0 0.0
  %2782 = vmatprep.subr.mxu0 0.0
  %2783 = vmatpush1.msra.mxu0 0.0
  %2784 = vmatprep.subr.mxu0 0.0
  %2785 = vmatpush1.msra.mxu0 0.0
  %2786 = vmatprep.subr.mxu0 0.0
  %2787 = vmatpush1.msra.mxu0 0.0
  %2788 = vmatprep.subr.mxu0 0.0
  %2789 = vmatpush1.msra.mxu0 0.0
  %2790 = vmatprep.subr.mxu0 0.0
  %2791 = vmatpush1.msra.mxu0 0.0
  %2792 = vmatprep.subr.mxu0 0.0
  %2793 = vmatpush1.msra.mxu0 0.0
  %2794 = vmatprep.subr.mxu0 0.0
  %2795 = vmatpush1.msra.mxu0 0.0
  %2796 = vmatprep.subr.mxu0 0.0
  %2797 = vmatpush1.msra.mxu0 0.0
  %2798 = vmatprep.subr.mxu0 0.0
  %2799 = vmatpush1.msra.mxu0 0.0
  %2800 = vmatprep.subr.mxu0 0.0
  %2801 = vmatpush1.msra.mxu0 0.0
  %2802 = vmatprep.subr.mxu0 0.0
  %2803 = vmatpush1.msra.mxu0 0.0
  %2804 = vmatprep.subr.mxu0 0.0
  %2805 = vmatpush1.msra.mxu0 0.0
  %2806 = vmatprep.subr.mxu0 0.0
  %2807 = vmatpush1.msra.mxu0 0.0
  %2808 = vmatprep.subr.mxu0 0.0
  %2809 = vmatpush1.msra.mxu0 0.0
  %2810 = vmatprep.subr.mxu0 0.0
  %2811 = vmatpush1.msra.mxu0 0.0
  %2812 = vmatprep.subr.mxu0 0.0
  %2813 = vmatpush1.msra.mxu0 0.0
  %2814 = vmatprep.subr.mxu0 0.0
  %2815 = vmatpush1.msra.mxu0 0.0
  %2816 = vmatprep.subr.mxu0 0.0
  %2817 = vmatpush1.msra.mxu0 0.0
  %2818 = vmatprep.subr.mxu0 0.0
  %2819 = vmatpush1.msra.mxu0 0.0
  %2820 = vmatprep.mubr.f32.mxu0 0.0
  %2821 = vmatmul.mubr.f32.gmra.mrb[0].mxu0 %v2597
  %v2822 = vpop.f32.mrb[0].mxu0
  %v2823 = vadd.f32 0.0, %v2822
  %v2824 = vpop.f32.mrb[0].mxu0
  %2825 = vmatprep.mubr.f32.mxu0 0.0
  %2826 = vmatmul.mubr.f32.gmra.mrb[0].mxu0 %v2600
  %v2827 = vpop.f32.mrb[0].mxu0
  %v2828 = vadd.f32 0.0, %v2827
  %v2829 = vpop.f32.mrb[0].mxu0
  %2830 = vdwg.mxu0
  %2831 = vst.msk [vmem:[%s2 + $0x20] sm:$0xff] %vm1990, %v2823
  %2832 = vst.msk [vmem:[%s2 + $0x28] sm:$0xff] %vm1990, %v2828
  %2833 = vmatprep.subr.mxu0 0.0
  %2834 = vmatpush1.msra.mxu0 %v2370
  %2835 = vmatprep.subr.mxu0 0.0
  %2836 = vmatpush1.msra.mxu0 %v2375
  %2837 = vmatprep.subr.mxu0 0.0
  %2838 = vmatpush1.msra.mxu0 %v2380
  %2839 = vmatprep.subr.mxu0 0.0
  %2840 = vmatpush1.msra.mxu0 %v2385
  %2841 = vmatprep.subr.mxu0 0.0
  %2842 = vmatpush1.msra.mxu0 %v2390
  %2843 = vmatprep.subr.mxu0 0.0
  %2844 = vmatpush1.msra.mxu0 %v2395
  %2845 = vmatprep.subr.mxu0 0.0
  %2846 = vmatpush1.msra.mxu0 %v2400
  %2847 = vmatprep.subr.mxu0 0.0
  %2848 = vmatpush1.msra.mxu0 %v2405
  %2849 = vmatprep.subr.mxu0 0.0
  %2850 = vmatpush1.msra.mxu0 0.0
  %2851 = vmatprep.subr.mxu0 0.0
  %2852 = vmatpush1.msra.mxu0 0.0
  %2853 = vmatprep.subr.mxu0 0.0
  %2854 = vmatpush1.msra.mxu0 0.0
  %2855 = vmatprep.subr.mxu0 0.0
  %2856 = vmatpush1.msra.mxu0 0.0
  %2857 = vmatprep.subr.mxu0 0.0
  %2858 = vmatpush1.msra.mxu0 0.0
  %2859 = vmatprep.subr.mxu0 0.0
  %2860 = vmatpush1.msra.mxu0 0.0
  %2861 = vmatprep.subr.mxu0 0.0
  %2862 = vmatpush1.msra.mxu0 0.0
  %2863 = vmatprep.subr.mxu0 0.0
  %2864 = vmatpush1.msra.mxu0 0.0
  %2865 = vmatprep.subr.mxu0 0.0
  %2866 = vmatpush1.msra.mxu0 0.0
  %2867 = vmatprep.subr.mxu0 0.0
  %2868 = vmatpush1.msra.mxu0 0.0
  %2869 = vmatprep.subr.mxu0 0.0
  %2870 = vmatpush1.msra.mxu0 0.0
  %2871 = vmatprep.subr.mxu0 0.0
  %2872 = vmatpush1.msra.mxu0 0.0
  %2873 = vmatprep.subr.mxu0 0.0
  %2874 = vmatpush1.msra.mxu0 0.0
  %2875 = vmatprep.subr.mxu0 0.0
  %2876 = vmatpush1.msra.mxu0 0.0
  %2877 = vmatprep.subr.mxu0 0.0
  %2878 = vmatpush1.msra.mxu0 0.0
  %2879 = vmatprep.subr.mxu0 0.0
  %2880 = vmatpush1.msra.mxu0 0.0
  %2881 = vmatprep.subr.mxu0 0.0
  %2882 = vmatpush1.msra.mxu0 0.0
  %2883 = vmatprep.subr.mxu0 0.0
  %2884 = vmatpush1.msra.mxu0 0.0
  %2885 = vmatprep.subr.mxu0 0.0
  %2886 = vmatpush1.msra.mxu0 0.0
  %2887 = vmatprep.subr.mxu0 0.0
  %2888 = vmatpush1.msra.mxu0 0.0
  %2889 = vmatprep.subr.mxu0 0.0
  %2890 = vmatpush1.msra.mxu0 0.0
  %2891 = vmatprep.subr.mxu0 0.0
  %2892 = vmatpush1.msra.mxu0 0.0
  %2893 = vmatprep.subr.mxu0 0.0
  %2894 = vmatpush1.msra.mxu0 0.0
  %2895 = vmatprep.subr.mxu0 0.0
  %2896 = vmatpush1.msra.mxu0 0.0
  %2897 = vmatprep.mubr.f32.mxu0 0.0
  %2898 = vmatmul.mubr.f32.gmra.mrb[0].mxu0 %v2597
  %v2899 = vpop.f32.mrb[0].mxu0
  %v2900 = vadd.f32 0.0, %v2899
  %v2901 = vpop.f32.mrb[0].mxu0
  %2902 = vmatprep.mubr.f32.mxu0 0.0
  %2903 = vmatmul.mubr.f32.gmra.mrb[0].mxu0 %v2600
  %v2904 = vpop.f32.mrb[0].mxu0
  %v2905 = vadd.f32 0.0, %v2904
  %v2906 = vpop.f32.mrb[0].mxu0
  %2907 = vdwg.mxu0
  %2908 = vst.msk [vmem:[%s2 + $0x30] sm:$0xff] %vm1990, %v2900
  %2909 = vst.msk [vmem:[%s2 + $0x38] sm:$0xff] %vm1990, %v2905
  %2910 = vmatprep.subr.mxu0 0.0
  %2911 = vmatpush1.msra.mxu0 %v2410
  %2912 = vmatprep.subr.mxu0 0.0
  %2913 = vmatpush1.msra.mxu0 %v2415
  %2914 = vmatprep.subr.mxu0 0.0
  %2915 = vmatpush1.msra.mxu0 %v2420
  %2916 = vmatprep.subr.mxu0 0.0
  %2917 = vmatpush1.msra.mxu0 %v2425
  %2918 = vmatprep.subr.mxu0 0.0
  %2919 = vmatpush1.msra.mxu0 %v2430
  %2920 = vmatprep.subr.mxu0 0.0
  %2921 = vmatpush1.msra.mxu0 %v2435
  %2922 = vmatprep.subr.mxu0 0.0
  %2923 = vmatpush1.msra.mxu0 %v2440
  %2924 = vmatprep.subr.mxu0 0.0
  %2925 = vmatpush1.msra.mxu0 %v2445
  %2926 = vmatprep.subr.mxu0 0.0
  %2927 = vmatpush1.msra.mxu0 0.0
  %2928 = vmatprep.subr.mxu0 0.0
  %2929 = vmatpush1.msra.mxu0 0.0
  %2930 = vmatprep.subr.mxu0 0.0
  %2931 = vmatpush1.msra.mxu0 0.0
  %2932 = vmatprep.subr.mxu0 0.0
  %2933 = vmatpush1.msra.mxu0 0.0
  %2934 = vmatprep.subr.mxu0 0.0
  %2935 = vmatpush1.msra.mxu0 0.0
  %2936 = vmatprep.subr.mxu0 0.0
  %2937 = vmatpush1.msra.mxu0 0.0
  %2938 = vmatprep.subr.mxu0 0.0
  %2939 = vmatpush1.msra.mxu0 0.0
  %2940 = vmatprep.subr.mxu0 0.0
  %2941 = vmatpush1.msra.mxu0 0.0
  %2942 = vmatprep.subr.mxu0 0.0
  %2943 = vmatpush1.msra.mxu0 0.0
  %2944 = vmatprep.subr.mxu0 0.0
  %2945 = vmatpush1.msra.mxu0 0.0
  %2946 = vmatprep.subr.mxu0 0.0
  %2947 = vmatpush1.msra.mxu0 0.0
  %2948 = vmatprep.subr.mxu0 0.0
  %2949 = vmatpush1.msra.mxu0 0.0
  %2950 = vmatprep.subr.mxu0 0.0
  %2951 = vmatpush1.msra.mxu0 0.0
  %2952 = vmatprep.subr.mxu0 0.0
  %2953 = vmatpush1.msra.mxu0 0.0
  %2954 = vmatprep.subr.mxu0 0.0
  %2955 = vmatpush1.msra.mxu0 0.0
  %2956 = vmatprep.subr.mxu0 0.0
  %2957 = vmatpush1.msra.mxu0 0.0
  %2958 = vmatprep.subr.mxu0 0.0
  %2959 = vmatpush1.msra.mxu0 0.0
  %2960 = vmatprep.subr.mxu0 0.0
  %2961 = vmatpush1.msra.mxu0 0.0
  %2962 = vmatprep.subr.mxu0 0.0
  %2963 = vmatpush1.msra.mxu0 0.0
  %2964 = vmatprep.subr.mxu0 0.0
  %2965 = vmatpush1.msra.mxu0 0.0
  %2966 = vmatprep.subr.mxu0 0.0
  %2967 = vmatpush1.msra.mxu0 0.0
  %2968 = vmatprep.subr.mxu0 0.0
  %2969 = vmatpush1.msra.mxu0 0.0
  %2970 = vmatprep.subr.mxu0 0.0
  %2971 = vmatpush1.msra.mxu0 0.0
  %2972 = vmatprep.subr.mxu0 0.0
  %2973 = vmatpush1.msra.mxu0 0.0
  %2974 = vmatprep.mubr.f32.mxu0 0.0
  %2975 = vmatmul.mubr.f32.gmra.mrb[0].mxu0 %v2597
  %v2976 = vpop.f32.mrb[0].mxu0
  %v2977 = vadd.f32 0.0, %v2976
  %v2978 = vpop.f32.mrb[0].mxu0
  %2979 = vmatprep.mubr.f32.mxu0 0.0
  %2980 = vmatmul.mubr.f32.gmra.mrb[0].mxu0 %v2600
  %v2981 = vpop.f32.mrb[0].mxu0
  %v2982 = vadd.f32 0.0, %v2981
  %v2983 = vpop.f32.mrb[0].mxu0
  %2984 = vdwg.mxu0
  %2985 = vst.msk [vmem:[%s2 + $0x40] sm:$0xff] %vm1990, %v2977
  %2986 = vst.msk [vmem:[%s2 + $0x48] sm:$0xff] %vm1990, %v2982
  %2987 = vmatprep.subr.mxu0 0.0
  %2988 = vmatpush1.msra.mxu0 %v2450
  %2989 = vmatprep.subr.mxu0 0.0
  %2990 = vmatpush1.msra.mxu0 %v2455
  %2991 = vmatprep.subr.mxu0 0.0
  %2992 = vmatpush1.msra.mxu0 %v2460
  %2993 = vmatprep.subr.mxu0 0.0
  %2994 = vmatpush1.msra.mxu0 %v2465
  %2995 = vmatprep.subr.mxu0 0.0
  %2996 = vmatpush1.msra.mxu0 %v2470
  %2997 = vmatprep.subr.mxu0 0.0
  %2998 = vmatpush1.msra.mxu0 %v2475
  %2999 = vmatprep.subr.mxu0 0.0
  %3000 = vmatpush1.msra.mxu0 %v2480
  %3001 = vmatprep.subr.mxu0 0.0
  %3002 = vmatpush1.msra.mxu0 %v2485
  %3003 = vmatprep.subr.mxu0 0.0
  %3004 = vmatpush1.msra.mxu0 0.0
  %3005 = vmatprep.subr.mxu0 0.0
  %3006 = vmatpush1.msra.mxu0 0.0
  %3007 = vmatprep.subr.mxu0 0.0
  %3008 = vmatpush1.msra.mxu0 0.0
  %3009 = vmatprep.subr.mxu0 0.0
  %3010 = vmatpush1.msra.mxu0 0.0
  %3011 = vmatprep.subr.mxu0 0.0
  %3012 = vmatpush1.msra.mxu0 0.0
  %3013 = vmatprep.subr.mxu0 0.0
  %3014 = vmatpush1.msra.mxu0 0.0
  %3015 = vmatprep.subr.mxu0 0.0
  %3016 = vmatpush1.msra.mxu0 0.0
  %3017 = vmatprep.subr.mxu0 0.0
  %3018 = vmatpush1.msra.mxu0 0.0
  %3019 = vmatprep.subr.mxu0 0.0
  %3020 = vmatpush1.msra.mxu0 0.0
  %3021 = vmatprep.subr.mxu0 0.0
  %3022 = vmatpush1.msra.mxu0 0.0
  %3023 = vmatprep.subr.mxu0 0.0
  %3024 = vmatpush1.msra.mxu0 0.0
  %3025 = vmatprep.subr.mxu0 0.0
  %3026 = vmatpush1.msra.mxu0 0.0
  %3027 = vmatprep.subr.mxu0 0.0
  %3028 = vmatpush1.msra.mxu0 0.0
  %3029 = vmatprep.subr.mxu0 0.0
  %3030 = vmatpush1.msra.mxu0 0.0
  %3031 = vmatprep.subr.mxu0 0.0
  %3032 = vmatpush1.msra.mxu0 0.0
  %3033 = vmatprep.subr.mxu0 0.0
  %3034 = vmatpush1.msra.mxu0 0.0
  %3035 = vmatprep.subr.mxu0 0.0
  %3036 = vmatpush1.msra.mxu0 0.0
  %3037 = vmatprep.subr.mxu0 0.0
  %3038 = vmatpush1.msra.mxu0 0.0
  %3039 = vmatprep.subr.mxu0 0.0
  %3040 = vmatpush1.msra.mxu0 0.0
  %3041 = vmatprep.subr.mxu0 0.0
  %3042 = vmatpush1.msra.mxu0 0.0
  %3043 = vmatprep.subr.mxu0 0.0
  %3044 = vmatpush1.msra.mxu0 0.0
  %3045 = vmatprep.subr.mxu0 0.0
  %3046 = vmatpush1.msra.mxu0 0.0
  %3047 = vmatprep.subr.mxu0 0.0
  %3048 = vmatpush1.msra.mxu0 0.0
  %3049 = vmatprep.subr.mxu0 0.0
  %3050 = vmatpush1.msra.mxu0 0.0
  %3051 = vmatprep.mubr.f32.mxu0 0.0
  %3052 = vmatmul.mubr.f32.gmra.mrb[0].mxu0 %v2597
  %v3053 = vpop.f32.mrb[0].mxu0
  %v3054 = vadd.f32 0.0, %v3053
  %v3055 = vpop.f32.mrb[0].mxu0
  %3056 = vmatprep.mubr.f32.mxu0 0.0
  %3057 = vmatmul.mubr.f32.gmra.mrb[0].mxu0 %v2600
  %v3058 = vpop.f32.mrb[0].mxu0
  %v3059 = vadd.f32 0.0, %v3058
  %v3060 = vpop.f32.mrb[0].mxu0
  %3061 = vdwg.mxu0
  %3062 = vst.msk [vmem:[%s2 + $0x50] sm:$0xff] %vm1990, %v3054
  %3063 = vst.msk [vmem:[%s2 + $0x58] sm:$0xff] %vm1990, %v3059
  %3064 = vmatprep.subr.mxu0 0.0
  %3065 = vmatpush1.msra.mxu0 %v2490
  %3066 = vmatprep.subr.mxu0 0.0
  %3067 = vmatpush1.msra.mxu0 %v2495
  %3068 = vmatprep.subr.mxu0 0.0
  %3069 = vmatpush1.msra.mxu0 %v2500
  %3070 = vmatprep.subr.mxu0 0.0
  %3071 = vmatpush1.msra.mxu0 %v2505
  %3072 = vmatprep.subr.mxu0 0.0
  %3073 = vmatpush1.msra.mxu0 %v2510
  %3074 = vmatprep.subr.mxu0 0.0
  %3075 = vmatpush1.msra.mxu0 %v2515
  %3076 = vmatprep.subr.mxu0 0.0
  %3077 = vmatpush1.msra.mxu0 %v2520
  %3078 = vmatprep.subr.mxu0 0.0
  %3079 = vmatpush1.msra.mxu0 %v2525
  %3080 = vmatprep.subr.mxu0 0.0
  %3081 = vmatpush1.msra.mxu0 0.0
  %3082 = vmatprep.subr.mxu0 0.0
  %3083 = vmatpush1.msra.mxu0 0.0
  %3084 = vmatprep.subr.mxu0 0.0
  %3085 = vmatpush1.msra.mxu0 0.0
  %3086 = vmatprep.subr.mxu0 0.0
  %3087 = vmatpush1.msra.mxu0 0.0
  %3088 = vmatprep.subr.mxu0 0.0
  %3089 = vmatpush1.msra.mxu0 0.0
  %3090 = vmatprep.subr.mxu0 0.0
  %3091 = vmatpush1.msra.mxu0 0.0
  %3092 = vmatprep.subr.mxu0 0.0
  %3093 = vmatpush1.msra.mxu0 0.0
  %3094 = vmatprep.subr.mxu0 0.0
  %3095 = vmatpush1.msra.mxu0 0.0
  %3096 = vmatprep.subr.mxu0 0.0
  %3097 = vmatpush1.msra.mxu0 0.0
  %3098 = vmatprep.subr.mxu0 0.0
  %3099 = vmatpush1.msra.mxu0 0.0
  %3100 = vmatprep.subr.mxu0 0.0
  %3101 = vmatpush1.msra.mxu0 0.0
  %3102 = vmatprep.subr.mxu0 0.0
  %3103 = vmatpush1.msra.mxu0 0.0
  %3104 = vmatprep.subr.mxu0 0.0
  %3105 = vmatpush1.msra.mxu0 0.0
  %3106 = vmatprep.subr.mxu0 0.0
  %3107 = vmatpush1.msra.mxu0 0.0
  %3108 = vmatprep.subr.mxu0 0.0
  %3109 = vmatpush1.msra.mxu0 0.0
  %3110 = vmatprep.subr.mxu0 0.0
  %3111 = vmatpush1.msra.mxu0 0.0
  %3112 = vmatprep.subr.mxu0 0.0
  %3113 = vmatpush1.msra.mxu0 0.0
  %3114 = vmatprep.subr.mxu0 0.0
  %3115 = vmatpush1.msra.mxu0 0.0
  %3116 = vmatprep.subr.mxu0 0.0
  %3117 = vmatpush1.msra.mxu0 0.0
  %3118 = vmatprep.subr.mxu0 0.0
  %3119 = vmatpush1.msra.mxu0 0.0
  %3120 = vmatprep.subr.mxu0 0.0
  %3121 = vmatpush1.msra.mxu0 0.0
  %3122 = vmatprep.subr.mxu0 0.0
  %3123 = vmatpush1.msra.mxu0 0.0
  %3124 = vmatprep.subr.mxu0 0.0
  %3125 = vmatpush1.msra.mxu0 0.0
  %3126 = vmatprep.subr.mxu0 0.0
  %3127 = vmatpush1.msra.mxu0 0.0
  %3128 = vmatprep.mubr.f32.mxu0 0.0
  %3129 = vmatmul.mubr.f32.gmra.mrb[0].mxu0 %v2597
  %v3130 = vpop.f32.mrb[0].mxu0
  %v3131 = vadd.f32 0.0, %v3130
  %v3132 = vpop.f32.mrb[0].mxu0
  %3133 = vmatprep.mubr.f32.mxu0 0.0
  %3134 = vmatmul.mubr.f32.gmra.mrb[0].mxu0 %v2600
  %v3135 = vpop.f32.mrb[0].mxu0
  %v3136 = vadd.f32 0.0, %v3135
  %v3137 = vpop.f32.mrb[0].mxu0
  %3138 = vdwg.mxu0
  %3139 = vst.msk [vmem:[%s2 + $0x60] sm:$0xff] %vm1990, %v3131
  %3140 = vst.msk [vmem:[%s2 + $0x68] sm:$0xff] %vm1990, %v3136
  %3141 = vmatprep.subr.mxu0 0.0
  %3142 = vmatpush1.msra.mxu0 %v2530
  %3143 = vmatprep.subr.mxu0 0.0
  %3144 = vmatpush1.msra.mxu0 %v2535
  %3145 = vmatprep.subr.mxu0 0.0
  %3146 = vmatpush1.msra.mxu0 %v2540
  %3147 = vmatprep.subr.mxu0 0.0
  %3148 = vmatpush1.msra.mxu0 %v2545
  %3149 = vmatprep.subr.mxu0 0.0
  %3150 = vmatpush1.msra.mxu0 %v2550
  %3151 = vmatprep.subr.mxu0 0.0
  %3152 = vmatpush1.msra.mxu0 %v2555
  %3153 = vmatprep.subr.mxu0 0.0
  %3154 = vmatpush1.msra.mxu0 %v2560
  %3155 = vmatprep.subr.mxu0 0.0
  %3156 = vmatpush1.msra.mxu0 %v2565
  %3157 = vmatprep.subr.mxu0 0.0
  %3158 = vmatpush1.msra.mxu0 0.0
  %3159 = vmatprep.subr.mxu0 0.0
  %3160 = vmatpush1.msra.mxu0 0.0
  %3161 = vmatprep.subr.mxu0 0.0
  %3162 = vmatpush1.msra.mxu0 0.0
  %3163 = vmatprep.subr.mxu0 0.0
  %3164 = vmatpush1.msra.mxu0 0.0
  %3165 = vmatprep.subr.mxu0 0.0
  %3166 = vmatpush1.msra.mxu0 0.0
  %3167 = vmatprep.subr.mxu0 0.0
  %3168 = vmatpush1.msra.mxu0 0.0
  %3169 = vmatprep.subr.mxu0 0.0
  %3170 = vmatpush1.msra.mxu0 0.0
  %3171 = vmatprep.subr.mxu0 0.0
  %3172 = vmatpush1.msra.mxu0 0.0
  %3173 = vmatprep.subr.mxu0 0.0
  %3174 = vmatpush1.msra.mxu0 0.0
  %3175 = vmatprep.subr.mxu0 0.0
  %3176 = vmatpush1.msra.mxu0 0.0
  %3177 = vmatprep.subr.mxu0 0.0
  %3178 = vmatpush1.msra.mxu0 0.0
  %3179 = vmatprep.subr.mxu0 0.0
  %3180 = vmatpush1.msra.mxu0 0.0
  %3181 = vmatprep.subr.mxu0 0.0
  %3182 = vmatpush1.msra.mxu0 0.0
  %3183 = vmatprep.subr.mxu0 0.0
  %3184 = vmatpush1.msra.mxu0 0.0
  %3185 = vmatprep.subr.mxu0 0.0
  %3186 = vmatpush1.msra.mxu0 0.0
  %3187 = vmatprep.subr.mxu0 0.0
  %3188 = vmatpush1.msra.mxu0 0.0
  %3189 = vmatprep.subr.mxu0 0.0
  %3190 = vmatpush1.msra.mxu0 0.0
  %3191 = vmatprep.subr.mxu0 0.0
  %3192 = vmatpush1.msra.mxu0 0.0
  %3193 = vmatprep.subr.mxu0 0.0
  %3194 = vmatpush1.msra.mxu0 0.0
  %3195 = vmatprep.subr.mxu0 0.0
  %3196 = vmatpush1.msra.mxu0 0.0
  %3197 = vmatprep.subr.mxu0 0.0
  %3198 = vmatpush1.msra.mxu0 0.0
  %3199 = vmatprep.subr.mxu0 0.0
  %3200 = vmatpush1.msra.mxu0 0.0
  %3201 = vmatprep.subr.mxu0 0.0
  %3202 = vmatpush1.msra.mxu0 0.0
  %3203 = vmatprep.subr.mxu0 0.0
  %3204 = vmatpush1.msra.mxu0 0.0
  %3205 = vmatprep.mubr.f32.mxu0 0.0
  %3206 = vmatmul.mubr.f32.gmra.mrb[0].mxu0 %v2597
  %v3207 = vpop.f32.mrb[0].mxu0
  %v3208 = vadd.f32 0.0, %v3207
  %v3209 = vpop.f32.mrb[0].mxu0
  %3210 = vmatprep.mubr.f32.mxu0 0.0
  %3211 = vmatmul.mubr.f32.gmra.mrb[0].mxu0 %v2600
  %v3212 = vpop.f32.mrb[0].mxu0
  %v3213 = vadd.f32 0.0, %v3212
  %v3214 = vpop.f32.mrb[0].mxu0
  %3215 = vdwg.mxu0
  %3216 = vst.msk [vmem:[%s2 + $0x70] sm:$0xff] %vm1990, %v3208
  %3217 = vst.msk [vmem:[%s2 + $0x78] sm:$0xff] %vm1990, %v3213
  // Predicated region
  $region10: #{disc_block1.1} parent=0 // pred_check
    _
  $region11: #{disc_block1.1} parent=0 // pred_check_branch
    %3219 = sbr.rel (0) target = $region13
  $region12: #{disc_block1.1} parent=0 // pred_region
    _
  $region13: #{disc_block1.1} parent=0 // pred_fallthru
    _
  // Predicated region
  $region14: #{disc_block1.1} parent=0 // pred_check
    _
  $region15: #{disc_block1.1} parent=0 // pred_check_branch
    %3221 = sbr.rel (0) target = $region17
  $region16: #{disc_block1.1} parent=0 // pred_region
    _
  $region17: #{disc_block1.1} parent=0 // pred_fallthru
    _

</llo_original>
